<compile_context>
chip_gen: v5e
topology: v5e:2x2
jax: 0.10.0
libtpu: 0.0.40
codegen_flags: <defaults>
</compile_context>

<pallas_src>
import functools

import jax
import jax.numpy as jnp
from jax.experimental import pallas as pl
from jax.experimental.pallas import tpu as pltpu


# ----------------------------------------------------------------------------
# Static architecture config (MultiScopicCNN: 2 branches x 2 basic blocks)
# ----------------------------------------------------------------------------

_CNN_CONFIG = (
    (  # branch 0 — small receptive field (dilation 1)
        dict(dilations=(1,), filter_lengths=(3,), num_filters=8, subsample=2),
        dict(dilations=(1, 1), filter_lengths=(3, 3), num_filters=16, subsample=2),
    ),
    (  # branch 1 — large receptive field (dilations 2 / 4)
        dict(dilations=(2,), filter_lengths=(3,), num_filters=8, subsample=2),
        dict(dilations=(4, 4), filter_lengths=(3, 3), num_filters=16, subsample=2),
    ),
)
_SE_REDUCTION = 4
_CLF_HIDDEN = (16, 8)          # config.clf.out_channels; n_classes appended as last layer
_SLAB_LANES = 128              # lane width of the packed parameter slab
_MM_DTYPE = jnp.bfloat16       # MXU operand dtype (elementwise math stays f32)

# max 'same' padding over all convs (sizes the in-kernel staging scratch / sample gaps)
_MAXPAD = max((k - 1) // 2 * d
              for br in _CNN_CONFIG for blk in br
              for k, d in zip(blk["filter_lengths"], blk["dilations"]))


def _total_subsample():
    ss = 1
    for blk in _CNN_CONFIG[0]:
        ss *= blk["subsample"]
    return ss


def _max_channels(n_leads):
    c = n_leads
    for br in _CNN_CONFIG:
        for blk in br:
            c = max(c, blk["num_filters"])
    return c


def _round8(n):
    return -(-n // 8) * 8


# ----------------------------------------------------------------------------
# In-kernel activation: mish with a single exp + approx reciprocal
# ----------------------------------------------------------------------------

def _mish(x):
    """mish(x) = x * tanh(softplus(x)); with e = exp(x):
       tanh(softplus(x)) = (e^2 + 2e) / (e^2 + 2e + 2)."""
    xs = jnp.minimum(x, 20.0)                        # exp(20)^2 ~ 2.4e17, safe in f32
    e = jnp.exp(xs)
    t = e * (e + 2.0)
    m = x * t * pl.reciprocal(t + 2.0, approx=True)
    return jnp.where(x > 20.0, x, m)                 # mish(x) ~= x for large x


# ----------------------------------------------------------------------------
# Fused kernel: whole forward for a chunk of the batch per grid step.
#
# Packed layout: sample b occupies rows [b*period + maxpad, b*period + maxpad + cur_len)
# of the staging buffer; the <= 2*maxpad gap rows between samples are kept zero so the
# 'same' conv padding of neighbouring samples never bleeds.  Pooling halves both the
# valid length and the period, so the packing stays self-consistent through the net.
# ----------------------------------------------------------------------------

def _fused_kernel(x_ref, w_ref, out_ref, xbuf, *, lay, b_chunk, seq_len, n_leads,
                  n_classes, maxpad):
    mm = _MM_DTYPE
    period0 = seq_len + 2 * maxpad

    def rd(entry):                                    # static-slice read from the param slab
        off, r, c = entry
        return w_ref[off:off + r, :c]

    def zero_gaps(cin, cur_len, period):
        # zero only the pad/gap strips (lanes :cin); the interior was just overwritten
        xbuf[0:maxpad, :cin] = jnp.zeros((maxpad, cin), jnp.float32)
        for b in range(b_chunk):
            g0 = maxpad + b * period + cur_len
            g1 = maxpad + (b + 1) * period
            xbuf[g0:g1, :cin] = jnp.zeros((g1 - g0, cin), jnp.float32)

    def stage_input():
        for b in range(b_chunk):
            base = maxpad + b * period0
            xbuf[base:base + seq_len, :n_leads] = x_ref[b]
        zero_gaps(n_leads, seq_len, period0)

    def stage_packed(hpack, cin, cur_len, period):
        total = b_chunk * period
        xbuf[maxpad:maxpad + total, :cin] = hpack
        zero_gaps(cin, cur_len, period)

    def conv_relu(conv_lay, k_len, dilation, cin, cout, period):
        """Dilated 'same' Conv1d + bias + ReLU on the packed activation staged in xbuf."""
        total = b_chunk * period
        pad = (k_len - 1) // 2 * dilation
        w_off, _, _ = conv_lay["w"]                   # stacked (k_len*cin, cout) weight
        acc = None
        for k in range(k_len):
            start = maxpad - pad + k * dilation       # static, >= 0 by construction
            win = xbuf[start:start + total, :cin].astype(mm)
            tap = w_ref[w_off + k * cin:w_off + (k + 1) * cin, :cout].astype(mm)
            d = jnp.dot(win, tap, preferred_element_type=jnp.float32)
            acc = d if acc is None else acc + d
        return jnp.maximum(acc + rd(conv_lay["b"]), 0.0)

    def maxpool(hpack, cin, period, stride):
        """MaxPool1d(kernel=stride, stride=stride): strided ref reads, O(L) and exact."""
        if stride == 1:
            return hpack
        total = b_chunk * period
        new_total = total // stride
        xbuf[0:total, :cin] = hpack
        pooled = None
        for s in range(stride):
            v = xbuf[pl.ds(s, new_total, stride=stride), :cin]
            pooled = v if pooled is None else jnp.maximum(pooled, v)
        return pooled

    # ---- MultiScopicCNN: per branch, (conv+ReLU)* -> BN(affine) -> maxpool ----
    branch_feats = []
    cur_len, period = seq_len, period0
    for br_arch, br_lay in zip(_CNN_CONFIG, lay["cnn"]):
        stage_input()
        cin, cur_len, period = n_leads, seq_len, period0
        hpack = None
        for blk_arch, blk_lay in zip(br_arch, br_lay):
            cout = blk_arch["num_filters"]
            for ci, (k_len, dil) in enumerate(zip(blk_arch["filter_lengths"],
                                                  blk_arch["dilations"])):
                if hpack is not None:                 # first conv reads the staged input
                    stage_packed(hpack, cin, cur_len, period)
                hpack = conv_relu(blk_lay["convs"][ci], k_len, dil, cin, cout, period)
                cin = cout
            # eval-mode BatchNorm folded to a per-channel affine at param-prep time
            hpack = hpack * rd(blk_lay["bn_scale"]) + rd(blk_lay["bn_shift"])
            hpack = maxpool(hpack, cin, period, blk_arch["subsample"])
            cur_len //= blk_arch["subsample"]
            period //= blk_arch["subsample"]
            # block dropout: identity in eval mode
        branch_feats.append((hpack, cin))             # packed (b_chunk*period, C_branch)
    period_f, len_f = period, cur_len                 # identical for both branches

    # ---- rnn: "none" -> pass-through ----

    # ---- SE attention + SeqLin classifier (per sample; channel concat eliminated) ----
    se_lay, clf_lay = lay["se"], lay["clf"]
    w2c = rd(clf_lay["l2"]["w"]).astype(mm)
    b2c = rd(clf_lay["l2"]["b"])
    w3c = rd(clf_lay["l3"]["w"]).astype(mm)
    b3c = rd(clf_lay["l3"]["b"])

    for b in range(b_chunk):
        hbs = []
        z = rd(se_lay["b1"])
        for br, (hpack, _c) in enumerate(branch_feats):
            hb = hpack[b * period_f:b * period_f + len_f, :]      # valid rows of sample b
            hbs.append(hb)
            m = jnp.mean(hb, axis=0, keepdims=True)               # global avg-pool (f32)
            z = z + jnp.dot(m.astype(mm), rd(se_lay["w1"][br]).astype(mm),
                            preferred_element_type=jnp.float32)
        z = jnp.maximum(z, 0.0)                                   # ReLU

        g = rd(clf_lay["l1"]["b"])
        for br, hb in enumerate(hbs):
            s = jax.nn.sigmoid(
                jnp.dot(z.astype(mm), rd(se_lay["w2"][br]).astype(mm),
                        preferred_element_type=jnp.float32) + rd(se_lay["b2"][br]))
            g = g + jnp.dot((hb * s).astype(mm), rd(clf_lay["l1"]["w"][br]).astype(mm),
                            preferred_element_type=jnp.float32)
        g = _mish(g)
        g = _mish(jnp.dot(g.astype(mm), w2c, preferred_element_type=jnp.float32) + b2c)
        out = jnp.dot(g.astype(mm), w3c, preferred_element_type=jnp.float32) + b3c
        out_ref[b] = out.astype(out_ref.dtype)        # only HBM store of the whole forward


# ----------------------------------------------------------------------------
# Parameter init (PyTorch-like layout)
# ----------------------------------------------------------------------------

def init_params(key, n_leads, n_classes):
    def nxt():
        nonlocal key
        key, sub = jax.random.split(key)
        return sub

    params = {"cnn": [], "se": None, "clf": None}

    for branch_cfg in _CNN_CONFIG:
        branch_params = []
        cin = n_leads
        for blk in branch_cfg:
            convs = []
            for k_len, _dil in zip(blk["filter_lengths"], blk["dilations"]):
                cout = blk["num_filters"]
                std = (2.0 / (k_len * cin)) ** 0.5                 # he_normal
                convs.append(dict(
                    w=std * jax.random.normal(nxt(), (k_len, cin, cout), jnp.float32),
                    b=0.01 * jax.random.normal(nxt(), (1, cout), jnp.float32)))
                cin = cout
            branch_params.append(dict(
                convs=convs,
                bn_gamma=1.0 + 0.1 * jax.random.normal(nxt(), (1, cin), jnp.float32),
                bn_beta=0.1 * jax.random.normal(nxt(), (1, cin), jnp.float32),
                bn_mean=0.1 * jax.random.normal(nxt(), (1, cin), jnp.float32),
                bn_var=1.0 + 0.1 * jax.random.uniform(nxt(), (1, cin), jnp.float32)))
        params["cnn"].append(branch_params)

    c_feat = sum(br[-1]["num_filters"] for br in _CNN_CONFIG)
    c_mid = c_feat // _SE_REDUCTION
    params["se"] = dict(
        w1=(2.0 / c_feat) ** 0.5 * jax.random.normal(nxt(), (c_feat, c_mid), jnp.float32),
        b1=jnp.zeros((1, c_mid), jnp.float32),
        w2=(2.0 / c_mid) ** 0.5 * jax.random.normal(nxt(), (c_mid, c_feat), jnp.float32),
        b2=jnp.zeros((1, c_feat), jnp.float32))

    dims = (c_feat,) + _CLF_HIDDEN + (n_classes,)
    clf = []
    for d_in, d_out in zip(dims[:-1], dims[1:]):
        clf.append(dict(
            w=(2.0 / d_in) ** 0.5 * jax.random.normal(nxt(), (d_in, d_out), jnp.float32),
            b=jnp.zeros((1, d_out), jnp.float32)))
    params["clf"] = tuple(clf)
    return params


# ----------------------------------------------------------------------------
# Parameter prep: BN fold, per-branch splits, pack everything into ONE (rows,128) slab
# ----------------------------------------------------------------------------

class _SlabBuilder:
    def __init__(self):
        self._chunks = []
        self._offset = 0

    def add(self, arr):
        arr = jnp.asarray(arr, jnp.float32)
        if arr.ndim == 1:
            arr = arr[None, :]
        r, c = arr.shape
        assert c <= _SLAB_LANES
        rows = _round8(r)                                     # sublane-aligned offsets
        chunk = jnp.zeros((rows, _SLAB_LANES), jnp.float32).at[:r, :c].set(arr)
        entry = (self._offset, r, c)                          # static (offset, rows, cols)
        self._chunks.append(chunk)
        self._offset += rows
        return entry

    def finalize(self):
        return jnp.concatenate(self._chunks, axis=0)


def prepare_params(raw, eps=1e-5):
    sb = _SlabBuilder()
    lay = {"cnn": [], "se": None, "clf": None}

    for branch in raw["cnn"]:
        br_lay = []
        for blk in branch:
            convs = []
            for conv in blk["convs"]:
                w = jnp.asarray(conv["w"], jnp.float32)       # (K, Cin, Cout)
                k_len, cin, cout = w.shape
                convs.append(dict(w=sb.add(w.reshape(k_len * cin, cout)),
                                  b=sb.add(conv["b"])))
            scale = blk["bn_gamma"] * jax.lax.rsqrt(blk["bn_var"] + eps)
            shift = blk["bn_beta"] - blk["bn_mean"] * scale
            br_lay.append(dict(convs=convs, bn_scale=sb.add(scale),
                               bn_shift=sb.add(shift)))
        lay["cnn"].append(br_lay)

    branch_ch = [br[-1]["num_filters"] for br in _CNN_CONFIG]
    offs = [0]
    for c in branch_ch:
        offs.append(offs[-1] + c)
    nb = len(branch_ch)

    se = raw["se"]
    lay["se"] = dict(
        w1=[sb.add(se["w1"][offs[i]:offs[i + 1], :]) for i in range(nb)],
        b1=sb.add(se["b1"]),
        w2=[sb.add(se["w2"][:, offs[i]:offs[i + 1]]) for i in range(nb)],
        b2=[sb.add(se["b2"][:, offs[i]:offs[i + 1]]) for i in range(nb)])

    l1, l2, l3 = raw["clf"]
    lay["clf"] = dict(
        l1=dict(w=[sb.add(l1["w"][offs[i]:offs[i + 1], :]) for i in range(nb)],
                b=sb.add(l1["b"])),
        l2=dict(w=sb.add(l2["w"]), b=sb.add(l2["b"])),
        l3=dict(w=sb.add(l3["w"]), b=sb.add(l3["b"])))

    return sb.finalize(), lay


# ----------------------------------------------------------------------------
# Forward wrapper: one fused pallas_call
# ----------------------------------------------------------------------------

def ecg_seq_lab_net_forward(input_ncl, prepared, batch_per_step=None):
    """input_ncl: (batch, n_leads, seq_len) -> pred: (batch, seq_len // 4, n_classes)."""
    slab, lay = prepared
    B, n_leads, L = input_ncl.shape
    total_ss = _total_subsample()
    assert L % total_ss == 0, "seq_len must be a multiple of the CNN subsampling (4)"
    L_out = L // total_ss
    n_classes = lay["clf"]["l3"]["w"][2]

    if batch_per_step is None:
        # whole batch in one step for small B (best for single-TC v5e/v6e);
        # two "parallel" steps for larger even B (maps onto the two v7x TensorCores).
        batch_per_step = B if (B <= 2 or B % 2 != 0) else B // 2
    assert B % batch_per_step == 0
    num_steps = B // batch_per_step

    # TODO(synk): feed NCL directly (lane-dense along L) and transpose in-kernel.
    x = jnp.transpose(input_ncl, (0, 2, 1)).astype(jnp.float32)     # (B, L, n_leads)

    c_max = _max_channels(n_leads)
    period0 = L + 2 * _MAXPAD
    xbuf_rows = batch_per_step * period0 + 2 * _MAXPAD

    kernel = functools.partial(_fused_kernel, lay=lay, b_chunk=batch_per_step,
                               seq_len=L, n_leads=n_leads, n_classes=n_classes,
                               maxpad=_MAXPAD)

    # advisory cost estimate
    flops = 0
    for br in _CNN_CONFIG:
        cin, cur = n_leads, L
        for blk in br:
            for k in blk["filter_lengths"]:
                flops += 2 * k * cin * blk["num_filters"] * cur * B
                cin = blk["num_filters"]
            cur //= blk["subsample"]
    c_feat = sum(br[-1]["num_filters"] for br in _CNN_CONFIG)
    dims = (c_feat,) + _CLF_HIDDEN + (n_classes,)
    flops += 2 * B * L_out * sum(a * b for a, b in zip(dims[:-1], dims[1:]))
    transcendentals = B * L_out * (sum(_CLF_HIDDEN) + c_feat)
    bytes_accessed = x.size * 4 + slab.size * 4 + B * L_out * n_classes * 4

    return pl.pallas_call(
        kernel,
        out_shape=jax.ShapeDtypeStruct((B, L_out, n_classes), jnp.float32),
        grid=(num_steps,),
        in_specs=[
            pl.BlockSpec((batch_per_step, L, n_leads), lambda i: (i, 0, 0)),
            pl.BlockSpec(slab.shape, lambda i: (0, 0)),           # whole param slab, 1 DMA
        ],
        out_specs=pl.BlockSpec((batch_per_step, L_out, n_classes), lambda i: (i, 0, 0)),
        scratch_shapes=[pltpu.VMEM((xbuf_rows, c_max), jnp.float32)],
        compiler_params=pltpu.CompilerParams(
            dimension_semantics=("parallel",),
            vmem_limit_bytes=48 * 1024 * 1024),                    # headroom under v7x 64 MiB
        cost_estimate=pl.CostEstimate(flops=int(flops),
                                      transcendentals=int(transcendentals),
                                      bytes_accessed=int(bytes_accessed)),
    )(x, slab)


# ----------------------------------------------------------------------------
# Main
# ----------------------------------------------------------------------------

if __name__ == "__main__":
    B, n_leads, L, n_classes = 2, 2, 64, 2

    root = jax.random.PRNGKey(0)
    k_in, k_par = jax.random.split(root)
    x = jax.random.normal(k_in, (B, n_leads, L), dtype=jnp.float32)

    raw_params = init_params(k_par, n_leads, n_classes)
    prepared = prepare_params(raw_params)

    fwd = jax.jit(lambda inp: ecg_seq_lab_net_forward(inp, prepared))
    pred = fwd(x)
    jax.block_until_ready(pred)

    assert pred.shape == (B, L // 4, n_classes), pred.shape
    assert bool(jnp.all(jnp.isfinite(pred)))
    print("KERNEL_OK")
</pallas_src>

<mosaic_0001>
module attributes {stable_mosaic.version = 11 : i64} {
  func.func @_fused_kernel(%arg0: i32, %arg1: memref<2x64x2xf32, #tpu.memory_space<vmem>>, %arg2: memref<424x128xf32, #tpu.memory_space<vmem>>, %arg3: memref<2x16x2xf32, #tpu.memory_space<vmem>>, %arg4: memref<152x16xf32, #tpu.memory_space<vmem>>) attributes {dimension_semantics = [#tpu.dimension_semantics<parallel>], iteration_bounds = array<i64: 1>, scalar_prefetch = 0 : i64, scratch_operands = 1 : i64, tpu.core_type = #tpu.core_type<tc>, window_params = [{transform_indices = @transform_0, window_bounds = array<i64: 2, 64, 2>}, {pipeline_mode = #tpu.pipeline_mode<synchronous>, transform_indices = @transform_1, window_bounds = array<i64: 424, 128>}, {transform_indices = @transform_2, window_bounds = array<i64: 2, 16, 2>}]} {
    %c0 = arith.constant 0 : index
    %c0_0 = arith.constant 0 : index
    %c0_1 = arith.constant 0 : index
    %0 = vector.load %arg1[%c0, %c0_0, %c0_1] : memref<2x64x2xf32, #tpu.memory_space<vmem>>, vector<1x64x2xf32>
    %1 = vector.shape_cast %0 : vector<1x64x2xf32> to vector<64x2xf32>
    %c4 = arith.constant 4 : index
    %c0_2 = arith.constant 0 : index
    %2 = vector.load %arg4[%c4, %c0_2] : memref<152x16xf32, #tpu.memory_space<vmem>>, vector<64x2xf32>
    tpu.vector_store %arg4[%c4, %c0_2], %1 {strides = array<i32>} : memref<152x16xf32, #tpu.memory_space<vmem>>, vector<64x2xf32>,
    %c1 = arith.constant 1 : index
    %c0_3 = arith.constant 0 : index
    %c0_4 = arith.constant 0 : index
    %3 = vector.load %arg1[%c1, %c0_3, %c0_4] : memref<2x64x2xf32, #tpu.memory_space<vmem>>, vector<1x64x2xf32>
    %4 = vector.shape_cast %3 : vector<1x64x2xf32> to vector<64x2xf32>
    %c76 = arith.constant 76 : index
    %c0_5 = arith.constant 0 : index
    %5 = vector.load %arg4[%c76, %c0_5] : memref<152x16xf32, #tpu.memory_space<vmem>>, vector<64x2xf32>
    tpu.vector_store %arg4[%c76, %c0_5], %4 {strides = array<i32>} : memref<152x16xf32, #tpu.memory_space<vmem>>, vector<64x2xf32>,
    %cst = arith.constant 0.000000e+00 : f32
    %6 = vector.broadcast %cst : f32 to vector<4x2xf32>
    %c0_6 = arith.constant 0 : index
    %c0_7 = arith.constant 0 : index
    %7 = vector.load %arg4[%c0_6, %c0_7] : memref<152x16xf32, #tpu.memory_space<vmem>>, vector<4x2xf32>
    tpu.vector_store %arg4[%c0_6, %c0_7], %6 {strides = array<i32>} : memref<152x16xf32, #tpu.memory_space<vmem>>, vector<4x2xf32>,
    %cst_8 = arith.constant 0.000000e+00 : f32
    %8 = vector.broadcast %cst_8 : f32 to vector<8x2xf32>
    %c68 = arith.constant 68 : index
    %c0_9 = arith.constant 0 : index
    %9 = vector.load %arg4[%c68, %c0_9] : memref<152x16xf32, #tpu.memory_space<vmem>>, vector<8x2xf32>
    tpu.vector_store %arg4[%c68, %c0_9], %8 {strides = array<i32>} : memref<152x16xf32, #tpu.memory_space<vmem>>, vector<8x2xf32>,
    %cst_10 = arith.constant 0.000000e+00 : f32
    %10 = vector.broadcast %cst_10 : f32 to vector<8x2xf32>
    %c140 = arith.constant 140 : index
    %c0_11 = arith.constant 0 : index
    %11 = vector.load %arg4[%c140, %c0_11] : memref<152x16xf32, #tpu.memory_space<vmem>>, vector<8x2xf32>
    tpu.vector_store %arg4[%c140, %c0_11], %10 {strides = array<i32>} : memref<152x16xf32, #tpu.memory_space<vmem>>, vector<8x2xf32>,
    %c3 = arith.constant 3 : index
    %c0_12 = arith.constant 0 : index
    %12 = vector.load %arg4[%c3, %c0_12] : memref<152x16xf32, #tpu.memory_space<vmem>>, vector<144x2xf32>
    %13 = arith.truncf %12 : vector<144x2xf32> to vector<144x2xbf16>
    %c0_13 = arith.constant 0 : index
    %c0_14 = arith.constant 0 : index
    %14 = vector.load %arg2[%c0_13, %c0_14] : memref<424x128xf32, #tpu.memory_space<vmem>>, vector<2x8xf32>
    %15 = arith.truncf %14 : vector<2x8xf32> to vector<2x8xbf16>
    %cst_15 = arith.constant dense<0.000000e+00> : vector<144x8xf32>
    %16 = tpu.matmul %13, %15, %cst_15 {dimension_numbers = #tpu.dot_dimension_numbers<[1], [0], [0], [1], [0, 0, 1, 1], [], []>} : vector<144x2xbf16>, vector<2x8xbf16>, vector<144x8xf32> -> vector<144x8xf32>
    %c4_16 = arith.constant 4 : index
    %c0_17 = arith.constant 0 : index
    %17 = vector.load %arg4[%c4_16, %c0_17] : memref<152x16xf32, #tpu.memory_space<vmem>>, vector<144x2xf32>
    %18 = arith.truncf %17 : vector<144x2xf32> to vector<144x2xbf16>
    %c2 = arith.constant 2 : index
    %c0_18 = arith.constant 0 : index
    %19 = vector.load %arg2[%c2, %c0_18] : memref<424x128xf32, #tpu.memory_space<vmem>>, vector<2x8xf32>
    %20 = arith.truncf %19 : vector<2x8xf32> to vector<2x8xbf16>
    %cst_19 = arith.constant dense<0.000000e+00> : vector<144x8xf32>
    %21 = tpu.matmul %18, %20, %cst_19 {dimension_numbers = #tpu.dot_dimension_numbers<[1], [0], [0], [1], [0, 0, 1, 1], [], []>} : vector<144x2xbf16>, vector<2x8xbf16>, vector<144x8xf32> -> vector<144x8xf32>
    %22 = arith.addf %16, %21 : vector<144x8xf32>
    %c5 = arith.constant 5 : index
    %c0_20 = arith.constant 0 : index
    %23 = vector.load %arg4[%c5, %c0_20] : memref<152x16xf32, #tpu.memory_space<vmem>>, vector<144x2xf32>
    %24 = arith.truncf %23 : vector<144x2xf32> to vector<144x2xbf16>
    %c4_21 = arith.constant 4 : index
    %c0_22 = arith.constant 0 : index
    %25 = vector.load %arg2[%c4_21, %c0_22] : memref<424x128xf32, #tpu.memory_space<vmem>>, vector<2x8xf32>
    %26 = arith.truncf %25 : vector<2x8xf32> to vector<2x8xbf16>
    %cst_23 = arith.constant dense<0.000000e+00> : vector<144x8xf32>
    %27 = tpu.matmul %24, %26, %cst_23 {dimension_numbers = #tpu.dot_dimension_numbers<[1], [0], [0], [1], [0, 0, 1, 1], [], []>} : vector<144x2xbf16>, vector<2x8xbf16>, vector<144x8xf32> -> vector<144x8xf32>
    %28 = arith.addf %22, %27 : vector<144x8xf32>
    %c8 = arith.constant 8 : index
    %c0_24 = arith.constant 0 : index
    %29 = vector.load %arg2[%c8, %c0_24] : memref<424x128xf32, #tpu.memory_space<vmem>>, vector<1x8xf32>
    %30 = vector.broadcast %29 : vector<1x8xf32> to vector<144x8xf32>
    %31 = arith.addf %28, %30 : vector<144x8xf32>
    %cst_25 = arith.constant 0.000000e+00 : f32
    %32 = vector.broadcast %cst_25 : f32 to vector<144x8xf32>
    %33 = arith.maximumf %31, %32 : vector<144x8xf32>
    %c16 = arith.constant 16 : index
    %c0_26 = arith.constant 0 : index
    %34 = vector.load %arg2[%c16, %c0_26] : memref<424x128xf32, #tpu.memory_space<vmem>>, vector<1x8xf32>
    %35 = vector.broadcast %34 : vector<1x8xf32> to vector<144x8xf32>
    %36 = arith.mulf %33, %35 : vector<144x8xf32>
    %c24 = arith.constant 24 : index
    %c0_27 = arith.constant 0 : index
    %37 = vector.load %arg2[%c24, %c0_27] : memref<424x128xf32, #tpu.memory_space<vmem>>, vector<1x8xf32>
    %38 = vector.broadcast %37 : vector<1x8xf32> to vector<144x8xf32>
    %39 = arith.addf %36, %38 : vector<144x8xf32>
    %c0_28 = arith.constant 0 : index
    %c0_29 = arith.constant 0 : index
    %40 = vector.load %arg4[%c0_28, %c0_29] : memref<152x16xf32, #tpu.memory_space<vmem>>, vector<144x8xf32>
    tpu.vector_store %arg4[%c0_28, %c0_29], %39 {strides = array<i32>} : memref<152x16xf32, #tpu.memory_space<vmem>>, vector<144x8xf32>,
    %c0_30 = arith.constant 0 : index
    %c0_31 = arith.constant 0 : index
    %41 = tpu.strided_load %arg4[%c0_30, %c0_31] {strides = array<i32: 2, 1>} : memref<152x16xf32, #tpu.memory_space<vmem>>, vector<72x8xf32>
    %c1_32 = arith.constant 1 : index
    %c0_33 = arith.constant 0 : index
    %42 = tpu.strided_load %arg4[%c1_32, %c0_33] {strides = array<i32: 2, 1>} : memref<152x16xf32, #tpu.memory_space<vmem>>, vector<72x8xf32>
    %43 = arith.maximumf %41, %42 : vector<72x8xf32>
    %c4_34 = arith.constant 4 : index
    %c0_35 = arith.constant 0 : index
    %44 = vector.load %arg4[%c4_34, %c0_35] : memref<152x16xf32, #tpu.memory_space<vmem>>, vector<72x8xf32>
    tpu.vector_store %arg4[%c4_34, %c0_35], %43 {strides = array<i32>} : memref<152x16xf32, #tpu.memory_space<vmem>>, vector<72x8xf32>,
    %cst_36 = arith.constant 0.000000e+00 : f32
    %45 = vector.broadcast %cst_36 : f32 to vector<4x8xf32>
    %c0_37 = arith.constant 0 : index
    %c0_38 = arith.constant 0 : index
    %46 = vector.load %arg4[%c0_37, %c0_38] : memref<152x16xf32, #tpu.memory_space<vmem>>, vector<4x8xf32>
    tpu.vector_store %arg4[%c0_37, %c0_38], %45 {strides = array<i32>} : memref<152x16xf32, #tpu.memory_space<vmem>>, vector<4x8xf32>,
    %cst_39 = arith.constant 0.000000e+00 : f32
    %47 = vector.broadcast %cst_39 : f32 to vector<4x8xf32>
    %c36 = arith.constant 36 : index
    %c0_40 = arith.constant 0 : index
    %48 = vector.load %arg4[%c36, %c0_40] : memref<152x16xf32, #tpu.memory_space<vmem>>, vector<4x8xf32>
    tpu.vector_store %arg4[%c36, %c0_40], %47 {strides = array<i32>} : memref<152x16xf32, #tpu.memory_space<vmem>>, vector<4x8xf32>,
    %cst_41 = arith.constant 0.000000e+00 : f32
    %49 = vector.broadcast %cst_41 : f32 to vector<4x8xf32>
    %c72 = arith.constant 72 : index
    %c0_42 = arith.constant 0 : index
    %50 = vector.load %arg4[%c72, %c0_42] : memref<152x16xf32, #tpu.memory_space<vmem>>, vector<4x8xf32>
    tpu.vector_store %arg4[%c72, %c0_42], %49 {strides = array<i32>} : memref<152x16xf32, #tpu.memory_space<vmem>>, vector<4x8xf32>,
    %c3_43 = arith.constant 3 : index
    %c0_44 = arith.constant 0 : index
    %51 = vector.load %arg4[%c3_43, %c0_44] : memref<152x16xf32, #tpu.memory_space<vmem>>, vector<72x8xf32>
    %52 = arith.truncf %51 : vector<72x8xf32> to vector<72x8xbf16>
    %c32 = arith.constant 32 : index
    %c0_45 = arith.constant 0 : index
    %53 = vector.load %arg2[%c32, %c0_45] : memref<424x128xf32, #tpu.memory_space<vmem>>, vector<8x16xf32>
    %54 = arith.truncf %53 : vector<8x16xf32> to vector<8x16xbf16>
    %cst_46 = arith.constant dense<0.000000e+00> : vector<72x16xf32>
    %55 = tpu.matmul %52, %54, %cst_46 {dimension_numbers = #tpu.dot_dimension_numbers<[1], [0], [0], [1], [0, 0, 1, 1], [], []>} : vector<72x8xbf16>, vector<8x16xbf16>, vector<72x16xf32> -> vector<72x16xf32>
    %c4_47 = arith.constant 4 : index
    %c0_48 = arith.constant 0 : index
    %56 = vector.load %arg4[%c4_47, %c0_48] : memref<152x16xf32, #tpu.memory_space<vmem>>, vector<72x8xf32>
    %57 = arith.truncf %56 : vector<72x8xf32> to vector<72x8xbf16>
    %c40 = arith.constant 40 : index
    %c0_49 = arith.constant 0 : index
    %58 = vector.load %arg2[%c40, %c0_49] : memref<424x128xf32, #tpu.memory_space<vmem>>, vector<8x16xf32>
    %59 = arith.truncf %58 : vector<8x16xf32> to vector<8x16xbf16>
    %cst_50 = arith.constant dense<0.000000e+00> : vector<72x16xf32>
    %60 = tpu.matmul %57, %59, %cst_50 {dimension_numbers = #tpu.dot_dimension_numbers<[1], [0], [0], [1], [0, 0, 1, 1], [], []>} : vector<72x8xbf16>, vector<8x16xbf16>, vector<72x16xf32> -> vector<72x16xf32>
    %61 = arith.addf %55, %60 : vector<72x16xf32>
    %c5_51 = arith.constant 5 : index
    %c0_52 = arith.constant 0 : index
    %62 = vector.load %arg4[%c5_51, %c0_52] : memref<152x16xf32, #tpu.memory_space<vmem>>, vector<72x8xf32>
    %63 = arith.truncf %62 : vector<72x8xf32> to vector<72x8xbf16>
    %c48 = arith.constant 48 : index
    %c0_53 = arith.constant 0 : index
    %64 = vector.load %arg2[%c48, %c0_53] : memref<424x128xf32, #tpu.memory_space<vmem>>, vector<8x16xf32>
    %65 = arith.truncf %64 : vector<8x16xf32> to vector<8x16xbf16>
    %cst_54 = arith.constant dense<0.000000e+00> : vector<72x16xf32>
    %66 = tpu.matmul %63, %65, %cst_54 {dimension_numbers = #tpu.dot_dimension_numbers<[1], [0], [0], [1], [0, 0, 1, 1], [], []>} : vector<72x8xbf16>, vector<8x16xbf16>, vector<72x16xf32> -> vector<72x16xf32>
    %67 = arith.addf %61, %66 : vector<72x16xf32>
    %c56 = arith.constant 56 : index
    %c0_55 = arith.constant 0 : index
    %68 = vector.load %arg2[%c56, %c0_55] : memref<424x128xf32, #tpu.memory_space<vmem>>, vector<1x16xf32>
    %69 = vector.broadcast %68 : vector<1x16xf32> to vector<72x16xf32>
    %70 = arith.addf %67, %69 : vector<72x16xf32>
    %cst_56 = arith.constant 0.000000e+00 : f32
    %71 = vector.broadcast %cst_56 : f32 to vector<72x16xf32>
    %72 = arith.maximumf %70, %71 : vector<72x16xf32>
    %c4_57 = arith.constant 4 : index
    %c0_58 = arith.constant 0 : index
    %73 = vector.load %arg4[%c4_57, %c0_58] : memref<152x16xf32, #tpu.memory_space<vmem>>, vector<72x16xf32>
    tpu.vector_store %arg4[%c4_57, %c0_58], %72 {strides = array<i32>} : memref<152x16xf32, #tpu.memory_space<vmem>>, vector<72x16xf32>,
    %cst_59 = arith.constant 0.000000e+00 : f32
    %74 = vector.broadcast %cst_59 : f32 to vector<4x16xf32>
    %c0_60 = arith.constant 0 : index
    %c0_61 = arith.constant 0 : index
    %75 = vector.load %arg4[%c0_60, %c0_61] : memref<152x16xf32, #tpu.memory_space<vmem>>, vector<4x16xf32>
    tpu.vector_store %arg4[%c0_60, %c0_61], %74 {strides = array<i32>} : memref<152x16xf32, #tpu.memory_space<vmem>>, vector<4x16xf32>,
    %cst_62 = arith.constant 0.000000e+00 : f32
    %76 = vector.broadcast %cst_62 : f32 to vector<4x16xf32>
    %c36_63 = arith.constant 36 : index
    %c0_64 = arith.constant 0 : index
    %77 = vector.load %arg4[%c36_63, %c0_64] : memref<152x16xf32, #tpu.memory_space<vmem>>, vector<4x16xf32>
    tpu.vector_store %arg4[%c36_63, %c0_64], %76 {strides = array<i32>} : memref<152x16xf32, #tpu.memory_space<vmem>>, vector<4x16xf32>,
    %cst_65 = arith.constant 0.000000e+00 : f32
    %78 = vector.broadcast %cst_65 : f32 to vector<4x16xf32>
    %c72_66 = arith.constant 72 : index
    %c0_67 = arith.constant 0 : index
    %79 = vector.load %arg4[%c72_66, %c0_67] : memref<152x16xf32, #tpu.memory_space<vmem>>, vector<4x16xf32>
    tpu.vector_store %arg4[%c72_66, %c0_67], %78 {strides = array<i32>} : memref<152x16xf32, #tpu.memory_space<vmem>>, vector<4x16xf32>,
    %c3_68 = arith.constant 3 : index
    %c0_69 = arith.constant 0 : index
    %80 = vector.load %arg4[%c3_68, %c0_69] : memref<152x16xf32, #tpu.memory_space<vmem>>, vector<72x16xf32>
    %81 = arith.truncf %80 : vector<72x16xf32> to vector<72x16xbf16>
    %c64 = arith.constant 64 : index
    %c0_70 = arith.constant 0 : index
    %82 = vector.load %arg2[%c64, %c0_70] : memref<424x128xf32, #tpu.memory_space<vmem>>, vector<16x16xf32>
    %83 = arith.truncf %82 : vector<16x16xf32> to vector<16x16xbf16>
    %cst_71 = arith.constant dense<0.000000e+00> : vector<72x16xf32>
    %84 = tpu.matmul %81, %83, %cst_71 {dimension_numbers = #tpu.dot_dimension_numbers<[1], [0], [0], [1], [0, 0, 1, 1], [], []>} : vector<72x16xbf16>, vector<16x16xbf16>, vector<72x16xf32> -> vector<72x16xf32>
    %c4_72 = arith.constant 4 : index
    %c0_73 = arith.constant 0 : index
    %85 = vector.load %arg4[%c4_72, %c0_73] : memref<152x16xf32, #tpu.memory_space<vmem>>, vector<72x16xf32>
    %86 = arith.truncf %85 : vector<72x16xf32> to vector<72x16xbf16>
    %c80 = arith.constant 80 : index
    %c0_74 = arith.constant 0 : index
    %87 = vector.load %arg2[%c80, %c0_74] : memref<424x128xf32, #tpu.memory_space<vmem>>, vector<16x16xf32>
    %88 = arith.truncf %87 : vector<16x16xf32> to vector<16x16xbf16>
    %cst_75 = arith.constant dense<0.000000e+00> : vector<72x16xf32>
    %89 = tpu.matmul %86, %88, %cst_75 {dimension_numbers = #tpu.dot_dimension_numbers<[1], [0], [0], [1], [0, 0, 1, 1], [], []>} : vector<72x16xbf16>, vector<16x16xbf16>, vector<72x16xf32> -> vector<72x16xf32>
    %90 = arith.addf %84, %89 : vector<72x16xf32>
    %c5_76 = arith.constant 5 : index
    %c0_77 = arith.constant 0 : index
    %91 = vector.load %arg4[%c5_76, %c0_77] : memref<152x16xf32, #tpu.memory_space<vmem>>, vector<72x16xf32>
    %92 = arith.truncf %91 : vector<72x16xf32> to vector<72x16xbf16>
    %c96 = arith.constant 96 : index
    %c0_78 = arith.constant 0 : index
    %93 = vector.load %arg2[%c96, %c0_78] : memref<424x128xf32, #tpu.memory_space<vmem>>, vector<16x16xf32>
    %94 = arith.truncf %93 : vector<16x16xf32> to vector<16x16xbf16>
    %cst_79 = arith.constant dense<0.000000e+00> : vector<72x16xf32>
    %95 = tpu.matmul %92, %94, %cst_79 {dimension_numbers = #tpu.dot_dimension_numbers<[1], [0], [0], [1], [0, 0, 1, 1], [], []>} : vector<72x16xbf16>, vector<16x16xbf16>, vector<72x16xf32> -> vector<72x16xf32>
    %96 = arith.addf %90, %95 : vector<72x16xf32>
    %c112 = arith.constant 112 : index
    %c0_80 = arith.constant 0 : index
    %97 = vector.load %arg2[%c112, %c0_80] : memref<424x128xf32, #tpu.memory_space<vmem>>, vector<1x16xf32>
    %98 = vector.broadcast %97 : vector<1x16xf32> to vector<72x16xf32>
    %99 = arith.addf %96, %98 : vector<72x16xf32>
    %cst_81 = arith.constant 0.000000e+00 : f32
    %100 = vector.broadcast %cst_81 : f32 to vector<72x16xf32>
    %101 = arith.maximumf %99, %100 : vector<72x16xf32>
    %c120 = arith.constant 120 : index
    %c0_82 = arith.constant 0 : index
    %102 = vector.load %arg2[%c120, %c0_82] : memref<424x128xf32, #tpu.memory_space<vmem>>, vector<1x16xf32>
    %103 = vector.broadcast %102 : vector<1x16xf32> to vector<72x16xf32>
    %104 = arith.mulf %101, %103 : vector<72x16xf32>
    %c128 = arith.constant 128 : index
    %c0_83 = arith.constant 0 : index
    %105 = vector.load %arg2[%c128, %c0_83] : memref<424x128xf32, #tpu.memory_space<vmem>>, vector<1x16xf32>
    %106 = vector.broadcast %105 : vector<1x16xf32> to vector<72x16xf32>
    %107 = arith.addf %104, %106 : vector<72x16xf32>
    %c0_84 = arith.constant 0 : index
    %c0_85 = arith.constant 0 : index
    %108 = vector.load %arg4[%c0_84, %c0_85] : memref<152x16xf32, #tpu.memory_space<vmem>>, vector<72x16xf32>
    tpu.vector_store %arg4[%c0_84, %c0_85], %107 {strides = array<i32>} : memref<152x16xf32, #tpu.memory_space<vmem>>, vector<72x16xf32>,
    %c0_86 = arith.constant 0 : index
    %c0_87 = arith.constant 0 : index
    %109 = tpu.strided_load %arg4[%c0_86, %c0_87] {strides = array<i32: 2, 1>} : memref<152x16xf32, #tpu.memory_space<vmem>>, vector<36x16xf32>
    %c1_88 = arith.constant 1 : index
    %c0_89 = arith.constant 0 : index
    %110 = tpu.strided_load %arg4[%c1_88, %c0_89] {strides = array<i32: 2, 1>} : memref<152x16xf32, #tpu.memory_space<vmem>>, vector<36x16xf32>
    %111 = arith.maximumf %109, %110 : vector<36x16xf32>
    %c0_90 = arith.constant 0 : index
    %c0_91 = arith.constant 0 : index
    %c0_92 = arith.constant 0 : index
    %112 = vector.load %arg1[%c0_90, %c0_91, %c0_92] : memref<2x64x2xf32, #tpu.memory_space<vmem>>, vector<1x64x2xf32>
    %113 = vector.shape_cast %112 : vector<1x64x2xf32> to vector<64x2xf32>
    %c4_93 = arith.constant 4 : index
    %c0_94 = arith.constant 0 : index
    %114 = vector.load %arg4[%c4_93, %c0_94] : memref<152x16xf32, #tpu.memory_space<vmem>>, vector<64x2xf32>
    tpu.vector_store %arg4[%c4_93, %c0_94], %113 {strides = array<i32>} : memref<152x16xf32, #tpu.memory_space<vmem>>, vector<64x2xf32>,
    %c1_95 = arith.constant 1 : index
    %c0_96 = arith.constant 0 : index
    %c0_97 = arith.constant 0 : index
    %115 = vector.load %arg1[%c1_95, %c0_96, %c0_97] : memref<2x64x2xf32, #tpu.memory_space<vmem>>, vector<1x64x2xf32>
    %116 = vector.shape_cast %115 : vector<1x64x2xf32> to vector<64x2xf32>
    %c76_98 = arith.constant 76 : index
    %c0_99 = arith.constant 0 : index
    %117 = vector.load %arg4[%c76_98, %c0_99] : memref<152x16xf32, #tpu.memory_space<vmem>>, vector<64x2xf32>
    tpu.vector_store %arg4[%c76_98, %c0_99], %116 {strides = array<i32>} : memref<152x16xf32, #tpu.memory_space<vmem>>, vector<64x2xf32>,
    %cst_100 = arith.constant 0.000000e+00 : f32
    %118 = vector.broadcast %cst_100 : f32 to vector<4x2xf32>
    %c0_101 = arith.constant 0 : index
    %c0_102 = arith.constant 0 : index
    %119 = vector.load %arg4[%c0_101, %c0_102] : memref<152x16xf32, #tpu.memory_space<vmem>>, vector<4x2xf32>
    tpu.vector_store %arg4[%c0_101, %c0_102], %118 {strides = array<i32>} : memref<152x16xf32, #tpu.memory_space<vmem>>, vector<4x2xf32>,
    %cst_103 = arith.constant 0.000000e+00 : f32
    %120 = vector.broadcast %cst_103 : f32 to vector<8x2xf32>
    %c68_104 = arith.constant 68 : index
    %c0_105 = arith.constant 0 : index
    %121 = vector.load %arg4[%c68_104, %c0_105] : memref<152x16xf32, #tpu.memory_space<vmem>>, vector<8x2xf32>
    tpu.vector_store %arg4[%c68_104, %c0_105], %120 {strides = array<i32>} : memref<152x16xf32, #tpu.memory_space<vmem>>, vector<8x2xf32>,
    %cst_106 = arith.constant 0.000000e+00 : f32
    %122 = vector.broadcast %cst_106 : f32 to vector<8x2xf32>
    %c140_107 = arith.constant 140 : index
    %c0_108 = arith.constant 0 : index
    %123 = vector.load %arg4[%c140_107, %c0_108] : memref<152x16xf32, #tpu.memory_space<vmem>>, vector<8x2xf32>
    tpu.vector_store %arg4[%c140_107, %c0_108], %122 {strides = array<i32>} : memref<152x16xf32, #tpu.memory_space<vmem>>, vector<8x2xf32>,
    %c2_109 = arith.constant 2 : index
    %c0_110 = arith.constant 0 : index
    %124 = vector.load %arg4[%c2_109, %c0_110] : memref<152x16xf32, #tpu.memory_space<vmem>>, vector<144x2xf32>
    %125 = arith.truncf %124 : vector<144x2xf32> to vector<144x2xbf16>
    %c136 = arith.constant 136 : index
    %c0_111 = arith.constant 0 : index
    %126 = vector.load %arg2[%c136, %c0_111] : memref<424x128xf32, #tpu.memory_space<vmem>>, vector<2x8xf32>
    %127 = arith.truncf %126 : vector<2x8xf32> to vector<2x8xbf16>
    %cst_112 = arith.constant dense<0.000000e+00> : vector<144x8xf32>
    %128 = tpu.matmul %125, %127, %cst_112 {dimension_numbers = #tpu.dot_dimension_numbers<[1], [0], [0], [1], [0, 0, 1, 1], [], []>} : vector<144x2xbf16>, vector<2x8xbf16>, vector<144x8xf32> -> vector<144x8xf32>
    %c4_113 = arith.constant 4 : index
    %c0_114 = arith.constant 0 : index
    %129 = vector.load %arg4[%c4_113, %c0_114] : memref<152x16xf32, #tpu.memory_space<vmem>>, vector<144x2xf32>
    %130 = arith.truncf %129 : vector<144x2xf32> to vector<144x2xbf16>
    %c138 = arith.constant 138 : index
    %c0_115 = arith.constant 0 : index
    %131 = vector.load %arg2[%c138, %c0_115] : memref<424x128xf32, #tpu.memory_space<vmem>>, vector<2x8xf32>
    %132 = arith.truncf %131 : vector<2x8xf32> to vector<2x8xbf16>
    %cst_116 = arith.constant dense<0.000000e+00> : vector<144x8xf32>
    %133 = tpu.matmul %130, %132, %cst_116 {dimension_numbers = #tpu.dot_dimension_numbers<[1], [0], [0], [1], [0, 0, 1, 1], [], []>} : vector<144x2xbf16>, vector<2x8xbf16>, vector<144x8xf32> -> vector<144x8xf32>
    %134 = arith.addf %128, %133 : vector<144x8xf32>
    %c6 = arith.constant 6 : index
    %c0_117 = arith.constant 0 : index
    %135 = vector.load %arg4[%c6, %c0_117] : memref<152x16xf32, #tpu.memory_space<vmem>>, vector<144x2xf32>
    %136 = arith.truncf %135 : vector<144x2xf32> to vector<144x2xbf16>
    %c140_118 = arith.constant 140 : index
    %c0_119 = arith.constant 0 : index
    %137 = vector.load %arg2[%c140_118, %c0_119] : memref<424x128xf32, #tpu.memory_space<vmem>>, vector<2x8xf32>
    %138 = arith.truncf %137 : vector<2x8xf32> to vector<2x8xbf16>
    %cst_120 = arith.constant dense<0.000000e+00> : vector<144x8xf32>
    %139 = tpu.matmul %136, %138, %cst_120 {dimension_numbers = #tpu.dot_dimension_numbers<[1], [0], [0], [1], [0, 0, 1, 1], [], []>} : vector<144x2xbf16>, vector<2x8xbf16>, vector<144x8xf32> -> vector<144x8xf32>
    %140 = arith.addf %134, %139 : vector<144x8xf32>
    %c144 = arith.constant 144 : index
    %c0_121 = arith.constant 0 : index
    %141 = vector.load %arg2[%c144, %c0_121] : memref<424x128xf32, #tpu.memory_space<vmem>>, vector<1x8xf32>
    %142 = vector.broadcast %141 : vector<1x8xf32> to vector<144x8xf32>
    %143 = arith.addf %140, %142 : vector<144x8xf32>
    %cst_122 = arith.constant 0.000000e+00 : f32
    %144 = vector.broadcast %cst_122 : f32 to vector<144x8xf32>
    %145 = arith.maximumf %143, %144 : vector<144x8xf32>
    %c152 = arith.constant 152 : index
    %c0_123 = arith.constant 0 : index
    %146 = vector.load %arg2[%c152, %c0_123] : memref<424x128xf32, #tpu.memory_space<vmem>>, vector<1x8xf32>
    %147 = vector.broadcast %146 : vector<1x8xf32> to vector<144x8xf32>
    %148 = arith.mulf %145, %147 : vector<144x8xf32>
    %c160 = arith.constant 160 : index
    %c0_124 = arith.constant 0 : index
    %149 = vector.load %arg2[%c160, %c0_124] : memref<424x128xf32, #tpu.memory_space<vmem>>, vector<1x8xf32>
    %150 = vector.broadcast %149 : vector<1x8xf32> to vector<144x8xf32>
    %151 = arith.addf %148, %150 : vector<144x8xf32>
    %c0_125 = arith.constant 0 : index
    %c0_126 = arith.constant 0 : index
    %152 = vector.load %arg4[%c0_125, %c0_126] : memref<152x16xf32, #tpu.memory_space<vmem>>, vector<144x8xf32>
    tpu.vector_store %arg4[%c0_125, %c0_126], %151 {strides = array<i32>} : memref<152x16xf32, #tpu.memory_space<vmem>>, vector<144x8xf32>,
    %c0_127 = arith.constant 0 : index
    %c0_128 = arith.constant 0 : index
    %153 = tpu.strided_load %arg4[%c0_127, %c0_128] {strides = array<i32: 2, 1>} : memref<152x16xf32, #tpu.memory_space<vmem>>, vector<72x8xf32>
    %c1_129 = arith.constant 1 : index
    %c0_130 = arith.constant 0 : index
    %154 = tpu.strided_load %arg4[%c1_129, %c0_130] {strides = array<i32: 2, 1>} : memref<152x16xf32, #tpu.memory_space<vmem>>, vector<72x8xf32>
    %155 = arith.maximumf %153, %154 : vector<72x8xf32>
    %c4_131 = arith.constant 4 : index
    %c0_132 = arith.constant 0 : index
    %156 = vector.load %arg4[%c4_131, %c0_132] : memref<152x16xf32, #tpu.memory_space<vmem>>, vector<72x8xf32>
    tpu.vector_store %arg4[%c4_131, %c0_132], %155 {strides = array<i32>} : memref<152x16xf32, #tpu.memory_space<vmem>>, vector<72x8xf32>,
    %cst_133 = arith.constant 0.000000e+00 : f32
    %157 = vector.broadcast %cst_133 : f32 to vector<4x8xf32>
    %c0_134 = arith.constant 0 : index
    %c0_135 = arith.constant 0 : index
    %158 = vector.load %arg4[%c0_134, %c0_135] : memref<152x16xf32, #tpu.memory_space<vmem>>, vector<4x8xf32>
    tpu.vector_store %arg4[%c0_134, %c0_135], %157 {strides = array<i32>} : memref<152x16xf32, #tpu.memory_space<vmem>>, vector<4x8xf32>,
    %cst_136 = arith.constant 0.000000e+00 : f32
    %159 = vector.broadcast %cst_136 : f32 to vector<4x8xf32>
    %c36_137 = arith.constant 36 : index
    %c0_138 = arith.constant 0 : index
    %160 = vector.load %arg4[%c36_137, %c0_138] : memref<152x16xf32, #tpu.memory_space<vmem>>, vector<4x8xf32>
    tpu.vector_store %arg4[%c36_137, %c0_138], %159 {strides = array<i32>} : memref<152x16xf32, #tpu.memory_space<vmem>>, vector<4x8xf32>,
    %cst_139 = arith.constant 0.000000e+00 : f32
    %161 = vector.broadcast %cst_139 : f32 to vector<4x8xf32>
    %c72_140 = arith.constant 72 : index
    %c0_141 = arith.constant 0 : index
    %162 = vector.load %arg4[%c72_140, %c0_141] : memref<152x16xf32, #tpu.memory_space<vmem>>, vector<4x8xf32>
    tpu.vector_store %arg4[%c72_140, %c0_141], %161 {strides = array<i32>} : memref<152x16xf32, #tpu.memory_space<vmem>>, vector<4x8xf32>,
    %c0_142 = arith.constant 0 : index
    %c0_143 = arith.constant 0 : index
    %163 = vector.load %arg4[%c0_142, %c0_143] : memref<152x16xf32, #tpu.memory_space<vmem>>, vector<72x8xf32>
    %164 = arith.truncf %163 : vector<72x8xf32> to vector<72x8xbf16>
    %c168 = arith.constant 168 : index
    %c0_144 = arith.constant 0 : index
    %165 = vector.load %arg2[%c168, %c0_144] : memref<424x128xf32, #tpu.memory_space<vmem>>, vector<8x16xf32>
    %166 = arith.truncf %165 : vector<8x16xf32> to vector<8x16xbf16>
    %cst_145 = arith.constant dense<0.000000e+00> : vector<72x16xf32>
    %167 = tpu.matmul %164, %166, %cst_145 {dimension_numbers = #tpu.dot_dimension_numbers<[1], [0], [0], [1], [0, 0, 1, 1], [], []>} : vector<72x8xbf16>, vector<8x16xbf16>, vector<72x16xf32> -> vector<72x16xf32>
    %c4_146 = arith.constant 4 : index
    %c0_147 = arith.constant 0 : index
    %168 = vector.load %arg4[%c4_146, %c0_147] : memref<152x16xf32, #tpu.memory_space<vmem>>, vector<72x8xf32>
    %169 = arith.truncf %168 : vector<72x8xf32> to vector<72x8xbf16>
    %c176 = arith.constant 176 : index
    %c0_148 = arith.constant 0 : index
    %170 = vector.load %arg2[%c176, %c0_148] : memref<424x128xf32, #tpu.memory_space<vmem>>, vector<8x16xf32>
    %171 = arith.truncf %170 : vector<8x16xf32> to vector<8x16xbf16>
    %cst_149 = arith.constant dense<0.000000e+00> : vector<72x16xf32>
    %172 = tpu.matmul %169, %171, %cst_149 {dimension_numbers = #tpu.dot_dimension_numbers<[1], [0], [0], [1], [0, 0, 1, 1], [], []>} : vector<72x8xbf16>, vector<8x16xbf16>, vector<72x16xf32> -> vector<72x16xf32>
    %173 = arith.addf %167, %172 : vector<72x16xf32>
    %c8_150 = arith.constant 8 : index
    %c0_151 = arith.constant 0 : index
    %174 = vector.load %arg4[%c8_150, %c0_151] : memref<152x16xf32, #tpu.memory_space<vmem>>, vector<72x8xf32>
    %175 = arith.truncf %174 : vector<72x8xf32> to vector<72x8xbf16>
    %c184 = arith.constant 184 : index
    %c0_152 = arith.constant 0 : index
    %176 = vector.load %arg2[%c184, %c0_152] : memref<424x128xf32, #tpu.memory_space<vmem>>, vector<8x16xf32>
    %177 = arith.truncf %176 : vector<8x16xf32> to vector<8x16xbf16>
    %cst_153 = arith.constant dense<0.000000e+00> : vector<72x16xf32>
    %178 = tpu.matmul %175, %177, %cst_153 {dimension_numbers = #tpu.dot_dimension_numbers<[1], [0], [0], [1], [0, 0, 1, 1], [], []>} : vector<72x8xbf16>, vector<8x16xbf16>, vector<72x16xf32> -> vector<72x16xf32>
    %179 = arith.addf %173, %178 : vector<72x16xf32>
    %c192 = arith.constant 192 : index
    %c0_154 = arith.constant 0 : index
    %180 = vector.load %arg2[%c192, %c0_154] : memref<424x128xf32, #tpu.memory_space<vmem>>, vector<1x16xf32>
    %181 = vector.broadcast %180 : vector<1x16xf32> to vector<72x16xf32>
    %182 = arith.addf %179, %181 : vector<72x16xf32>
    %cst_155 = arith.constant 0.000000e+00 : f32
    %183 = vector.broadcast %cst_155 : f32 to vector<72x16xf32>
    %184 = arith.maximumf %182, %183 : vector<72x16xf32>
    %c4_156 = arith.constant 4 : index
    %c0_157 = arith.constant 0 : index
    %185 = vector.load %arg4[%c4_156, %c0_157] : memref<152x16xf32, #tpu.memory_space<vmem>>, vector<72x16xf32>
    tpu.vector_store %arg4[%c4_156, %c0_157], %184 {strides = array<i32>} : memref<152x16xf32, #tpu.memory_space<vmem>>, vector<72x16xf32>,
    %cst_158 = arith.constant 0.000000e+00 : f32
    %186 = vector.broadcast %cst_158 : f32 to vector<4x16xf32>
    %c0_159 = arith.constant 0 : index
    %c0_160 = arith.constant 0 : index
    %187 = vector.load %arg4[%c0_159, %c0_160] : memref<152x16xf32, #tpu.memory_space<vmem>>, vector<4x16xf32>
    tpu.vector_store %arg4[%c0_159, %c0_160], %186 {strides = array<i32>} : memref<152x16xf32, #tpu.memory_space<vmem>>, vector<4x16xf32>,
    %cst_161 = arith.constant 0.000000e+00 : f32
    %188 = vector.broadcast %cst_161 : f32 to vector<4x16xf32>
    %c36_162 = arith.constant 36 : index
    %c0_163 = arith.constant 0 : index
    %189 = vector.load %arg4[%c36_162, %c0_163] : memref<152x16xf32, #tpu.memory_space<vmem>>, vector<4x16xf32>
    tpu.vector_store %arg4[%c36_162, %c0_163], %188 {strides = array<i32>} : memref<152x16xf32, #tpu.memory_space<vmem>>, vector<4x16xf32>,
    %cst_164 = arith.constant 0.000000e+00 : f32
    %190 = vector.broadcast %cst_164 : f32 to vector<4x16xf32>
    %c72_165 = arith.constant 72 : index
    %c0_166 = arith.constant 0 : index
    %191 = vector.load %arg4[%c72_165, %c0_166] : memref<152x16xf32, #tpu.memory_space<vmem>>, vector<4x16xf32>
    tpu.vector_store %arg4[%c72_165, %c0_166], %190 {strides = array<i32>} : memref<152x16xf32, #tpu.memory_space<vmem>>, vector<4x16xf32>,
    %c0_167 = arith.constant 0 : index
    %c0_168 = arith.constant 0 : index
    %192 = vector.load %arg4[%c0_167, %c0_168] : memref<152x16xf32, #tpu.memory_space<vmem>>, vector<72x16xf32>
    %193 = arith.truncf %192 : vector<72x16xf32> to vector<72x16xbf16>
    %c200 = arith.constant 200 : index
    %c0_169 = arith.constant 0 : index
    %194 = vector.load %arg2[%c200, %c0_169] : memref<424x128xf32, #tpu.memory_space<vmem>>, vector<16x16xf32>
    %195 = arith.truncf %194 : vector<16x16xf32> to vector<16x16xbf16>
    %cst_170 = arith.constant dense<0.000000e+00> : vector<72x16xf32>
    %196 = tpu.matmul %193, %195, %cst_170 {dimension_numbers = #tpu.dot_dimension_numbers<[1], [0], [0], [1], [0, 0, 1, 1], [], []>} : vector<72x16xbf16>, vector<16x16xbf16>, vector<72x16xf32> -> vector<72x16xf32>
    %c4_171 = arith.constant 4 : index
    %c0_172 = arith.constant 0 : index
    %197 = vector.load %arg4[%c4_171, %c0_172] : memref<152x16xf32, #tpu.memory_space<vmem>>, vector<72x16xf32>
    %198 = arith.truncf %197 : vector<72x16xf32> to vector<72x16xbf16>
    %c216 = arith.constant 216 : index
    %c0_173 = arith.constant 0 : index
    %199 = vector.load %arg2[%c216, %c0_173] : memref<424x128xf32, #tpu.memory_space<vmem>>, vector<16x16xf32>
    %200 = arith.truncf %199 : vector<16x16xf32> to vector<16x16xbf16>
    %cst_174 = arith.constant dense<0.000000e+00> : vector<72x16xf32>
    %201 = tpu.matmul %198, %200, %cst_174 {dimension_numbers = #tpu.dot_dimension_numbers<[1], [0], [0], [1], [0, 0, 1, 1], [], []>} : vector<72x16xbf16>, vector<16x16xbf16>, vector<72x16xf32> -> vector<72x16xf32>
    %202 = arith.addf %196, %201 : vector<72x16xf32>
    %c8_175 = arith.constant 8 : index
    %c0_176 = arith.constant 0 : index
    %203 = vector.load %arg4[%c8_175, %c0_176] : memref<152x16xf32, #tpu.memory_space<vmem>>, vector<72x16xf32>
    %204 = arith.truncf %203 : vector<72x16xf32> to vector<72x16xbf16>
    %c232 = arith.constant 232 : index
    %c0_177 = arith.constant 0 : index
    %205 = vector.load %arg2[%c232, %c0_177] : memref<424x128xf32, #tpu.memory_space<vmem>>, vector<16x16xf32>
    %206 = arith.truncf %205 : vector<16x16xf32> to vector<16x16xbf16>
    %cst_178 = arith.constant dense<0.000000e+00> : vector<72x16xf32>
    %207 = tpu.matmul %204, %206, %cst_178 {dimension_numbers = #tpu.dot_dimension_numbers<[1], [0], [0], [1], [0, 0, 1, 1], [], []>} : vector<72x16xbf16>, vector<16x16xbf16>, vector<72x16xf32> -> vector<72x16xf32>
    %208 = arith.addf %202, %207 : vector<72x16xf32>
    %c248 = arith.constant 248 : index
    %c0_179 = arith.constant 0 : index
    %209 = vector.load %arg2[%c248, %c0_179] : memref<424x128xf32, #tpu.memory_space<vmem>>, vector<1x16xf32>
    %210 = vector.broadcast %209 : vector<1x16xf32> to vector<72x16xf32>
    %211 = arith.addf %208, %210 : vector<72x16xf32>
    %cst_180 = arith.constant 0.000000e+00 : f32
    %212 = vector.broadcast %cst_180 : f32 to vector<72x16xf32>
    %213 = arith.maximumf %211, %212 : vector<72x16xf32>
    %c256 = arith.constant 256 : index
    %c0_181 = arith.constant 0 : index
    %214 = vector.load %arg2[%c256, %c0_181] : memref<424x128xf32, #tpu.memory_space<vmem>>, vector<1x16xf32>
    %215 = vector.broadcast %214 : vector<1x16xf32> to vector<72x16xf32>
    %216 = arith.mulf %213, %215 : vector<72x16xf32>
    %c264 = arith.constant 264 : index
    %c0_182 = arith.constant 0 : index
    %217 = vector.load %arg2[%c264, %c0_182] : memref<424x128xf32, #tpu.memory_space<vmem>>, vector<1x16xf32>
    %218 = vector.broadcast %217 : vector<1x16xf32> to vector<72x16xf32>
    %219 = arith.addf %216, %218 : vector<72x16xf32>
    %c0_183 = arith.constant 0 : index
    %c0_184 = arith.constant 0 : index
    %220 = vector.load %arg4[%c0_183, %c0_184] : memref<152x16xf32, #tpu.memory_space<vmem>>, vector<72x16xf32>
    tpu.vector_store %arg4[%c0_183, %c0_184], %219 {strides = array<i32>} : memref<152x16xf32, #tpu.memory_space<vmem>>, vector<72x16xf32>,
    %c0_185 = arith.constant 0 : index
    %c0_186 = arith.constant 0 : index
    %221 = tpu.strided_load %arg4[%c0_185, %c0_186] {strides = array<i32: 2, 1>} : memref<152x16xf32, #tpu.memory_space<vmem>>, vector<36x16xf32>
    %c1_187 = arith.constant 1 : index
    %c0_188 = arith.constant 0 : index
    %222 = tpu.strided_load %arg4[%c1_187, %c0_188] {strides = array<i32: 2, 1>} : memref<152x16xf32, #tpu.memory_space<vmem>>, vector<36x16xf32>
    %223 = arith.maximumf %221, %222 : vector<36x16xf32>
    %c384 = arith.constant 384 : index
    %c0_189 = arith.constant 0 : index
    %224 = vector.load %arg2[%c384, %c0_189] : memref<424x128xf32, #tpu.memory_space<vmem>>, vector<16x8xf32>
    %225 = arith.truncf %224 : vector<16x8xf32> to vector<16x8xbf16>
    %c400 = arith.constant 400 : index
    %c0_190 = arith.constant 0 : index
    %226 = vector.load %arg2[%c400, %c0_190] : memref<424x128xf32, #tpu.memory_space<vmem>>, vector<1x8xf32>
    %c408 = arith.constant 408 : index
    %c0_191 = arith.constant 0 : index
    %227 = vector.load %arg2[%c408, %c0_191] : memref<424x128xf32, #tpu.memory_space<vmem>>, vector<8x2xf32>
    %228 = arith.truncf %227 : vector<8x2xf32> to vector<8x2xbf16>
    %c416 = arith.constant 416 : index
    %c0_192 = arith.constant 0 : index
    %229 = vector.load %arg2[%c416, %c0_192] : memref<424x128xf32, #tpu.memory_space<vmem>>, vector<1x2xf32>
    %c304 = arith.constant 304 : index
    %c0_193 = arith.constant 0 : index
    %230 = vector.load %arg2[%c304, %c0_193] : memref<424x128xf32, #tpu.memory_space<vmem>>, vector<1x8xf32>
    %231 = vector.extract_strided_slice %111 {offsets = [0, 0], sizes = [16, 16], strides = [1, 1]} : vector<36x16xf32> to vector<16x16xf32>
    %cst_194 = arith.constant dense<0.000000e+00> : vector<16xf32>
    %232 = vector.multi_reduction <add>, %231, %cst_194 [0] : vector<16x16xf32> to vector<16xf32>
    %233 = vector.shape_cast %232 : vector<16xf32> to vector<1x16xf32>
    %cst_195 = arith.constant 1.600000e+01 : f32
    %234 = vector.broadcast %cst_195 : f32 to vector<1x16xf32>
    %235 = arith.divf %233, %234 : vector<1x16xf32>
    %236 = arith.truncf %235 : vector<1x16xf32> to vector<1x16xbf16>
    %c272 = arith.constant 272 : index
    %c0_196 = arith.constant 0 : index
    %237 = vector.load %arg2[%c272, %c0_196] : memref<424x128xf32, #tpu.memory_space<vmem>>, vector<16x8xf32>
    %238 = arith.truncf %237 : vector<16x8xf32> to vector<16x8xbf16>
    %cst_197 = arith.constant dense<0.000000e+00> : vector<1x8xf32>
    %239 = tpu.matmul %236, %238, %cst_197 {dimension_numbers = #tpu.dot_dimension_numbers<[1], [0], [0], [1], [0, 0, 1, 1], [], []>} : vector<1x16xbf16>, vector<16x8xbf16>, vector<1x8xf32> -> vector<1x8xf32>
    %240 = arith.addf %230, %239 : vector<1x8xf32>
    %241 = vector.extract_strided_slice %223 {offsets = [0, 0], sizes = [16, 16], strides = [1, 1]} : vector<36x16xf32> to vector<16x16xf32>
    %cst_198 = arith.constant dense<0.000000e+00> : vector<16xf32>
    %242 = vector.multi_reduction <add>, %241, %cst_198 [0] : vector<16x16xf32> to vector<16xf32>
    %243 = vector.shape_cast %242 : vector<16xf32> to vector<1x16xf32>
    %cst_199 = arith.constant 1.600000e+01 : f32
    %244 = vector.broadcast %cst_199 : f32 to vector<1x16xf32>
    %245 = arith.divf %243, %244 : vector<1x16xf32>
    %246 = arith.truncf %245 : vector<1x16xf32> to vector<1x16xbf16>
    %c288 = arith.constant 288 : index
    %c0_200 = arith.constant 0 : index
    %247 = vector.load %arg2[%c288, %c0_200] : memref<424x128xf32, #tpu.memory_space<vmem>>, vector<16x8xf32>
    %248 = arith.truncf %247 : vector<16x8xf32> to vector<16x8xbf16>
    %cst_201 = arith.constant dense<0.000000e+00> : vector<1x8xf32>
    %249 = tpu.matmul %246, %248, %cst_201 {dimension_numbers = #tpu.dot_dimension_numbers<[1], [0], [0], [1], [0, 0, 1, 1], [], []>} : vector<1x16xbf16>, vector<16x8xbf16>, vector<1x8xf32> -> vector<1x8xf32>
    %250 = arith.addf %240, %249 : vector<1x8xf32>
    %cst_202 = arith.constant 0.000000e+00 : f32
    %251 = vector.broadcast %cst_202 : f32 to vector<1x8xf32>
    %252 = arith.maximumf %250, %251 : vector<1x8xf32>
    %c376 = arith.constant 376 : index
    %c0_203 = arith.constant 0 : index
    %253 = vector.load %arg2[%c376, %c0_203] : memref<424x128xf32, #tpu.memory_space<vmem>>, vector<1x16xf32>
    %254 = arith.truncf %252 : vector<1x8xf32> to vector<1x8xbf16>
    %c312 = arith.constant 312 : index
    %c0_204 = arith.constant 0 : index
    %255 = vector.load %arg2[%c312, %c0_204] : memref<424x128xf32, #tpu.memory_space<vmem>>, vector<8x16xf32>
    %256 = arith.truncf %255 : vector<8x16xf32> to vector<8x16xbf16>
    %cst_205 = arith.constant dense<0.000000e+00> : vector<1x16xf32>
    %257 = tpu.matmul %254, %256, %cst_205 {dimension_numbers = #tpu.dot_dimension_numbers<[1], [0], [0], [1], [0, 0, 1, 1], [], []>} : vector<1x8xbf16>, vector<8x16xbf16>, vector<1x16xf32> -> vector<1x16xf32>
    %c328 = arith.constant 328 : index
    %c0_206 = arith.constant 0 : index
    %258 = vector.load %arg2[%c328, %c0_206] : memref<424x128xf32, #tpu.memory_space<vmem>>, vector<1x16xf32>
    %259 = arith.addf %257, %258 : vector<1x16xf32>
    %260 = arith.negf %259 : vector<1x16xf32>
    %261 = math.exp %260 : vector<1x16xf32>
    %cst_207 = arith.constant 1.000000e+00 : f32
    %262 = vector.broadcast %cst_207 : f32 to vector<1x16xf32>
    %263 = arith.addf %262, %261 : vector<1x16xf32>
    %264 = arith.divf %262, %263 : vector<1x16xf32>
    %265 = vector.broadcast %264 : vector<1x16xf32> to vector<16x16xf32>
    %266 = arith.mulf %231, %265 : vector<16x16xf32>
    %267 = arith.truncf %266 : vector<16x16xf32> to vector<16x16xbf16>
    %c344 = arith.constant 344 : index
    %c0_208 = arith.constant 0 : index
    %268 = vector.load %arg2[%c344, %c0_208] : memref<424x128xf32, #tpu.memory_space<vmem>>, vector<16x16xf32>
    %269 = arith.truncf %268 : vector<16x16xf32> to vector<16x16xbf16>
    %cst_209 = arith.constant dense<0.000000e+00> : vector<16x16xf32>
    %270 = tpu.matmul %267, %269, %cst_209 {dimension_numbers = #tpu.dot_dimension_numbers<[1], [0], [0], [1], [0, 0, 1, 1], [], []>} : vector<16x16xbf16>, vector<16x16xbf16>, vector<16x16xf32> -> vector<16x16xf32>
    %271 = vector.broadcast %253 : vector<1x16xf32> to vector<16x16xf32>
    %272 = arith.addf %271, %270 : vector<16x16xf32>
    %273 = arith.truncf %252 : vector<1x8xf32> to vector<1x8xbf16>
    %c320 = arith.constant 320 : index
    %c0_210 = arith.constant 0 : index
    %274 = vector.load %arg2[%c320, %c0_210] : memref<424x128xf32, #tpu.memory_space<vmem>>, vector<8x16xf32>
    %275 = arith.truncf %274 : vector<8x16xf32> to vector<8x16xbf16>
    %cst_211 = arith.constant dense<0.000000e+00> : vector<1x16xf32>
    %276 = tpu.matmul %273, %275, %cst_211 {dimension_numbers = #tpu.dot_dimension_numbers<[1], [0], [0], [1], [0, 0, 1, 1], [], []>} : vector<1x8xbf16>, vector<8x16xbf16>, vector<1x16xf32> -> vector<1x16xf32>
    %c336 = arith.constant 336 : index
    %c0_212 = arith.constant 0 : index
    %277 = vector.load %arg2[%c336, %c0_212] : memref<424x128xf32, #tpu.memory_space<vmem>>, vector<1x16xf32>
    %278 = arith.addf %276, %277 : vector<1x16xf32>
    %279 = arith.negf %278 : vector<1x16xf32>
    %280 = math.exp %279 : vector<1x16xf32>
    %cst_213 = arith.constant 1.000000e+00 : f32
    %281 = vector.broadcast %cst_213 : f32 to vector<1x16xf32>
    %282 = arith.addf %281, %280 : vector<1x16xf32>
    %283 = arith.divf %281, %282 : vector<1x16xf32>
    %284 = vector.broadcast %283 : vector<1x16xf32> to vector<16x16xf32>
    %285 = arith.mulf %241, %284 : vector<16x16xf32>
    %286 = arith.truncf %285 : vector<16x16xf32> to vector<16x16xbf16>
    %c360 = arith.constant 360 : index
    %c0_214 = arith.constant 0 : index
    %287 = vector.load %arg2[%c360, %c0_214] : memref<424x128xf32, #tpu.memory_space<vmem>>, vector<16x16xf32>
    %288 = arith.truncf %287 : vector<16x16xf32> to vector<16x16xbf16>
    %cst_215 = arith.constant dense<0.000000e+00> : vector<16x16xf32>
    %289 = tpu.matmul %286, %288, %cst_215 {dimension_numbers = #tpu.dot_dimension_numbers<[1], [0], [0], [1], [0, 0, 1, 1], [], []>} : vector<16x16xbf16>, vector<16x16xbf16>, vector<16x16xf32> -> vector<16x16xf32>
    %290 = arith.addf %272, %289 : vector<16x16xf32>
    %cst_216 = arith.constant 2.000000e+01 : f32
    %291 = vector.broadcast %cst_216 : f32 to vector<16x16xf32>
    %292 = arith.minimumf %290, %291 : vector<16x16xf32>
    %293 = math.exp %292 : vector<16x16xf32>
    %cst_217 = arith.constant 2.000000e+00 : f32
    %294 = vector.broadcast %cst_217 : f32 to vector<16x16xf32>
    %295 = arith.addf %293, %294 : vector<16x16xf32>
    %296 = arith.mulf %293, %295 : vector<16x16xf32>
    %297 = arith.mulf %290, %296 : vector<16x16xf32>
    %cst_218 = arith.constant 2.000000e+00 : f32
    %298 = vector.broadcast %cst_218 : f32 to vector<16x16xf32>
    %299 = arith.addf %296, %298 : vector<16x16xf32>
    %300 = tpu.reciprocal %299 {approx = true} : vector<16x16xf32> -> vector<16x16xf32>
    %301 = arith.mulf %297, %300 : vector<16x16xf32>
    %cst_219 = arith.constant 2.000000e+01 : f32
    %302 = vector.broadcast %cst_219 : f32 to vector<16x16xf32>
    %303 = arith.cmpf ogt, %290, %302 : vector<16x16xf32>
    %304 = arith.select %303, %290, %301 : vector<16x16xi1>, vector<16x16xf32>
    %305 = arith.truncf %304 : vector<16x16xf32> to vector<16x16xbf16>
    %cst_220 = arith.constant dense<0.000000e+00> : vector<16x8xf32>
    %306 = tpu.matmul %305, %225, %cst_220 {dimension_numbers = #tpu.dot_dimension_numbers<[1], [0], [0], [1], [0, 0, 1, 1], [], []>} : vector<16x16xbf16>, vector<16x8xbf16>, vector<16x8xf32> -> vector<16x8xf32>
    %307 = vector.broadcast %226 : vector<1x8xf32> to vector<16x8xf32>
    %308 = arith.addf %306, %307 : vector<16x8xf32>
    %cst_221 = arith.constant 2.000000e+01 : f32
    %309 = vector.broadcast %cst_221 : f32 to vector<16x8xf32>
    %310 = arith.minimumf %308, %309 : vector<16x8xf32>
    %311 = math.exp %310 : vector<16x8xf32>
    %cst_222 = arith.constant 2.000000e+00 : f32
    %312 = vector.broadcast %cst_222 : f32 to vector<16x8xf32>
    %313 = arith.addf %311, %312 : vector<16x8xf32>
    %314 = arith.mulf %311, %313 : vector<16x8xf32>
    %315 = arith.mulf %308, %314 : vector<16x8xf32>
    %cst_223 = arith.constant 2.000000e+00 : f32
    %316 = vector.broadcast %cst_223 : f32 to vector<16x8xf32>
    %317 = arith.addf %314, %316 : vector<16x8xf32>
    %318 = tpu.reciprocal %317 {approx = true} : vector<16x8xf32> -> vector<16x8xf32>
    %319 = arith.mulf %315, %318 : vector<16x8xf32>
    %cst_224 = arith.constant 2.000000e+01 : f32
    %320 = vector.broadcast %cst_224 : f32 to vector<16x8xf32>
    %321 = arith.cmpf ogt, %308, %320 : vector<16x8xf32>
    %322 = arith.select %321, %308, %319 : vector<16x8xi1>, vector<16x8xf32>
    %323 = arith.truncf %322 : vector<16x8xf32> to vector<16x8xbf16>
    %cst_225 = arith.constant dense<0.000000e+00> : vector<16x2xf32>
    %324 = tpu.matmul %323, %228, %cst_225 {dimension_numbers = #tpu.dot_dimension_numbers<[1], [0], [0], [1], [0, 0, 1, 1], [], []>} : vector<16x8xbf16>, vector<8x2xbf16>, vector<16x2xf32> -> vector<16x2xf32>
    %325 = vector.broadcast %229 : vector<1x2xf32> to vector<16x2xf32>
    %326 = arith.addf %324, %325 : vector<16x2xf32>
    %c0_226 = arith.constant 0 : index
    %c0_227 = arith.constant 0 : index
    %c0_228 = arith.constant 0 : index
    %327 = vector.load %arg3[%c0_226, %c0_227, %c0_228] : memref<2x16x2xf32, #tpu.memory_space<vmem>>, vector<1x16x2xf32>
    %328 = vector.shape_cast %327 : vector<1x16x2xf32> to vector<16x2xf32>
    %329 = vector.shape_cast %326 : vector<16x2xf32> to vector<1x16x2xf32>
    tpu.vector_store %arg3[%c0_226, %c0_227, %c0_228], %329 {strides = array<i32>} : memref<2x16x2xf32, #tpu.memory_space<vmem>>, vector<1x16x2xf32>,
    %c304_229 = arith.constant 304 : index
    %c0_230 = arith.constant 0 : index
    %330 = vector.load %arg2[%c304_229, %c0_230] : memref<424x128xf32, #tpu.memory_space<vmem>>, vector<1x8xf32>
    %331 = vector.extract_strided_slice %111 {offsets = [18, 0], sizes = [16, 16], strides = [1, 1]} : vector<36x16xf32> to vector<16x16xf32>
    %cst_231 = arith.constant dense<0.000000e+00> : vector<16xf32>
    %332 = vector.multi_reduction <add>, %331, %cst_231 [0] : vector<16x16xf32> to vector<16xf32>
    %333 = vector.shape_cast %332 : vector<16xf32> to vector<1x16xf32>
    %cst_232 = arith.constant 1.600000e+01 : f32
    %334 = vector.broadcast %cst_232 : f32 to vector<1x16xf32>
    %335 = arith.divf %333, %334 : vector<1x16xf32>
    %336 = arith.truncf %335 : vector<1x16xf32> to vector<1x16xbf16>
    %c272_233 = arith.constant 272 : index
    %c0_234 = arith.constant 0 : index
    %337 = vector.load %arg2[%c272_233, %c0_234] : memref<424x128xf32, #tpu.memory_space<vmem>>, vector<16x8xf32>
    %338 = arith.truncf %337 : vector<16x8xf32> to vector<16x8xbf16>
    %cst_235 = arith.constant dense<0.000000e+00> : vector<1x8xf32>
    %339 = tpu.matmul %336, %338, %cst_235 {dimension_numbers = #tpu.dot_dimension_numbers<[1], [0], [0], [1], [0, 0, 1, 1], [], []>} : vector<1x16xbf16>, vector<16x8xbf16>, vector<1x8xf32> -> vector<1x8xf32>
    %340 = arith.addf %330, %339 : vector<1x8xf32>
    %341 = vector.extract_strided_slice %223 {offsets = [18, 0], sizes = [16, 16], strides = [1, 1]} : vector<36x16xf32> to vector<16x16xf32>
    %cst_236 = arith.constant dense<0.000000e+00> : vector<16xf32>
    %342 = vector.multi_reduction <add>, %341, %cst_236 [0] : vector<16x16xf32> to vector<16xf32>
    %343 = vector.shape_cast %342 : vector<16xf32> to vector<1x16xf32>
    %cst_237 = arith.constant 1.600000e+01 : f32
    %344 = vector.broadcast %cst_237 : f32 to vector<1x16xf32>
    %345 = arith.divf %343, %344 : vector<1x16xf32>
    %346 = arith.truncf %345 : vector<1x16xf32> to vector<1x16xbf16>
    %c288_238 = arith.constant 288 : index
    %c0_239 = arith.constant 0 : index
    %347 = vector.load %arg2[%c288_238, %c0_239] : memref<424x128xf32, #tpu.memory_space<vmem>>, vector<16x8xf32>
    %348 = arith.truncf %347 : vector<16x8xf32> to vector<16x8xbf16>
    %cst_240 = arith.constant dense<0.000000e+00> : vector<1x8xf32>
    %349 = tpu.matmul %346, %348, %cst_240 {dimension_numbers = #tpu.dot_dimension_numbers<[1], [0], [0], [1], [0, 0, 1, 1], [], []>} : vector<1x16xbf16>, vector<16x8xbf16>, vector<1x8xf32> -> vector<1x8xf32>
    %350 = arith.addf %340, %349 : vector<1x8xf32>
    %cst_241 = arith.constant 0.000000e+00 : f32
    %351 = vector.broadcast %cst_241 : f32 to vector<1x8xf32>
    %352 = arith.maximumf %350, %351 : vector<1x8xf32>
    %c376_242 = arith.constant 376 : index
    %c0_243 = arith.constant 0 : index
    %353 = vector.load %arg2[%c376_242, %c0_243] : memref<424x128xf32, #tpu.memory_space<vmem>>, vector<1x16xf32>
    %354 = arith.truncf %352 : vector<1x8xf32> to vector<1x8xbf16>
    %c312_244 = arith.constant 312 : index
    %c0_245 = arith.constant 0 : index
    %355 = vector.load %arg2[%c312_244, %c0_245] : memref<424x128xf32, #tpu.memory_space<vmem>>, vector<8x16xf32>
    %356 = arith.truncf %355 : vector<8x16xf32> to vector<8x16xbf16>
    %cst_246 = arith.constant dense<0.000000e+00> : vector<1x16xf32>
    %357 = tpu.matmul %354, %356, %cst_246 {dimension_numbers = #tpu.dot_dimension_numbers<[1], [0], [0], [1], [0, 0, 1, 1], [], []>} : vector<1x8xbf16>, vector<8x16xbf16>, vector<1x16xf32> -> vector<1x16xf32>
    %c328_247 = arith.constant 328 : index
    %c0_248 = arith.constant 0 : index
    %358 = vector.load %arg2[%c328_247, %c0_248] : memref<424x128xf32, #tpu.memory_space<vmem>>, vector<1x16xf32>
    %359 = arith.addf %357, %358 : vector<1x16xf32>
    %360 = arith.negf %359 : vector<1x16xf32>
    %361 = math.exp %360 : vector<1x16xf32>
    %cst_249 = arith.constant 1.000000e+00 : f32
    %362 = vector.broadcast %cst_249 : f32 to vector<1x16xf32>
    %363 = arith.addf %362, %361 : vector<1x16xf32>
    %364 = arith.divf %362, %363 : vector<1x16xf32>
    %365 = vector.broadcast %364 : vector<1x16xf32> to vector<16x16xf32>
    %366 = arith.mulf %331, %365 : vector<16x16xf32>
    %367 = arith.truncf %366 : vector<16x16xf32> to vector<16x16xbf16>
    %c344_250 = arith.constant 344 : index
    %c0_251 = arith.constant 0 : index
    %368 = vector.load %arg2[%c344_250, %c0_251] : memref<424x128xf32, #tpu.memory_space<vmem>>, vector<16x16xf32>
    %369 = arith.truncf %368 : vector<16x16xf32> to vector<16x16xbf16>
    %cst_252 = arith.constant dense<0.000000e+00> : vector<16x16xf32>
    %370 = tpu.matmul %367, %369, %cst_252 {dimension_numbers = #tpu.dot_dimension_numbers<[1], [0], [0], [1], [0, 0, 1, 1], [], []>} : vector<16x16xbf16>, vector<16x16xbf16>, vector<16x16xf32> -> vector<16x16xf32>
    %371 = vector.broadcast %353 : vector<1x16xf32> to vector<16x16xf32>
    %372 = arith.addf %371, %370 : vector<16x16xf32>
    %373 = arith.truncf %352 : vector<1x8xf32> to vector<1x8xbf16>
    %c320_253 = arith.constant 320 : index
    %c0_254 = arith.constant 0 : index
    %374 = vector.load %arg2[%c320_253, %c0_254] : memref<424x128xf32, #tpu.memory_space<vmem>>, vector<8x16xf32>
    %375 = arith.truncf %374 : vector<8x16xf32> to vector<8x16xbf16>
    %cst_255 = arith.constant dense<0.000000e+00> : vector<1x16xf32>
    %376 = tpu.matmul %373, %375, %cst_255 {dimension_numbers = #tpu.dot_dimension_numbers<[1], [0], [0], [1], [0, 0, 1, 1], [], []>} : vector<1x8xbf16>, vector<8x16xbf16>, vector<1x16xf32> -> vector<1x16xf32>
    %c336_256 = arith.constant 336 : index
    %c0_257 = arith.constant 0 : index
    %377 = vector.load %arg2[%c336_256, %c0_257] : memref<424x128xf32, #tpu.memory_space<vmem>>, vector<1x16xf32>
    %378 = arith.addf %376, %377 : vector<1x16xf32>
    %379 = arith.negf %378 : vector<1x16xf32>
    %380 = math.exp %379 : vector<1x16xf32>
    %cst_258 = arith.constant 1.000000e+00 : f32
    %381 = vector.broadcast %cst_258 : f32 to vector<1x16xf32>
    %382 = arith.addf %381, %380 : vector<1x16xf32>
    %383 = arith.divf %381, %382 : vector<1x16xf32>
    %384 = vector.broadcast %383 : vector<1x16xf32> to vector<16x16xf32>
    %385 = arith.mulf %341, %384 : vector<16x16xf32>
    %386 = arith.truncf %385 : vector<16x16xf32> to vector<16x16xbf16>
    %c360_259 = arith.constant 360 : index
    %c0_260 = arith.constant 0 : index
    %387 = vector.load %arg2[%c360_259, %c0_260] : memref<424x128xf32, #tpu.memory_space<vmem>>, vector<16x16xf32>
    %388 = arith.truncf %387 : vector<16x16xf32> to vector<16x16xbf16>
    %cst_261 = arith.constant dense<0.000000e+00> : vector<16x16xf32>
    %389 = tpu.matmul %386, %388, %cst_261 {dimension_numbers = #tpu.dot_dimension_numbers<[1], [0], [0], [1], [0, 0, 1, 1], [], []>} : vector<16x16xbf16>, vector<16x16xbf16>, vector<16x16xf32> -> vector<16x16xf32>
    %390 = arith.addf %372, %389 : vector<16x16xf32>
    %cst_262 = arith.constant 2.000000e+01 : f32
    %391 = vector.broadcast %cst_262 : f32 to vector<16x16xf32>
    %392 = arith.minimumf %390, %391 : vector<16x16xf32>
    %393 = math.exp %392 : vector<16x16xf32>
    %cst_263 = arith.constant 2.000000e+00 : f32
    %394 = vector.broadcast %cst_263 : f32 to vector<16x16xf32>
    %395 = arith.addf %393, %394 : vector<16x16xf32>
    %396 = arith.mulf %393, %395 : vector<16x16xf32>
    %397 = arith.mulf %390, %396 : vector<16x16xf32>
    %cst_264 = arith.constant 2.000000e+00 : f32
    %398 = vector.broadcast %cst_264 : f32 to vector<16x16xf32>
    %399 = arith.addf %396, %398 : vector<16x16xf32>
    %400 = tpu.reciprocal %399 {approx = true} : vector<16x16xf32> -> vector<16x16xf32>
    %401 = arith.mulf %397, %400 : vector<16x16xf32>
    %cst_265 = arith.constant 2.000000e+01 : f32
    %402 = vector.broadcast %cst_265 : f32 to vector<16x16xf32>
    %403 = arith.cmpf ogt, %390, %402 : vector<16x16xf32>
    %404 = arith.select %403, %390, %401 : vector<16x16xi1>, vector<16x16xf32>
    %405 = arith.truncf %404 : vector<16x16xf32> to vector<16x16xbf16>
    %cst_266 = arith.constant dense<0.000000e+00> : vector<16x8xf32>
    %406 = tpu.matmul %405, %225, %cst_266 {dimension_numbers = #tpu.dot_dimension_numbers<[1], [0], [0], [1], [0, 0, 1, 1], [], []>} : vector<16x16xbf16>, vector<16x8xbf16>, vector<16x8xf32> -> vector<16x8xf32>
    %407 = vector.broadcast %226 : vector<1x8xf32> to vector<16x8xf32>
    %408 = arith.addf %406, %407 : vector<16x8xf32>
    %cst_267 = arith.constant 2.000000e+01 : f32
    %409 = vector.broadcast %cst_267 : f32 to vector<16x8xf32>
    %410 = arith.minimumf %408, %409 : vector<16x8xf32>
    %411 = math.exp %410 : vector<16x8xf32>
    %cst_268 = arith.constant 2.000000e+00 : f32
    %412 = vector.broadcast %cst_268 : f32 to vector<16x8xf32>
    %413 = arith.addf %411, %412 : vector<16x8xf32>
    %414 = arith.mulf %411, %413 : vector<16x8xf32>
    %415 = arith.mulf %408, %414 : vector<16x8xf32>
    %cst_269 = arith.constant 2.000000e+00 : f32
    %416 = vector.broadcast %cst_269 : f32 to vector<16x8xf32>
    %417 = arith.addf %414, %416 : vector<16x8xf32>
    %418 = tpu.reciprocal %417 {approx = true} : vector<16x8xf32> -> vector<16x8xf32>
    %419 = arith.mulf %415, %418 : vector<16x8xf32>
    %cst_270 = arith.constant 2.000000e+01 : f32
    %420 = vector.broadcast %cst_270 : f32 to vector<16x8xf32>
    %421 = arith.cmpf ogt, %408, %420 : vector<16x8xf32>
    %422 = arith.select %421, %408, %419 : vector<16x8xi1>, vector<16x8xf32>
    %423 = arith.truncf %422 : vector<16x8xf32> to vector<16x8xbf16>
    %cst_271 = arith.constant dense<0.000000e+00> : vector<16x2xf32>
    %424 = tpu.matmul %423, %228, %cst_271 {dimension_numbers = #tpu.dot_dimension_numbers<[1], [0], [0], [1], [0, 0, 1, 1], [], []>} : vector<16x8xbf16>, vector<8x2xbf16>, vector<16x2xf32> -> vector<16x2xf32>
    %425 = vector.broadcast %229 : vector<1x2xf32> to vector<16x2xf32>
    %426 = arith.addf %424, %425 : vector<16x2xf32>
    %c1_272 = arith.constant 1 : index
    %c0_273 = arith.constant 0 : index
    %c0_274 = arith.constant 0 : index
    %427 = vector.load %arg3[%c1_272, %c0_273, %c0_274] : memref<2x16x2xf32, #tpu.memory_space<vmem>>, vector<1x16x2xf32>
    %428 = vector.shape_cast %427 : vector<1x16x2xf32> to vector<16x2xf32>
    %429 = vector.shape_cast %426 : vector<16x2xf32> to vector<1x16x2xf32>
    tpu.vector_store %arg3[%c1_272, %c0_273, %c0_274], %429 {strides = array<i32>} : memref<2x16x2xf32, #tpu.memory_space<vmem>>, vector<1x16x2xf32>,
    return
  }
  func.func @transform_0(%arg0: i32) -> (i32, i32, i32) {
    %c0_i32 = arith.constant 0 : i32
    %c0_i32_0 = arith.constant 0 : i32
    %c0_i32_1 = arith.constant 0 : i32
    return %arg0, %c0_i32, %c0_i32_0 : i32, i32, i32
  }
  func.func @transform_1(%arg0: i32) -> (i32, i32) {
    %c0_i32 = arith.constant 0 : i32
    %c0_i32_0 = arith.constant 0 : i32
    %c0_i32_1 = arith.constant 0 : i32
    return %c0_i32, %c0_i32_0 : i32, i32
  }
  func.func @transform_2(%arg0: i32) -> (i32, i32, i32) {
    %c0_i32 = arith.constant 0 : i32
    %c0_i32_0 = arith.constant 0 : i32
    %c0_i32_1 = arith.constant 0 : i32
    return %arg0, %c0_i32, %c0_i32_0 : i32, i32, i32
  }
}

</mosaic_0001>

<llo_original>
// kernel: _lambda_.1
$region0: #{_lambda_.1}
  #allocation0 [shape = 'u32[]', space=smem, size = 0x4, offset = 0x4, fixed_abs, tag = 'smem constant byte address 0x4 - core index']
  #allocation1 [shape = 'u32[72,128]{1,0:T(1,128)}', space=vmem, size = 0x9000, scoped, tag = 'internal scratch']
  #allocation2 [shape = 'f32[152,16]{1,0:T(8,128)}', space=vmem, size = 0x13000, scoped, tag = 'scratch operand']
  %s0 = inlined_call_operand.vmem [shape: f32[2,64,2], index: 0, kind: input, shape index: {}]
  %s1 = inlined_call_operand.hbm [shape: f32[424,128], index: 1, kind: input, shape index: {}]
  %s2 = inlined_call_operand.vmem [shape: f32[2,16,2], index: 2, kind: output, shape index: {}]
  %s3 = sld [smem:[#allocation0]]
  $region22: #{_lambda_.1} parent=0
    _
  %s5 = ssub.s32 1, %s3
  %s6 = scalar_select 0, %s5, %s3
  $region1: #{_lambda_.1} parent=0
    #allocation3 [shape = 'u8[217088]{0}', space=vmem, size = 0x35000, scoped, tag = 'input window, operand 1, single buffered']
    #allocation4 [shape = 's32[1]{0}', space=sflag, size = 0x4, scoped, tag = 'scoped memory for _lambda_.1']
    %7 = vsyncpa [#allocation4], 0
    // Predicated region
    $region2: #{_lambda_.1} parent=1 // pred_check
      _
    $region3: #{_lambda_.1} parent=1 // pred_check_branch
      %9 = sbr.rel (0) target = $region5
    $region4: #{_lambda_.1} parent=1 // pred_region
      _
    $region5: #{_lambda_.1} parent=1 // pred_fallthru
      _
    // Predicated region
    $region6: #{_lambda_.1} parent=1 // pred_check
      _
    $region7: #{_lambda_.1} parent=1 // pred_check_branch
      %11 = sbr.rel (0) target = $region9
    $region8: #{_lambda_.1} parent=1 // pred_region
      %13 = vsyncadd [#allocation4], 0
      %s14 = sshll.u32 %s1, 4
      %s15 = int_to_ptr.hbm [resolvable:$true] %s14
      %s16 = sshll.u32 [#allocation3], 4
      %s17 = int_to_ptr.vmem [resolvable:$true] %s16
      %22 = dma.hbm_to_vmem [thread:$0]  %s15, 6784, %s17, [#allocation4], 128, 128, 8
    $region9: #{_lambda_.1} parent=1 // pred_fallthru
      _
    // Predicated region
    $region10: #{_lambda_.1} parent=1 // pred_check
      _
    $region11: #{_lambda_.1} parent=1 // pred_check_branch
      %24 = sbr.rel (0) target = $region13
    $region12: #{_lambda_.1} parent=1 // pred_region
      %26 = dma.done [#allocation4], 6784
    $region13: #{_lambda_.1} parent=1 // pred_fallthru
      _
    %v28 = vld [vmem:[%s0] sm:$0xff]
    %v29 = vld [vmem:[%s0 + $0x8] sm:$0xff]
    %v30 = vld [vmem:[%s0 + $0x10] sm:$0xff]
    %v31 = vld [vmem:[%s0 + $0x18] sm:$0xff]
    %v32 = vld [vmem:[%s0 + $0x20] sm:$0xff]
    %v33 = vld [vmem:[%s0 + $0x28] sm:$0xff]
    %v34 = vld [vmem:[%s0 + $0x30] sm:$0xff]
    %v35 = vld [vmem:[%s0 + $0x38] sm:$0xff]
    %vm36 = vcmask 15360
    %37 = vst.msk [vmem:[#allocation2 + $0x4] sm:$0xff] %vm36, %v28
    %38 = vst.msk [vmem:[#allocation2 + $0xc] sm:$0xff] %vm36, %v29
    %39 = vst.msk [vmem:[#allocation2 + $0x14] sm:$0xff] %vm36, %v30
    %40 = vst.msk [vmem:[#allocation2 + $0x1c] sm:$0xff] %vm36, %v31
    %41 = vst.msk [vmem:[#allocation2 + $0x24] sm:$0xff] %vm36, %v32
    %42 = vst.msk [vmem:[#allocation2 + $0x2c] sm:$0xff] %vm36, %v33
    %43 = vst.msk [vmem:[#allocation2 + $0x34] sm:$0xff] %vm36, %v34
    %44 = vst.msk [vmem:[#allocation2 + $0x3c] sm:$0xff] %vm36, %v35
    %s45 = scalar_lea.vmem %s0, 64
    %v46 = vld [vmem:[%s45] sm:$0xff]
    %v47 = vld [vmem:[%s45 + $0x8] sm:$0xff]
    %v48 = vld [vmem:[%s45 + $0x10] sm:$0xff]
    %v49 = vld [vmem:[%s45 + $0x18] sm:$0xff]
    %v50 = vld [vmem:[%s45 + $0x20] sm:$0xff]
    %v51 = vld [vmem:[%s45 + $0x28] sm:$0xff]
    %v52 = vld [vmem:[%s45 + $0x30] sm:$0xff]
    %v53 = vld [vmem:[%s45 + $0x38] sm:$0xff]
    %54 = vst.msk [vmem:[#allocation2 + $0x4c] sm:$0xff] %vm36, %v46
    %55 = vst.msk [vmem:[#allocation2 + $0x54] sm:$0xff] %vm36, %v47
    %56 = vst.msk [vmem:[#allocation2 + $0x5c] sm:$0xff] %vm36, %v48
    %57 = vst.msk [vmem:[#allocation2 + $0x64] sm:$0xff] %vm36, %v49
    %58 = vst.msk [vmem:[#allocation2 + $0x6c] sm:$0xff] %vm36, %v50
    %59 = vst.msk [vmem:[#allocation2 + $0x74] sm:$0xff] %vm36, %v51
    %60 = vst.msk [vmem:[#allocation2 + $0x7c] sm:$0xff] %vm36, %v52
    %61 = vst.msk [vmem:[#allocation2 + $0x84] sm:$0xff] %vm36, %v53
    %vm62 = vcmask 11264
    %63 = vst.msk [vmem:[#allocation2] sm:$0xf] %vm62, 0.0
    %64 = vst.msk [vmem:[#allocation2 + $0x44] sm:$0xff] %vm36, 0.0
    %65 = vst.msk [vmem:[#allocation2 + $0x8c] sm:$0xff] %vm36, 0.0
    %v66 = vld [vmem:[#allocation2 + $0x3] sm:$0xff]
    %v67 = vld [vmem:[#allocation2 + $0xb] sm:$0xff]
    %v68 = vld [vmem:[#allocation2 + $0x13] sm:$0xff]
    %v69 = vld [vmem:[#allocation2 + $0x1b] sm:$0xff]
    %v70 = vld [vmem:[#allocation2 + $0x23] sm:$0xff]
    %v71 = vld [vmem:[#allocation2 + $0x2b] sm:$0xff]
    %v72 = vld [vmem:[#allocation2 + $0x33] sm:$0xff]
    %v73 = vld [vmem:[#allocation2 + $0x3b] sm:$0xff]
    %v74 = vld [vmem:[#allocation2 + $0x43] sm:$0xff]
    %v75 = vld [vmem:[#allocation2 + $0x4b] sm:$0xff]
    %v76 = vld [vmem:[#allocation2 + $0x53] sm:$0xff]
    %v77 = vld [vmem:[#allocation2 + $0x5b] sm:$0xff]
    %v78 = vld [vmem:[#allocation2 + $0x63] sm:$0xff]
    %v79 = vld [vmem:[#allocation2 + $0x6b] sm:$0xff]
    %v80 = vld [vmem:[#allocation2 + $0x73] sm:$0xff]
    %v81 = vld [vmem:[#allocation2 + $0x7b] sm:$0xff]
    %v82 = vld [vmem:[#allocation2 + $0x83] sm:$0xff]
    %v83 = vld [vmem:[#allocation2 + $0x8b] sm:$0xff]
    %v84 = vpack.c.bf16 %v67, %v66
    %v85 = vpack.c.bf16 %v69, %v68
    %v86 = vpack.c.bf16 %v71, %v70
    %v87 = vpack.c.bf16 %v73, %v72
    %v88 = vpack.c.bf16 %v75, %v74
    %v89 = vpack.c.bf16 %v77, %v76
    %v90 = vpack.c.bf16 %v79, %v78
    %v91 = vpack.c.bf16 %v81, %v80
    %v92 = vpack.c.bf16 %v83, %v82
    %v93 = vld [vmem:[#allocation3] sm:$0x3]
    %v94 = vpack.c.bf16 %v93, %v93
    %v95 = vld [vmem:[#allocation2 + $0x4] sm:$0xff]
    %v96 = vld [vmem:[#allocation2 + $0xc] sm:$0xff]
    %v97 = vld [vmem:[#allocation2 + $0x14] sm:$0xff]
    %v98 = vld [vmem:[#allocation2 + $0x1c] sm:$0xff]
    %v99 = vld [vmem:[#allocation2 + $0x24] sm:$0xff]
    %v100 = vld [vmem:[#allocation2 + $0x2c] sm:$0xff]
    %v101 = vld [vmem:[#allocation2 + $0x34] sm:$0xff]
    %v102 = vld [vmem:[#allocation2 + $0x3c] sm:$0xff]
    %v103 = vld [vmem:[#allocation2 + $0x44] sm:$0xff]
    %v104 = vld [vmem:[#allocation2 + $0x4c] sm:$0xff]
    %v105 = vld [vmem:[#allocation2 + $0x54] sm:$0xff]
    %v106 = vld [vmem:[#allocation2 + $0x5c] sm:$0xff]
    %v107 = vld [vmem:[#allocation2 + $0x64] sm:$0xff]
    %v108 = vld [vmem:[#allocation2 + $0x6c] sm:$0xff]
    %v109 = vld [vmem:[#allocation2 + $0x74] sm:$0xff]
    %v110 = vld [vmem:[#allocation2 + $0x7c] sm:$0xff]
    %v111 = vld [vmem:[#allocation2 + $0x84] sm:$0xff]
    %v112 = vld [vmem:[#allocation2 + $0x8c] sm:$0xff]
    %v113 = vpack.c.bf16 %v96, %v95
    %v114 = vpack.c.bf16 %v98, %v97
    %v115 = vpack.c.bf16 %v100, %v99
    %v116 = vpack.c.bf16 %v102, %v101
    %v117 = vpack.c.bf16 %v104, %v103
    %v118 = vpack.c.bf16 %v106, %v105
    %v119 = vpack.c.bf16 %v108, %v107
    %v120 = vpack.c.bf16 %v110, %v109
    %v121 = vpack.c.bf16 %v112, %v111
    %v122 = vld [vmem:[#allocation3 + $0x2] sm:$0x3]
    %v123 = vpack.c.bf16 %v122, %v122
    %v125 = vsel %vm36, %v113, 0
    %v128 = vsel %vm36, %v114, 0
    %v131 = vsel %vm36, %v115, 0
    %v134 = vsel %vm36, %v116, 0
    %v137 = vsel %vm36, %v117, 0
    %v140 = vsel %vm36, %v118, 0
    %v143 = vsel %vm36, %v119, 0
    %v146 = vsel %vm36, %v120, 0
    %v149 = vsel %vm36, %v121, 0
    %vm151 = vcmask 1040384
    %v153 = vsel %vm151, %v123, 0
    %155 = vmatpush.bf16.msra.mxu0 0
    %156 = vmatpush.bf16.msra.mxu0 0
    %157 = vmatpush.bf16.msra.mxu0 0
    %158 = vmatpush.bf16.msra.mxu0 0
    %159 = vmatpush.bf16.msra.mxu0 0
    %160 = vmatpush.bf16.msra.mxu0 0
    %161 = vmatpush.bf16.msra.mxu0 0
    %162 = vmatpush.bf16.msra.mxu0 %v153
    %163 = vmatmul.bf16.gmra.mxu0 %v125
    %v164 = vpop.f32.mrf.mxu0
    %v165 = vadd.f32 0.0, %v164
    %v166 = vpop.f32.mrf.mxu0
    %v167 = vadd.f32 0.0, %v166
    %168 = vmatmul.bf16.gmra.mxu0 %v128
    %v169 = vpop.f32.mrf.mxu0
    %v170 = vadd.f32 0.0, %v169
    %v171 = vpop.f32.mrf.mxu0
    %v172 = vadd.f32 0.0, %v171
    %173 = vmatmul.bf16.gmra.mxu0 %v131
    %v174 = vpop.f32.mrf.mxu0
    %v175 = vadd.f32 0.0, %v174
    %v176 = vpop.f32.mrf.mxu0
    %v177 = vadd.f32 0.0, %v176
    %178 = vmatmul.bf16.gmra.mxu0 %v134
    %v179 = vpop.f32.mrf.mxu0
    %v180 = vadd.f32 0.0, %v179
    %v181 = vpop.f32.mrf.mxu0
    %v182 = vadd.f32 0.0, %v181
    %183 = vmatmul.bf16.gmra.mxu0 %v137
    %v184 = vpop.f32.mrf.mxu0
    %v185 = vadd.f32 0.0, %v184
    %v186 = vpop.f32.mrf.mxu0
    %v187 = vadd.f32 0.0, %v186
    %188 = vmatmul.bf16.gmra.mxu0 %v140
    %v189 = vpop.f32.mrf.mxu0
    %v190 = vadd.f32 0.0, %v189
    %v191 = vpop.f32.mrf.mxu0
    %v192 = vadd.f32 0.0, %v191
    %193 = vmatmul.bf16.gmra.mxu0 %v143
    %v194 = vpop.f32.mrf.mxu0
    %v195 = vadd.f32 0.0, %v194
    %v196 = vpop.f32.mrf.mxu0
    %v197 = vadd.f32 0.0, %v196
    %198 = vmatmul.bf16.gmra.mxu0 %v146
    %v199 = vpop.f32.mrf.mxu0
    %v200 = vadd.f32 0.0, %v199
    %v201 = vpop.f32.mrf.mxu0
    %v202 = vadd.f32 0.0, %v201
    %203 = vmatmul.bf16.gmra.mxu0 %v149
    %v204 = vpop.f32.mrf.mxu0
    %v205 = vadd.f32 0.0, %v204
    %v206 = vpop.f32.mrf.mxu0
    %v207 = vadd.f32 0.0, %v206
    %208 = vdwg.mxu0
    %v210 = vsel %vm36, %v84, 0
    %v213 = vsel %vm36, %v85, 0
    %v216 = vsel %vm36, %v86, 0
    %v219 = vsel %vm36, %v87, 0
    %v222 = vsel %vm36, %v88, 0
    %v225 = vsel %vm36, %v89, 0
    %v228 = vsel %vm36, %v90, 0
    %v231 = vsel %vm36, %v91, 0
    %v234 = vsel %vm36, %v92, 0
    %v237 = vsel %vm151, %v94, 0
    %239 = vmatpush.bf16.msra.mxu0 0
    %240 = vmatpush.bf16.msra.mxu0 0
    %241 = vmatpush.bf16.msra.mxu0 0
    %242 = vmatpush.bf16.msra.mxu0 0
    %243 = vmatpush.bf16.msra.mxu0 0
    %244 = vmatpush.bf16.msra.mxu0 0
    %245 = vmatpush.bf16.msra.mxu0 0
    %246 = vmatpush.bf16.msra.mxu0 %v237
    %247 = vmatmul.bf16.gmra.mxu0 %v210
    %v248 = vpop.f32.mrf.mxu0
    %v249 = vadd.f32 %v165, %v248
    %v250 = vpop.f32.mrf.mxu0
    %v251 = vadd.f32 %v167, %v250
    %252 = vmatmul.bf16.gmra.mxu0 %v213
    %v253 = vpop.f32.mrf.mxu0
    %v254 = vadd.f32 %v170, %v253
    %v255 = vpop.f32.mrf.mxu0
    %v256 = vadd.f32 %v172, %v255
    %257 = vmatmul.bf16.gmra.mxu0 %v216
    %v258 = vpop.f32.mrf.mxu0
    %v259 = vadd.f32 %v175, %v258
    %v260 = vpop.f32.mrf.mxu0
    %v261 = vadd.f32 %v177, %v260
    %262 = vmatmul.bf16.gmra.mxu0 %v219
    %v263 = vpop.f32.mrf.mxu0
    %v264 = vadd.f32 %v180, %v263
    %v265 = vpop.f32.mrf.mxu0
    %v266 = vadd.f32 %v182, %v265
    %267 = vmatmul.bf16.gmra.mxu0 %v222
    %v268 = vpop.f32.mrf.mxu0
    %v269 = vadd.f32 %v185, %v268
    %v270 = vpop.f32.mrf.mxu0
    %v271 = vadd.f32 %v187, %v270
    %272 = vmatmul.bf16.gmra.mxu0 %v225
    %v273 = vpop.f32.mrf.mxu0
    %v274 = vadd.f32 %v190, %v273
    %v275 = vpop.f32.mrf.mxu0
    %v276 = vadd.f32 %v192, %v275
    %277 = vmatmul.bf16.gmra.mxu0 %v228
    %v278 = vpop.f32.mrf.mxu0
    %v279 = vadd.f32 %v195, %v278
    %v280 = vpop.f32.mrf.mxu0
    %v281 = vadd.f32 %v197, %v280
    %282 = vmatmul.bf16.gmra.mxu0 %v231
    %v283 = vpop.f32.mrf.mxu0
    %v284 = vadd.f32 %v200, %v283
    %v285 = vpop.f32.mrf.mxu0
    %v286 = vadd.f32 %v202, %v285
    %287 = vmatmul.bf16.gmra.mxu0 %v234
    %v288 = vpop.f32.mrf.mxu0
    %v289 = vadd.f32 %v205, %v288
    %v290 = vpop.f32.mrf.mxu0
    %v291 = vadd.f32 %v207, %v290
    %292 = vdwg.mxu0
    %v293 = vld [vmem:[#allocation2 + $0x5] sm:$0xff]
    %v294 = vld [vmem:[#allocation2 + $0xd] sm:$0xff]
    %v295 = vld [vmem:[#allocation2 + $0x15] sm:$0xff]
    %v296 = vld [vmem:[#allocation2 + $0x1d] sm:$0xff]
    %v297 = vld [vmem:[#allocation2 + $0x25] sm:$0xff]
    %v298 = vld [vmem:[#allocation2 + $0x2d] sm:$0xff]
    %v299 = vld [vmem:[#allocation2 + $0x35] sm:$0xff]
    %v300 = vld [vmem:[#allocation2 + $0x3d] sm:$0xff]
    %v301 = vld [vmem:[#allocation2 + $0x45] sm:$0xff]
    %v302 = vld [vmem:[#allocation2 + $0x4d] sm:$0xff]
    %v303 = vld [vmem:[#allocation2 + $0x55] sm:$0xff]
    %v304 = vld [vmem:[#allocation2 + $0x5d] sm:$0xff]
    %v305 = vld [vmem:[#allocation2 + $0x65] sm:$0xff]
    %v306 = vld [vmem:[#allocation2 + $0x6d] sm:$0xff]
    %v307 = vld [vmem:[#allocation2 + $0x75] sm:$0xff]
    %v308 = vld [vmem:[#allocation2 + $0x7d] sm:$0xff]
    %v309 = vld [vmem:[#allocation2 + $0x85] sm:$0xff]
    %v310 = vld [vmem:[#allocation2 + $0x8d] sm:$0xff]
    %v311 = vpack.c.bf16 %v294, %v293
    %v312 = vpack.c.bf16 %v296, %v295
    %v313 = vpack.c.bf16 %v298, %v297
    %v314 = vpack.c.bf16 %v300, %v299
    %v315 = vpack.c.bf16 %v302, %v301
    %v316 = vpack.c.bf16 %v304, %v303
    %v317 = vpack.c.bf16 %v306, %v305
    %v318 = vpack.c.bf16 %v308, %v307
    %v319 = vpack.c.bf16 %v310, %v309
    %v320 = vld [vmem:[#allocation3 + $0x4] sm:$0x3]
    %v321 = vpack.c.bf16 %v320, %v320
    %v323 = vsel %vm36, %v311, 0
    %v326 = vsel %vm36, %v312, 0
    %v329 = vsel %vm36, %v313, 0
    %v332 = vsel %vm36, %v314, 0
    %v335 = vsel %vm36, %v315, 0
    %v338 = vsel %vm36, %v316, 0
    %v341 = vsel %vm36, %v317, 0
    %v344 = vsel %vm36, %v318, 0
    %v347 = vsel %vm36, %v319, 0
    %v350 = vsel %vm151, %v321, 0
    %352 = vmatpush.bf16.msra.mxu0 0
    %353 = vmatpush.bf16.msra.mxu0 0
    %354 = vmatpush.bf16.msra.mxu0 0
    %355 = vmatpush.bf16.msra.mxu0 0
    %356 = vmatpush.bf16.msra.mxu0 0
    %357 = vmatpush.bf16.msra.mxu0 0
    %358 = vmatpush.bf16.msra.mxu0 0
    %359 = vmatpush.bf16.msra.mxu0 %v350
    %360 = vmatmul.bf16.gmra.mxu0 %v323
    %v361 = vpop.f32.mrf.mxu0
    %v362 = vadd.f32 0.0, %v361
    %v363 = vpop.f32.mrf.mxu0
    %v364 = vadd.f32 0.0, %v363
    %365 = vmatmul.bf16.gmra.mxu0 %v326
    %v366 = vpop.f32.mrf.mxu0
    %v367 = vadd.f32 0.0, %v366
    %v368 = vpop.f32.mrf.mxu0
    %v369 = vadd.f32 0.0, %v368
    %370 = vmatmul.bf16.gmra.mxu0 %v329
    %v371 = vpop.f32.mrf.mxu0
    %v372 = vadd.f32 0.0, %v371
    %v373 = vpop.f32.mrf.mxu0
    %v374 = vadd.f32 0.0, %v373
    %375 = vmatmul.bf16.gmra.mxu0 %v332
    %v376 = vpop.f32.mrf.mxu0
    %v377 = vadd.f32 0.0, %v376
    %v378 = vpop.f32.mrf.mxu0
    %v379 = vadd.f32 0.0, %v378
    %380 = vmatmul.bf16.gmra.mxu0 %v335
    %v381 = vpop.f32.mrf.mxu0
    %v382 = vadd.f32 0.0, %v381
    %v383 = vpop.f32.mrf.mxu0
    %v384 = vadd.f32 0.0, %v383
    %385 = vmatmul.bf16.gmra.mxu0 %v338
    %v386 = vpop.f32.mrf.mxu0
    %v387 = vadd.f32 0.0, %v386
    %v388 = vpop.f32.mrf.mxu0
    %v389 = vadd.f32 0.0, %v388
    %390 = vmatmul.bf16.gmra.mxu0 %v341
    %v391 = vpop.f32.mrf.mxu0
    %v392 = vadd.f32 0.0, %v391
    %v393 = vpop.f32.mrf.mxu0
    %v394 = vadd.f32 0.0, %v393
    %395 = vmatmul.bf16.gmra.mxu0 %v344
    %v396 = vpop.f32.mrf.mxu0
    %v397 = vadd.f32 0.0, %v396
    %v398 = vpop.f32.mrf.mxu0
    %v399 = vadd.f32 0.0, %v398
    %400 = vmatmul.bf16.gmra.mxu0 %v347
    %v401 = vpop.f32.mrf.mxu0
    %v402 = vadd.f32 0.0, %v401
    %v403 = vpop.f32.mrf.mxu0
    %v404 = vadd.f32 0.0, %v403
    %405 = vdwg.mxu0
    %v406 = vadd.f32 %v249, %v362
    %v407 = vadd.f32 %v251, %v364
    %v408 = vadd.f32 %v254, %v367
    %v409 = vadd.f32 %v256, %v369
    %v410 = vadd.f32 %v259, %v372
    %v411 = vadd.f32 %v261, %v374
    %v412 = vadd.f32 %v264, %v377
    %v413 = vadd.f32 %v266, %v379
    %v414 = vadd.f32 %v269, %v382
    %v415 = vadd.f32 %v271, %v384
    %v416 = vadd.f32 %v274, %v387
    %v417 = vadd.f32 %v276, %v389
    %v418 = vadd.f32 %v279, %v392
    %v419 = vadd.f32 %v281, %v394
    %v420 = vadd.f32 %v284, %v397
    %v421 = vadd.f32 %v286, %v399
    %v422 = vadd.f32 %v289, %v402
    %v423 = vadd.f32 %v291, %v404
    %v424 = vld [vmem:[#allocation3 + $0x8] sm:$0x1]
    %v425 = vperm.slane %v424, 0
    %v426 = vadd.f32 %v406, %v425
    %v427 = vadd.f32 %v407, %v425
    %v428 = vadd.f32 %v408, %v425
    %v429 = vadd.f32 %v409, %v425
    %v430 = vadd.f32 %v410, %v425
    %v431 = vadd.f32 %v411, %v425
    %v432 = vadd.f32 %v412, %v425
    %v433 = vadd.f32 %v413, %v425
    %v434 = vadd.f32 %v414, %v425
    %v435 = vadd.f32 %v415, %v425
    %v436 = vadd.f32 %v416, %v425
    %v437 = vadd.f32 %v417, %v425
    %v438 = vadd.f32 %v418, %v425
    %v439 = vadd.f32 %v419, %v425
    %v440 = vadd.f32 %v420, %v425
    %v441 = vadd.f32 %v421, %v425
    %v442 = vadd.f32 %v422, %v425
    %v443 = vadd.f32 %v423, %v425
    %v444 = vmax.f32 %v426, 0.0
    %v445 = vmax.f32 %v427, 0.0
    %v446 = vmax.f32 %v428, 0.0
    %v447 = vmax.f32 %v429, 0.0
    %v448 = vmax.f32 %v430, 0.0
    %v449 = vmax.f32 %v431, 0.0
    %v450 = vmax.f32 %v432, 0.0
    %v451 = vmax.f32 %v433, 0.0
    %v452 = vmax.f32 %v434, 0.0
    %v453 = vmax.f32 %v435, 0.0
    %v454 = vmax.f32 %v436, 0.0
    %v455 = vmax.f32 %v437, 0.0
    %v456 = vmax.f32 %v438, 0.0
    %v457 = vmax.f32 %v439, 0.0
    %v458 = vmax.f32 %v440, 0.0
    %v459 = vmax.f32 %v441, 0.0
    %v460 = vmax.f32 %v442, 0.0
    %v461 = vmax.f32 %v443, 0.0
    %v462 = vld [vmem:[#allocation3 + $0x10] sm:$0x1]
    %v463 = vperm.slane %v462, 0
    %v464 = vmul.f32 %v444, %v463
    %v465 = vmul.f32 %v445, %v463
    %v466 = vmul.f32 %v446, %v463
    %v467 = vmul.f32 %v447, %v463
    %v468 = vmul.f32 %v448, %v463
    %v469 = vmul.f32 %v449, %v463
    %v470 = vmul.f32 %v450, %v463
    %v471 = vmul.f32 %v451, %v463
    %v472 = vmul.f32 %v452, %v463
    %v473 = vmul.f32 %v453, %v463
    %v474 = vmul.f32 %v454, %v463
    %v475 = vmul.f32 %v455, %v463
    %v476 = vmul.f32 %v456, %v463
    %v477 = vmul.f32 %v457, %v463
    %v478 = vmul.f32 %v458, %v463
    %v479 = vmul.f32 %v459, %v463
    %v480 = vmul.f32 %v460, %v463
    %v481 = vmul.f32 %v461, %v463
    %v482 = vld [vmem:[#allocation3 + $0x18] sm:$0x1]
    %v483 = vperm.slane %v482, 0
    %v484 = vadd.f32 %v464, %v483
    %v485 = vadd.f32 %v465, %v483
    %v486 = vadd.f32 %v466, %v483
    %v487 = vadd.f32 %v467, %v483
    %v488 = vadd.f32 %v468, %v483
    %v489 = vadd.f32 %v469, %v483
    %v490 = vadd.f32 %v470, %v483
    %v491 = vadd.f32 %v471, %v483
    %v492 = vadd.f32 %v472, %v483
    %v493 = vadd.f32 %v473, %v483
    %v494 = vadd.f32 %v474, %v483
    %v495 = vadd.f32 %v475, %v483
    %v496 = vadd.f32 %v476, %v483
    %v497 = vadd.f32 %v477, %v483
    %v498 = vadd.f32 %v478, %v483
    %v499 = vadd.f32 %v479, %v483
    %v500 = vadd.f32 %v480, %v483
    %v501 = vadd.f32 %v481, %v483
    %vm502 = vcmask 64512
    %503 = vst.msk [vmem:[#allocation2] sm:$0xff] %vm502, %v484
    %504 = vst.msk [vmem:[#allocation2 + $0x8] sm:$0xff] %vm502, %v485
    %505 = vst.msk [vmem:[#allocation2 + $0x10] sm:$0xff] %vm502, %v486
    %506 = vst.msk [vmem:[#allocation2 + $0x18] sm:$0xff] %vm502, %v487
    %507 = vst.msk [vmem:[#allocation2 + $0x20] sm:$0xff] %vm502, %v488
    %508 = vst.msk [vmem:[#allocation2 + $0x28] sm:$0xff] %vm502, %v489
    %509 = vst.msk [vmem:[#allocation2 + $0x30] sm:$0xff] %vm502, %v490
    %510 = vst.msk [vmem:[#allocation2 + $0x38] sm:$0xff] %vm502, %v491
    %511 = vst.msk [vmem:[#allocation2 + $0x40] sm:$0xff] %vm502, %v492
    %512 = vst.msk [vmem:[#allocation2 + $0x48] sm:$0xff] %vm502, %v493
    %513 = vst.msk [vmem:[#allocation2 + $0x50] sm:$0xff] %vm502, %v494
    %514 = vst.msk [vmem:[#allocation2 + $0x58] sm:$0xff] %vm502, %v495
    %515 = vst.msk [vmem:[#allocation2 + $0x60] sm:$0xff] %vm502, %v496
    %516 = vst.msk [vmem:[#allocation2 + $0x68] sm:$0xff] %vm502, %v497
    %517 = vst.msk [vmem:[#allocation2 + $0x70] sm:$0xff] %vm502, %v498
    %518 = vst.msk [vmem:[#allocation2 + $0x78] sm:$0xff] %vm502, %v499
    %519 = vst.msk [vmem:[#allocation2 + $0x80] sm:$0xff] %vm502, %v500
    %520 = vst.msk [vmem:[#allocation2 + $0x88] sm:$0xff] %vm502, %v501
    %v521 = vld [vmem:[#allocation2] ss:$2 sm:$0xff]
    %s522 = scalar_lea.vmem [#allocation2], 16
    %v523 = vld [vmem:[%s522] ss:$2 sm:$0xff]
    %s524 = scalar_lea.vmem [#allocation2], 32
    %v525 = vld [vmem:[%s524] ss:$2 sm:$0xff]
    %s526 = scalar_lea.vmem [#allocation2], 48
    %v527 = vld [vmem:[%s526] ss:$2 sm:$0xff]
    %s528 = scalar_lea.vmem [#allocation2], 64
    %v529 = vld [vmem:[%s528] ss:$2 sm:$0xff]
    %s530 = scalar_lea.vmem [#allocation2], 80
    %v531 = vld [vmem:[%s530] ss:$2 sm:$0xff]
    %s532 = scalar_lea.vmem [#allocation2], 96
    %v533 = vld [vmem:[%s532] ss:$2 sm:$0xff]
    %s534 = scalar_lea.vmem [#allocation2], 112
    %v535 = vld [vmem:[%s534] ss:$2 sm:$0xff]
    %s536 = scalar_lea.vmem [#allocation2], 128
    %v537 = vld [vmem:[%s536] ss:$2 sm:$0xff]
    %s538 = scalar_lea.vmem [#allocation2], 1
    %v539 = vld [vmem:[%s538] ss:$2 sm:$0xff]
    %s540 = scalar_lea.vmem [#allocation2], 17
    %v541 = vld [vmem:[%s540] ss:$2 sm:$0xff]
    %s542 = scalar_lea.vmem [#allocation2], 33
    %v543 = vld [vmem:[%s542] ss:$2 sm:$0xff]
    %s544 = scalar_lea.vmem [#allocation2], 49
    %v545 = vld [vmem:[%s544] ss:$2 sm:$0xff]
    %s546 = scalar_lea.vmem [#allocation2], 65
    %v547 = vld [vmem:[%s546] ss:$2 sm:$0xff]
    %s548 = scalar_lea.vmem [#allocation2], 81
    %v549 = vld [vmem:[%s548] ss:$2 sm:$0xff]
    %s550 = scalar_lea.vmem [#allocation2], 97
    %v551 = vld [vmem:[%s550] ss:$2 sm:$0xff]
    %s552 = scalar_lea.vmem [#allocation2], 113
    %v553 = vld [vmem:[%s552] ss:$2 sm:$0xff]
    %s554 = scalar_lea.vmem [#allocation2], 129
    %v555 = vld [vmem:[%s554] ss:$2 sm:$0xff]
    %v556 = vmax.f32 %v521, %v539
    %v557 = vmax.f32 %v523, %v541
    %v558 = vmax.f32 %v525, %v543
    %v559 = vmax.f32 %v527, %v545
    %v560 = vmax.f32 %v529, %v547
    %v561 = vmax.f32 %v531, %v549
    %v562 = vmax.f32 %v533, %v551
    %v563 = vmax.f32 %v535, %v553
    %v564 = vmax.f32 %v537, %v555
    %565 = vst.msk [vmem:[#allocation2 + $0x4] sm:$0xff] %vm502, %v556
    %566 = vst.msk [vmem:[#allocation2 + $0xc] sm:$0xff] %vm502, %v557
    %567 = vst.msk [vmem:[#allocation2 + $0x14] sm:$0xff] %vm502, %v558
    %568 = vst.msk [vmem:[#allocation2 + $0x1c] sm:$0xff] %vm502, %v559
    %569 = vst.msk [vmem:[#allocation2 + $0x24] sm:$0xff] %vm502, %v560
    %570 = vst.msk [vmem:[#allocation2 + $0x2c] sm:$0xff] %vm502, %v561
    %571 = vst.msk [vmem:[#allocation2 + $0x34] sm:$0xff] %vm502, %v562
    %572 = vst.msk [vmem:[#allocation2 + $0x3c] sm:$0xff] %vm502, %v563
    %573 = vst.msk [vmem:[#allocation2 + $0x44] sm:$0xff] %vm502, %v564
    %vm574 = vcmask 60416
    %575 = vst.msk [vmem:[#allocation2] sm:$0xf] %vm574, 0.0
    %576 = vst.msk [vmem:[#allocation2 + $0x24] sm:$0xf] %vm574, 0.0
    %577 = vst.msk [vmem:[#allocation2 + $0x48] sm:$0xf] %vm574, 0.0
    %v578 = vld [vmem:[#allocation2 + $0x3] sm:$0xff]
    %v579 = vld [vmem:[#allocation2 + $0xb] sm:$0xff]
    %v580 = vld [vmem:[#allocation2 + $0x13] sm:$0xff]
    %v581 = vld [vmem:[#allocation2 + $0x1b] sm:$0xff]
    %v582 = vld [vmem:[#allocation2 + $0x23] sm:$0xff]
    %v583 = vld [vmem:[#allocation2 + $0x2b] sm:$0xff]
    %v584 = vld [vmem:[#allocation2 + $0x33] sm:$0xff]
    %v585 = vld [vmem:[#allocation2 + $0x3b] sm:$0xff]
    %v586 = vld [vmem:[#allocation2 + $0x43] sm:$0xff]
    %v587 = vpack.c.bf16 %v579, %v578
    %v588 = vpack.c.bf16 %v581, %v580
    %v589 = vpack.c.bf16 %v583, %v582
    %v590 = vpack.c.bf16 %v585, %v584
    %v591 = vpack.c.bf16 %v586, %v586
    %v592 = vld [vmem:[#allocation3 + $0x20] sm:$0xff]
    %v593 = vpack.c.bf16 %v592, %v592
    %v594 = vld [vmem:[#allocation2 + $0x4] sm:$0xff]
    %v595 = vld [vmem:[#allocation2 + $0xc] sm:$0xff]
    %v596 = vld [vmem:[#allocation2 + $0x14] sm:$0xff]
    %v597 = vld [vmem:[#allocation2 + $0x1c] sm:$0xff]
    %v598 = vld [vmem:[#allocation2 + $0x24] sm:$0xff]
    %v599 = vld [vmem:[#allocation2 + $0x2c] sm:$0xff]
    %v600 = vld [vmem:[#allocation2 + $0x34] sm:$0xff]
    %v601 = vld [vmem:[#allocation2 + $0x3c] sm:$0xff]
    %v602 = vld [vmem:[#allocation2 + $0x44] sm:$0xff]
    %v603 = vpack.c.bf16 %v595, %v594
    %v604 = vpack.c.bf16 %v597, %v596
    %v605 = vpack.c.bf16 %v599, %v598
    %v606 = vpack.c.bf16 %v601, %v600
    %v607 = vpack.c.bf16 %v602, %v602
    %v608 = vld [vmem:[#allocation3 + $0x28] sm:$0xff]
    %v609 = vpack.c.bf16 %v608, %v608
    %v611 = vsel %vm502, %v603, 0
    %v614 = vsel %vm502, %v604, 0
    %v617 = vsel %vm502, %v605, 0
    %v620 = vsel %vm502, %v606, 0
    %v623 = vsel %vm502, %v607, 0
    %vm625 = vcmask 1043456
    %v627 = vsel %vm625, %v609, 0
    %629 = vmatpush.bf16.msra.mxu0 0
    %630 = vmatpush.bf16.msra.mxu0 0
    %631 = vmatpush.bf16.msra.mxu0 0
    %632 = vmatpush.bf16.msra.mxu0 0
    %633 = vmatpush.bf16.msra.mxu0 0
    %634 = vmatpush.bf16.msra.mxu0 0
    %635 = vmatpush.bf16.msra.mxu0 0
    %636 = vmatpush.bf16.msra.mxu0 %v627
    %637 = vmatmul.bf16.gmra.mxu0 %v611
    %v638 = vpop.f32.mrf.mxu0
    %v639 = vadd.f32 0.0, %v638
    %v640 = vpop.f32.mrf.mxu0
    %v641 = vadd.f32 0.0, %v640
    %642 = vmatmul.bf16.gmra.mxu0 %v614
    %v643 = vpop.f32.mrf.mxu0
    %v644 = vadd.f32 0.0, %v643
    %v645 = vpop.f32.mrf.mxu0
    %v646 = vadd.f32 0.0, %v645
    %647 = vmatmul.bf16.gmra.mxu0 %v617
    %v648 = vpop.f32.mrf.mxu0
    %v649 = vadd.f32 0.0, %v648
    %v650 = vpop.f32.mrf.mxu0
    %v651 = vadd.f32 0.0, %v650
    %652 = vmatmul.bf16.gmra.mxu0 %v620
    %v653 = vpop.f32.mrf.mxu0
    %v654 = vadd.f32 0.0, %v653
    %v655 = vpop.f32.mrf.mxu0
    %v656 = vadd.f32 0.0, %v655
    %657 = vmatmul.bf16.gmra.mxu0 %v623
    %v658 = vpop.f32.mrf.mxu0
    %v659 = vadd.f32 0.0, %v658
    %v660 = vpop.f32.mrf.mxu0
    %661 = vdwg.mxu0
    %v663 = vsel %vm502, %v587, 0
    %v666 = vsel %vm502, %v588, 0
    %v669 = vsel %vm502, %v589, 0
    %v672 = vsel %vm502, %v590, 0
    %v675 = vsel %vm502, %v591, 0
    %v678 = vsel %vm625, %v593, 0
    %680 = vmatpush.bf16.msra.mxu0 0
    %681 = vmatpush.bf16.msra.mxu0 0
    %682 = vmatpush.bf16.msra.mxu0 0
    %683 = vmatpush.bf16.msra.mxu0 0
    %684 = vmatpush.bf16.msra.mxu0 0
    %685 = vmatpush.bf16.msra.mxu0 0
    %686 = vmatpush.bf16.msra.mxu0 0
    %687 = vmatpush.bf16.msra.mxu0 %v678
    %688 = vmatmul.bf16.gmra.mxu0 %v663
    %v689 = vpop.f32.mrf.mxu0
    %v690 = vadd.f32 %v639, %v689
    %v691 = vpop.f32.mrf.mxu0
    %v692 = vadd.f32 %v641, %v691
    %693 = vmatmul.bf16.gmra.mxu0 %v666
    %v694 = vpop.f32.mrf.mxu0
    %v695 = vadd.f32 %v644, %v694
    %v696 = vpop.f32.mrf.mxu0
    %v697 = vadd.f32 %v646, %v696
    %698 = vmatmul.bf16.gmra.mxu0 %v669
    %v699 = vpop.f32.mrf.mxu0
    %v700 = vadd.f32 %v649, %v699
    %v701 = vpop.f32.mrf.mxu0
    %v702 = vadd.f32 %v651, %v701
    %703 = vmatmul.bf16.gmra.mxu0 %v672
    %v704 = vpop.f32.mrf.mxu0
    %v705 = vadd.f32 %v654, %v704
    %v706 = vpop.f32.mrf.mxu0
    %v707 = vadd.f32 %v656, %v706
    %708 = vmatmul.bf16.gmra.mxu0 %v675
    %v709 = vpop.f32.mrf.mxu0
    %v710 = vadd.f32 %v659, %v709
    %v711 = vpop.f32.mrf.mxu0
    %712 = vdwg.mxu0
    %v713 = vld [vmem:[#allocation2 + $0x5] sm:$0xff]
    %v714 = vld [vmem:[#allocation2 + $0xd] sm:$0xff]
    %v715 = vld [vmem:[#allocation2 + $0x15] sm:$0xff]
    %v716 = vld [vmem:[#allocation2 + $0x1d] sm:$0xff]
    %v717 = vld [vmem:[#allocation2 + $0x25] sm:$0xff]
    %v718 = vld [vmem:[#allocation2 + $0x2d] sm:$0xff]
    %v719 = vld [vmem:[#allocation2 + $0x35] sm:$0xff]
    %v720 = vld [vmem:[#allocation2 + $0x3d] sm:$0xff]
    %v721 = vld [vmem:[#allocation2 + $0x45] sm:$0xff]
    %v722 = vpack.c.bf16 %v714, %v713
    %v723 = vpack.c.bf16 %v716, %v715
    %v724 = vpack.c.bf16 %v718, %v717
    %v725 = vpack.c.bf16 %v720, %v719
    %v726 = vpack.c.bf16 %v721, %v721
    %v727 = vld [vmem:[#allocation3 + $0x30] sm:$0xff]
    %v728 = vpack.c.bf16 %v727, %v727
    %v730 = vsel %vm502, %v722, 0
    %v733 = vsel %vm502, %v723, 0
    %v736 = vsel %vm502, %v724, 0
    %v739 = vsel %vm502, %v725, 0
    %v742 = vsel %vm502, %v726, 0
    %v745 = vsel %vm625, %v728, 0
    %747 = vmatpush.bf16.msra.mxu0 0
    %748 = vmatpush.bf16.msra.mxu0 0
    %749 = vmatpush.bf16.msra.mxu0 0
    %750 = vmatpush.bf16.msra.mxu0 0
    %751 = vmatpush.bf16.msra.mxu0 0
    %752 = vmatpush.bf16.msra.mxu0 0
    %753 = vmatpush.bf16.msra.mxu0 0
    %754 = vmatpush.bf16.msra.mxu0 %v745
    %755 = vmatmul.bf16.gmra.mxu0 %v730
    %v756 = vpop.f32.mrf.mxu0
    %v757 = vadd.f32 0.0, %v756
    %v758 = vpop.f32.mrf.mxu0
    %v759 = vadd.f32 0.0, %v758
    %760 = vmatmul.bf16.gmra.mxu0 %v733
    %v761 = vpop.f32.mrf.mxu0
    %v762 = vadd.f32 0.0, %v761
    %v763 = vpop.f32.mrf.mxu0
    %v764 = vadd.f32 0.0, %v763
    %765 = vmatmul.bf16.gmra.mxu0 %v736
    %v766 = vpop.f32.mrf.mxu0
    %v767 = vadd.f32 0.0, %v766
    %v768 = vpop.f32.mrf.mxu0
    %v769 = vadd.f32 0.0, %v768
    %770 = vmatmul.bf16.gmra.mxu0 %v739
    %v771 = vpop.f32.mrf.mxu0
    %v772 = vadd.f32 0.0, %v771
    %v773 = vpop.f32.mrf.mxu0
    %v774 = vadd.f32 0.0, %v773
    %775 = vmatmul.bf16.gmra.mxu0 %v742
    %v776 = vpop.f32.mrf.mxu0
    %v777 = vadd.f32 0.0, %v776
    %v778 = vpop.f32.mrf.mxu0
    %779 = vdwg.mxu0
    %v780 = vadd.f32 %v690, %v757
    %v781 = vadd.f32 %v692, %v759
    %v782 = vadd.f32 %v695, %v762
    %v783 = vadd.f32 %v697, %v764
    %v784 = vadd.f32 %v700, %v767
    %v785 = vadd.f32 %v702, %v769
    %v786 = vadd.f32 %v705, %v772
    %v787 = vadd.f32 %v707, %v774
    %v788 = vadd.f32 %v710, %v777
    %v789 = vld [vmem:[#allocation3 + $0x38] sm:$0x1]
    %v790 = vperm.slane %v789, 0
    %v791 = vadd.f32 %v780, %v790
    %v792 = vadd.f32 %v781, %v790
    %v793 = vadd.f32 %v782, %v790
    %v794 = vadd.f32 %v783, %v790
    %v795 = vadd.f32 %v784, %v790
    %v796 = vadd.f32 %v785, %v790
    %v797 = vadd.f32 %v786, %v790
    %v798 = vadd.f32 %v787, %v790
    %v799 = vadd.f32 %v788, %v790
    %v800 = vmax.f32 %v791, 0.0
    %v801 = vmax.f32 %v792, 0.0
    %v802 = vmax.f32 %v793, 0.0
    %v803 = vmax.f32 %v794, 0.0
    %v804 = vmax.f32 %v795, 0.0
    %v805 = vmax.f32 %v796, 0.0
    %v806 = vmax.f32 %v797, 0.0
    %v807 = vmax.f32 %v798, 0.0
    %v808 = vmax.f32 %v799, 0.0
    %vm809 = vcmask 130048
    %810 = vst.msk [vmem:[#allocation2 + $0x4] sm:$0xff] %vm809, %v800
    %811 = vst.msk [vmem:[#allocation2 + $0xc] sm:$0xff] %vm809, %v801
    %812 = vst.msk [vmem:[#allocation2 + $0x14] sm:$0xff] %vm809, %v802
    %813 = vst.msk [vmem:[#allocation2 + $0x1c] sm:$0xff] %vm809, %v803
    %814 = vst.msk [vmem:[#allocation2 + $0x24] sm:$0xff] %vm809, %v804
    %815 = vst.msk [vmem:[#allocation2 + $0x2c] sm:$0xff] %vm809, %v805
    %816 = vst.msk [vmem:[#allocation2 + $0x34] sm:$0xff] %vm809, %v806
    %817 = vst.msk [vmem:[#allocation2 + $0x3c] sm:$0xff] %vm809, %v807
    %818 = vst.msk [vmem:[#allocation2 + $0x44] sm:$0xff] %vm809, %v808
    %vm819 = vcmask 125952
    %820 = vst.msk [vmem:[#allocation2] sm:$0xf] %vm819, 0.0
    %821 = vst.msk [vmem:[#allocation2 + $0x24] sm:$0xf] %vm819, 0.0
    %822 = vst.msk [vmem:[#allocation2 + $0x48] sm:$0xf] %vm819, 0.0
    %v823 = vld [vmem:[#allocation2 + $0x3] sm:$0xff]
    %v824 = vld [vmem:[#allocation2 + $0xb] sm:$0xff]
    %v825 = vld [vmem:[#allocation2 + $0x13] sm:$0xff]
    %v826 = vld [vmem:[#allocation2 + $0x1b] sm:$0xff]
    %v827 = vld [vmem:[#allocation2 + $0x23] sm:$0xff]
    %v828 = vld [vmem:[#allocation2 + $0x2b] sm:$0xff]
    %v829 = vld [vmem:[#allocation2 + $0x33] sm:$0xff]
    %v830 = vld [vmem:[#allocation2 + $0x3b] sm:$0xff]
    %v831 = vld [vmem:[#allocation2 + $0x43] sm:$0xff]
    %v832 = vpack.c.bf16 %v824, %v823
    %v833 = vpack.c.bf16 %v826, %v825
    %v834 = vpack.c.bf16 %v828, %v827
    %v835 = vpack.c.bf16 %v830, %v829
    %v836 = vpack.c.bf16 %v831, %v831
    %v837 = vld [vmem:[#allocation3 + $0x40] sm:$0xff]
    %v838 = vld [vmem:[#allocation3 + $0x48] sm:$0xff]
    %v839 = vpack.c.bf16 %v838, %v837
    %v840 = vld [vmem:[#allocation2 + $0x4] sm:$0xff]
    %v841 = vld [vmem:[#allocation2 + $0xc] sm:$0xff]
    %v842 = vld [vmem:[#allocation2 + $0x14] sm:$0xff]
    %v843 = vld [vmem:[#allocation2 + $0x1c] sm:$0xff]
    %v844 = vld [vmem:[#allocation2 + $0x24] sm:$0xff]
    %v845 = vld [vmem:[#allocation2 + $0x2c] sm:$0xff]
    %v846 = vld [vmem:[#allocation2 + $0x34] sm:$0xff]
    %v847 = vld [vmem:[#allocation2 + $0x3c] sm:$0xff]
    %v848 = vld [vmem:[#allocation2 + $0x44] sm:$0xff]
    %v849 = vpack.c.bf16 %v841, %v840
    %v850 = vpack.c.bf16 %v843, %v842
    %v851 = vpack.c.bf16 %v845, %v844
    %v852 = vpack.c.bf16 %v847, %v846
    %v853 = vpack.c.bf16 %v848, %v848
    %v854 = vld [vmem:[#allocation3 + $0x50] sm:$0xff]
    %v855 = vld [vmem:[#allocation3 + $0x58] sm:$0xff]
    %v856 = vpack.c.bf16 %v855, %v854
    %v858 = vsel %vm809, %v849, 0
    %v861 = vsel %vm809, %v850, 0
    %v864 = vsel %vm809, %v851, 0
    %v867 = vsel %vm809, %v852, 0
    %v870 = vsel %vm809, %v853, 0
    %872 = vmatpush.bf16.msra.mxu0 0
    %873 = vmatpush.bf16.msra.mxu0 0
    %874 = vmatpush.bf16.msra.mxu0 0
    %875 = vmatpush.bf16.msra.mxu0 0
    %876 = vmatpush.bf16.msra.mxu0 0
    %877 = vmatpush.bf16.msra.mxu0 0
    %878 = vmatpush.bf16.msra.mxu0 0
    %879 = vmatpush.bf16.msra.mxu0 %v856
    %880 = vmatmul.bf16.gmra.mxu0 %v858
    %v881 = vpop.f32.mrf.mxu0
    %v882 = vadd.f32 0.0, %v881
    %v883 = vpop.f32.mrf.mxu0
    %v884 = vadd.f32 0.0, %v883
    %885 = vmatmul.bf16.gmra.mxu0 %v861
    %v886 = vpop.f32.mrf.mxu0
    %v887 = vadd.f32 0.0, %v886
    %v888 = vpop.f32.mrf.mxu0
    %v889 = vadd.f32 0.0, %v888
    %890 = vmatmul.bf16.gmra.mxu0 %v864
    %v891 = vpop.f32.mrf.mxu0
    %v892 = vadd.f32 0.0, %v891
    %v893 = vpop.f32.mrf.mxu0
    %v894 = vadd.f32 0.0, %v893
    %895 = vmatmul.bf16.gmra.mxu0 %v867
    %v896 = vpop.f32.mrf.mxu0
    %v897 = vadd.f32 0.0, %v896
    %v898 = vpop.f32.mrf.mxu0
    %v899 = vadd.f32 0.0, %v898
    %900 = vmatmul.bf16.gmra.mxu0 %v870
    %v901 = vpop.f32.mrf.mxu0
    %v902 = vadd.f32 0.0, %v901
    %v903 = vpop.f32.mrf.mxu0
    %904 = vdwg.mxu0
    %v906 = vsel %vm809, %v832, 0
    %v909 = vsel %vm809, %v833, 0
    %v912 = vsel %vm809, %v834, 0
    %v915 = vsel %vm809, %v835, 0
    %v918 = vsel %vm809, %v836, 0
    %920 = vmatpush.bf16.msra.mxu0 0
    %921 = vmatpush.bf16.msra.mxu0 0
    %922 = vmatpush.bf16.msra.mxu0 0
    %923 = vmatpush.bf16.msra.mxu0 0
    %924 = vmatpush.bf16.msra.mxu0 0
    %925 = vmatpush.bf16.msra.mxu0 0
    %926 = vmatpush.bf16.msra.mxu0 0
    %927 = vmatpush.bf16.msra.mxu0 %v839
    %928 = vmatmul.bf16.gmra.mxu0 %v906
    %v929 = vpop.f32.mrf.mxu0
    %v930 = vadd.f32 %v882, %v929
    %v931 = vpop.f32.mrf.mxu0
    %v932 = vadd.f32 %v884, %v931
    %933 = vmatmul.bf16.gmra.mxu0 %v909
    %v934 = vpop.f32.mrf.mxu0
    %v935 = vadd.f32 %v887, %v934
    %v936 = vpop.f32.mrf.mxu0
    %v937 = vadd.f32 %v889, %v936
    %938 = vmatmul.bf16.gmra.mxu0 %v912
    %v939 = vpop.f32.mrf.mxu0
    %v940 = vadd.f32 %v892, %v939
    %v941 = vpop.f32.mrf.mxu0
    %v942 = vadd.f32 %v894, %v941
    %943 = vmatmul.bf16.gmra.mxu0 %v915
    %v944 = vpop.f32.mrf.mxu0
    %v945 = vadd.f32 %v897, %v944
    %v946 = vpop.f32.mrf.mxu0
    %v947 = vadd.f32 %v899, %v946
    %948 = vmatmul.bf16.gmra.mxu0 %v918
    %v949 = vpop.f32.mrf.mxu0
    %v950 = vadd.f32 %v902, %v949
    %v951 = vpop.f32.mrf.mxu0
    %952 = vdwg.mxu0
    %v953 = vld [vmem:[#allocation2 + $0x5] sm:$0xff]
    %v954 = vld [vmem:[#allocation2 + $0xd] sm:$0xff]
    %v955 = vld [vmem:[#allocation2 + $0x15] sm:$0xff]
    %v956 = vld [vmem:[#allocation2 + $0x1d] sm:$0xff]
    %v957 = vld [vmem:[#allocation2 + $0x25] sm:$0xff]
    %v958 = vld [vmem:[#allocation2 + $0x2d] sm:$0xff]
    %v959 = vld [vmem:[#allocation2 + $0x35] sm:$0xff]
    %v960 = vld [vmem:[#allocation2 + $0x3d] sm:$0xff]
    %v961 = vld [vmem:[#allocation2 + $0x45] sm:$0xff]
    %v962 = vpack.c.bf16 %v954, %v953
    %v963 = vpack.c.bf16 %v956, %v955
    %v964 = vpack.c.bf16 %v958, %v957
    %v965 = vpack.c.bf16 %v960, %v959
    %v966 = vpack.c.bf16 %v961, %v961
    %v967 = vld [vmem:[#allocation3 + $0x60] sm:$0xff]
    %v968 = vld [vmem:[#allocation3 + $0x68] sm:$0xff]
    %v969 = vpack.c.bf16 %v968, %v967
    %v971 = vsel %vm809, %v962, 0
    %v974 = vsel %vm809, %v963, 0
    %v977 = vsel %vm809, %v964, 0
    %v980 = vsel %vm809, %v965, 0
    %v983 = vsel %vm809, %v966, 0
    %985 = vmatpush.bf16.msra.mxu0 0
    %986 = vmatpush.bf16.msra.mxu0 0
    %987 = vmatpush.bf16.msra.mxu0 0
    %988 = vmatpush.bf16.msra.mxu0 0
    %989 = vmatpush.bf16.msra.mxu0 0
    %990 = vmatpush.bf16.msra.mxu0 0
    %991 = vmatpush.bf16.msra.mxu0 0
    %992 = vmatpush.bf16.msra.mxu0 %v969
    %993 = vmatmul.bf16.gmra.mxu0 %v971
    %v994 = vpop.f32.mrf.mxu0
    %v995 = vadd.f32 0.0, %v994
    %v996 = vpop.f32.mrf.mxu0
    %v997 = vadd.f32 0.0, %v996
    %998 = vmatmul.bf16.gmra.mxu0 %v974
    %v999 = vpop.f32.mrf.mxu0
    %v1000 = vadd.f32 0.0, %v999
    %v1001 = vpop.f32.mrf.mxu0
    %v1002 = vadd.f32 0.0, %v1001
    %1003 = vmatmul.bf16.gmra.mxu0 %v977
    %v1004 = vpop.f32.mrf.mxu0
    %v1005 = vadd.f32 0.0, %v1004
    %v1006 = vpop.f32.mrf.mxu0
    %v1007 = vadd.f32 0.0, %v1006
    %1008 = vmatmul.bf16.gmra.mxu0 %v980
    %v1009 = vpop.f32.mrf.mxu0
    %v1010 = vadd.f32 0.0, %v1009
    %v1011 = vpop.f32.mrf.mxu0
    %v1012 = vadd.f32 0.0, %v1011
    %1013 = vmatmul.bf16.gmra.mxu0 %v983
    %v1014 = vpop.f32.mrf.mxu0
    %v1015 = vadd.f32 0.0, %v1014
    %v1016 = vpop.f32.mrf.mxu0
    %1017 = vdwg.mxu0
    %v1018 = vadd.f32 %v930, %v995
    %v1019 = vadd.f32 %v932, %v997
    %v1020 = vadd.f32 %v935, %v1000
    %v1021 = vadd.f32 %v937, %v1002
    %v1022 = vadd.f32 %v940, %v1005
    %v1023 = vadd.f32 %v942, %v1007
    %v1024 = vadd.f32 %v945, %v1010
    %v1025 = vadd.f32 %v947, %v1012
    %v1026 = vadd.f32 %v950, %v1015
    %v1027 = vld [vmem:[#allocation3 + $0x70] sm:$0x1]
    %v1028 = vperm.slane %v1027, 0
    %v1029 = vadd.f32 %v1018, %v1028
    %v1030 = vadd.f32 %v1019, %v1028
    %v1031 = vadd.f32 %v1020, %v1028
    %v1032 = vadd.f32 %v1021, %v1028
    %v1033 = vadd.f32 %v1022, %v1028
    %v1034 = vadd.f32 %v1023, %v1028
    %v1035 = vadd.f32 %v1024, %v1028
    %v1036 = vadd.f32 %v1025, %v1028
    %v1037 = vadd.f32 %v1026, %v1028
    %v1038 = vmax.f32 %v1029, 0.0
    %v1039 = vmax.f32 %v1030, 0.0
    %v1040 = vmax.f32 %v1031, 0.0
    %v1041 = vmax.f32 %v1032, 0.0
    %v1042 = vmax.f32 %v1033, 0.0
    %v1043 = vmax.f32 %v1034, 0.0
    %v1044 = vmax.f32 %v1035, 0.0
    %v1045 = vmax.f32 %v1036, 0.0
    %v1046 = vmax.f32 %v1037, 0.0
    %v1047 = vld [vmem:[#allocation3 + $0x78] sm:$0x1]
    %v1048 = vperm.slane %v1047, 0
    %v1049 = vmul.f32 %v1038, %v1048
    %v1050 = vmul.f32 %v1039, %v1048
    %v1051 = vmul.f32 %v1040, %v1048
    %v1052 = vmul.f32 %v1041, %v1048
    %v1053 = vmul.f32 %v1042, %v1048
    %v1054 = vmul.f32 %v1043, %v1048
    %v1055 = vmul.f32 %v1044, %v1048
    %v1056 = vmul.f32 %v1045, %v1048
    %v1057 = vmul.f32 %v1046, %v1048
    %v1058 = vld [vmem:[#allocation3 + $0x80] sm:$0x1]
    %v1059 = vperm.slane %v1058, 0
    %v1060 = vadd.f32 %v1049, %v1059
    %v1061 = vadd.f32 %v1050, %v1059
    %v1062 = vadd.f32 %v1051, %v1059
    %v1063 = vadd.f32 %v1052, %v1059
    %v1064 = vadd.f32 %v1053, %v1059
    %v1065 = vadd.f32 %v1054, %v1059
    %v1066 = vadd.f32 %v1055, %v1059
    %v1067 = vadd.f32 %v1056, %v1059
    %v1068 = vadd.f32 %v1057, %v1059
    %1069 = vst.msk [vmem:[#allocation2] sm:$0xff] %vm809, %v1060
    %1070 = vst.msk [vmem:[#allocation2 + $0x8] sm:$0xff] %vm809, %v1061
    %1071 = vst.msk [vmem:[#allocation2 + $0x10] sm:$0xff] %vm809, %v1062
    %1072 = vst.msk [vmem:[#allocation2 + $0x18] sm:$0xff] %vm809, %v1063
    %1073 = vst.msk [vmem:[#allocation2 + $0x20] sm:$0xff] %vm809, %v1064
    %1074 = vst.msk [vmem:[#allocation2 + $0x28] sm:$0xff] %vm809, %v1065
    %1075 = vst.msk [vmem:[#allocation2 + $0x30] sm:$0xff] %vm809, %v1066
    %1076 = vst.msk [vmem:[#allocation2 + $0x38] sm:$0xff] %vm809, %v1067
    %1077 = vst.msk [vmem:[#allocation2 + $0x40] sm:$0xff] %vm809, %v1068
    %v1078 = vld [vmem:[#allocation2] ss:$2 sm:$0xff]
    %v1079 = vld [vmem:[%s522] ss:$2 sm:$0xff]
    %v1080 = vld [vmem:[%s524] ss:$2 sm:$0xff]
    %v1081 = vld [vmem:[%s526] ss:$2 sm:$0xff]
    %v1082 = vld [vmem:[%s528] ss:$2 sm:$0xf]
    %v1083 = vld [vmem:[%s538] ss:$2 sm:$0xff]
    %v1084 = vld [vmem:[%s540] ss:$2 sm:$0xff]
    %v1085 = vld [vmem:[%s542] ss:$2 sm:$0xff]
    %v1086 = vld [vmem:[%s544] ss:$2 sm:$0xff]
    %v1087 = vld [vmem:[%s546] ss:$2 sm:$0xf]
    %v1088 = vmax.f32 %v1078, %v1083
    %v1089 = vmax.f32 %v1079, %v1084
    %v1090 = vmax.f32 %v1080, %v1085
    %v1091 = vmax.f32 %v1081, %v1086
    %v1092 = vmax.f32 %v1082, %v1087
    %v1093 = vld [vmem:[%s0] sm:$0xff]
    %v1094 = vld [vmem:[%s0 + $0x8] sm:$0xff]
    %v1095 = vld [vmem:[%s0 + $0x10] sm:$0xff]
    %v1096 = vld [vmem:[%s0 + $0x18] sm:$0xff]
    %v1097 = vld [vmem:[%s0 + $0x20] sm:$0xff]
    %v1098 = vld [vmem:[%s0 + $0x28] sm:$0xff]
    %v1099 = vld [vmem:[%s0 + $0x30] sm:$0xff]
    %v1100 = vld [vmem:[%s0 + $0x38] sm:$0xff]
    %1101 = vst.msk [vmem:[#allocation2 + $0x4] sm:$0xff] %vm36, %v1093
    %1102 = vst.msk [vmem:[#allocation2 + $0xc] sm:$0xff] %vm36, %v1094
    %1103 = vst.msk [vmem:[#allocation2 + $0x14] sm:$0xff] %vm36, %v1095
    %1104 = vst.msk [vmem:[#allocation2 + $0x1c] sm:$0xff] %vm36, %v1096
    %1105 = vst.msk [vmem:[#allocation2 + $0x24] sm:$0xff] %vm36, %v1097
    %1106 = vst.msk [vmem:[#allocation2 + $0x2c] sm:$0xff] %vm36, %v1098
    %1107 = vst.msk [vmem:[#allocation2 + $0x34] sm:$0xff] %vm36, %v1099
    %1108 = vst.msk [vmem:[#allocation2 + $0x3c] sm:$0xff] %vm36, %v1100
    %v1109 = vld [vmem:[%s45] sm:$0xff]
    %v1110 = vld [vmem:[%s45 + $0x8] sm:$0xff]
    %v1111 = vld [vmem:[%s45 + $0x10] sm:$0xff]
    %v1112 = vld [vmem:[%s45 + $0x18] sm:$0xff]
    %v1113 = vld [vmem:[%s45 + $0x20] sm:$0xff]
    %v1114 = vld [vmem:[%s45 + $0x28] sm:$0xff]
    %v1115 = vld [vmem:[%s45 + $0x30] sm:$0xff]
    %v1116 = vld [vmem:[%s45 + $0x38] sm:$0xff]
    %1117 = vst.msk [vmem:[#allocation2 + $0x4c] sm:$0xff] %vm36, %v1109
    %1118 = vst.msk [vmem:[#allocation2 + $0x54] sm:$0xff] %vm36, %v1110
    %1119 = vst.msk [vmem:[#allocation2 + $0x5c] sm:$0xff] %vm36, %v1111
    %1120 = vst.msk [vmem:[#allocation2 + $0x64] sm:$0xff] %vm36, %v1112
    %1121 = vst.msk [vmem:[#allocation2 + $0x6c] sm:$0xff] %vm36, %v1113
    %1122 = vst.msk [vmem:[#allocation2 + $0x74] sm:$0xff] %vm36, %v1114
    %1123 = vst.msk [vmem:[#allocation2 + $0x7c] sm:$0xff] %vm36, %v1115
    %1124 = vst.msk [vmem:[#allocation2 + $0x84] sm:$0xff] %vm36, %v1116
    %1125 = vst.msk [vmem:[#allocation2] sm:$0xf] %vm62, 0.0
    %1126 = vst.msk [vmem:[#allocation2 + $0x44] sm:$0xff] %vm36, 0.0
    %1127 = vst.msk [vmem:[#allocation2 + $0x8c] sm:$0xff] %vm36, 0.0
    %v1128 = vld [vmem:[#allocation2 + $0x2] sm:$0xff]
    %v1129 = vld [vmem:[#allocation2 + $0xa] sm:$0xff]
    %v1130 = vld [vmem:[#allocation2 + $0x12] sm:$0xff]
    %v1131 = vld [vmem:[#allocation2 + $0x1a] sm:$0xff]
    %v1132 = vld [vmem:[#allocation2 + $0x22] sm:$0xff]
    %v1133 = vld [vmem:[#allocation2 + $0x2a] sm:$0xff]
    %v1134 = vld [vmem:[#allocation2 + $0x32] sm:$0xff]
    %v1135 = vld [vmem:[#allocation2 + $0x3a] sm:$0xff]
    %v1136 = vld [vmem:[#allocation2 + $0x42] sm:$0xff]
    %v1137 = vld [vmem:[#allocation2 + $0x4a] sm:$0xff]
    %v1138 = vld [vmem:[#allocation2 + $0x52] sm:$0xff]
    %v1139 = vld [vmem:[#allocation2 + $0x5a] sm:$0xff]
    %v1140 = vld [vmem:[#allocation2 + $0x62] sm:$0xff]
    %v1141 = vld [vmem:[#allocation2 + $0x6a] sm:$0xff]
    %v1142 = vld [vmem:[#allocation2 + $0x72] sm:$0xff]
    %v1143 = vld [vmem:[#allocation2 + $0x7a] sm:$0xff]
    %v1144 = vld [vmem:[#allocation2 + $0x82] sm:$0xff]
    %v1145 = vld [vmem:[#allocation2 + $0x8a] sm:$0xff]
    %v1146 = vpack.c.bf16 %v1129, %v1128
    %v1147 = vpack.c.bf16 %v1131, %v1130
    %v1148 = vpack.c.bf16 %v1133, %v1132
    %v1149 = vpack.c.bf16 %v1135, %v1134
    %v1150 = vpack.c.bf16 %v1137, %v1136
    %v1151 = vpack.c.bf16 %v1139, %v1138
    %v1152 = vpack.c.bf16 %v1141, %v1140
    %v1153 = vpack.c.bf16 %v1143, %v1142
    %v1154 = vpack.c.bf16 %v1145, %v1144
    %v1155 = vld [vmem:[#allocation3 + $0x88] sm:$0x3]
    %v1156 = vpack.c.bf16 %v1155, %v1155
    %v1157 = vld [vmem:[#allocation2 + $0x4] sm:$0xff]
    %v1158 = vld [vmem:[#allocation2 + $0xc] sm:$0xff]
    %v1159 = vld [vmem:[#allocation2 + $0x14] sm:$0xff]
    %v1160 = vld [vmem:[#allocation2 + $0x1c] sm:$0xff]
    %v1161 = vld [vmem:[#allocation2 + $0x24] sm:$0xff]
    %v1162 = vld [vmem:[#allocation2 + $0x2c] sm:$0xff]
    %v1163 = vld [vmem:[#allocation2 + $0x34] sm:$0xff]
    %v1164 = vld [vmem:[#allocation2 + $0x3c] sm:$0xff]
    %v1165 = vld [vmem:[#allocation2 + $0x44] sm:$0xff]
    %v1166 = vld [vmem:[#allocation2 + $0x4c] sm:$0xff]
    %v1167 = vld [vmem:[#allocation2 + $0x54] sm:$0xff]
    %v1168 = vld [vmem:[#allocation2 + $0x5c] sm:$0xff]
    %v1169 = vld [vmem:[#allocation2 + $0x64] sm:$0xff]
    %v1170 = vld [vmem:[#allocation2 + $0x6c] sm:$0xff]
    %v1171 = vld [vmem:[#allocation2 + $0x74] sm:$0xff]
    %v1172 = vld [vmem:[#allocation2 + $0x7c] sm:$0xff]
    %v1173 = vld [vmem:[#allocation2 + $0x84] sm:$0xff]
    %v1174 = vld [vmem:[#allocation2 + $0x8c] sm:$0xff]
    %v1175 = vpack.c.bf16 %v1158, %v1157
    %v1176 = vpack.c.bf16 %v1160, %v1159
    %v1177 = vpack.c.bf16 %v1162, %v1161
    %v1178 = vpack.c.bf16 %v1164, %v1163
    %v1179 = vpack.c.bf16 %v1166, %v1165
    %v1180 = vpack.c.bf16 %v1168, %v1167
    %v1181 = vpack.c.bf16 %v1170, %v1169
    %v1182 = vpack.c.bf16 %v1172, %v1171
    %v1183 = vpack.c.bf16 %v1174, %v1173
    %v1184 = vld [vmem:[#allocation3 + $0x8a] sm:$0x3]
    %v1185 = vpack.c.bf16 %v1184, %v1184
    %v1187 = vsel %vm36, %v1175, 0
    %v1190 = vsel %vm36, %v1176, 0
    %v1193 = vsel %vm36, %v1177, 0
    %v1196 = vsel %vm36, %v1178, 0
    %v1199 = vsel %vm36, %v1179, 0
    %v1202 = vsel %vm36, %v1180, 0
    %v1205 = vsel %vm36, %v1181, 0
    %v1208 = vsel %vm36, %v1182, 0
    %v1211 = vsel %vm36, %v1183, 0
    %v1214 = vsel %vm151, %v1185, 0
    %1216 = vmatpush.bf16.msra.mxu0 0
    %1217 = vmatpush.bf16.msra.mxu0 0
    %1218 = vmatpush.bf16.msra.mxu0 0
    %1219 = vmatpush.bf16.msra.mxu0 0
    %1220 = vmatpush.bf16.msra.mxu0 0
    %1221 = vmatpush.bf16.msra.mxu0 0
    %1222 = vmatpush.bf16.msra.mxu0 0
    %1223 = vmatpush.bf16.msra.mxu0 %v1214
    %1224 = vmatmul.bf16.gmra.mxu0 %v1187
    %v1225 = vpop.f32.mrf.mxu0
    %v1226 = vadd.f32 0.0, %v1225
    %v1227 = vpop.f32.mrf.mxu0
    %v1228 = vadd.f32 0.0, %v1227
    %1229 = vmatmul.bf16.gmra.mxu0 %v1190
    %v1230 = vpop.f32.mrf.mxu0
    %v1231 = vadd.f32 0.0, %v1230
    %v1232 = vpop.f32.mrf.mxu0
    %v1233 = vadd.f32 0.0, %v1232
    %1234 = vmatmul.bf16.gmra.mxu0 %v1193
    %v1235 = vpop.f32.mrf.mxu0
    %v1236 = vadd.f32 0.0, %v1235
    %v1237 = vpop.f32.mrf.mxu0
    %v1238 = vadd.f32 0.0, %v1237
    %1239 = vmatmul.bf16.gmra.mxu0 %v1196
    %v1240 = vpop.f32.mrf.mxu0
    %v1241 = vadd.f32 0.0, %v1240
    %v1242 = vpop.f32.mrf.mxu0
    %v1243 = vadd.f32 0.0, %v1242
    %1244 = vmatmul.bf16.gmra.mxu0 %v1199
    %v1245 = vpop.f32.mrf.mxu0
    %v1246 = vadd.f32 0.0, %v1245
    %v1247 = vpop.f32.mrf.mxu0
    %v1248 = vadd.f32 0.0, %v1247
    %1249 = vmatmul.bf16.gmra.mxu0 %v1202
    %v1250 = vpop.f32.mrf.mxu0
    %v1251 = vadd.f32 0.0, %v1250
    %v1252 = vpop.f32.mrf.mxu0
    %v1253 = vadd.f32 0.0, %v1252
    %1254 = vmatmul.bf16.gmra.mxu0 %v1205
    %v1255 = vpop.f32.mrf.mxu0
    %v1256 = vadd.f32 0.0, %v1255
    %v1257 = vpop.f32.mrf.mxu0
    %v1258 = vadd.f32 0.0, %v1257
    %1259 = vmatmul.bf16.gmra.mxu0 %v1208
    %v1260 = vpop.f32.mrf.mxu0
    %v1261 = vadd.f32 0.0, %v1260
    %v1262 = vpop.f32.mrf.mxu0
    %v1263 = vadd.f32 0.0, %v1262
    %1264 = vmatmul.bf16.gmra.mxu0 %v1211
    %v1265 = vpop.f32.mrf.mxu0
    %v1266 = vadd.f32 0.0, %v1265
    %v1267 = vpop.f32.mrf.mxu0
    %v1268 = vadd.f32 0.0, %v1267
    %1269 = vdwg.mxu0
    %v1271 = vsel %vm36, %v1146, 0
    %v1274 = vsel %vm36, %v1147, 0
    %v1277 = vsel %vm36, %v1148, 0
    %v1280 = vsel %vm36, %v1149, 0
    %v1283 = vsel %vm36, %v1150, 0
    %v1286 = vsel %vm36, %v1151, 0
    %v1289 = vsel %vm36, %v1152, 0
    %v1292 = vsel %vm36, %v1153, 0
    %v1295 = vsel %vm36, %v1154, 0
    %v1298 = vsel %vm151, %v1156, 0
    %1300 = vmatpush.bf16.msra.mxu0 0
    %1301 = vmatpush.bf16.msra.mxu0 0
    %1302 = vmatpush.bf16.msra.mxu0 0
    %1303 = vmatpush.bf16.msra.mxu0 0
    %1304 = vmatpush.bf16.msra.mxu0 0
    %1305 = vmatpush.bf16.msra.mxu0 0
    %1306 = vmatpush.bf16.msra.mxu0 0
    %1307 = vmatpush.bf16.msra.mxu0 %v1298
    %1308 = vmatmul.bf16.gmra.mxu0 %v1271
    %v1309 = vpop.f32.mrf.mxu0
    %v1310 = vadd.f32 %v1226, %v1309
    %v1311 = vpop.f32.mrf.mxu0
    %v1312 = vadd.f32 %v1228, %v1311
    %1313 = vmatmul.bf16.gmra.mxu0 %v1274
    %v1314 = vpop.f32.mrf.mxu0
    %v1315 = vadd.f32 %v1231, %v1314
    %v1316 = vpop.f32.mrf.mxu0
    %v1317 = vadd.f32 %v1233, %v1316
    %1318 = vmatmul.bf16.gmra.mxu0 %v1277
    %v1319 = vpop.f32.mrf.mxu0
    %v1320 = vadd.f32 %v1236, %v1319
    %v1321 = vpop.f32.mrf.mxu0
    %v1322 = vadd.f32 %v1238, %v1321
    %1323 = vmatmul.bf16.gmra.mxu0 %v1280
    %v1324 = vpop.f32.mrf.mxu0
    %v1325 = vadd.f32 %v1241, %v1324
    %v1326 = vpop.f32.mrf.mxu0
    %v1327 = vadd.f32 %v1243, %v1326
    %1328 = vmatmul.bf16.gmra.mxu0 %v1283
    %v1329 = vpop.f32.mrf.mxu0
    %v1330 = vadd.f32 %v1246, %v1329
    %v1331 = vpop.f32.mrf.mxu0
    %v1332 = vadd.f32 %v1248, %v1331
    %1333 = vmatmul.bf16.gmra.mxu0 %v1286
    %v1334 = vpop.f32.mrf.mxu0
    %v1335 = vadd.f32 %v1251, %v1334
    %v1336 = vpop.f32.mrf.mxu0
    %v1337 = vadd.f32 %v1253, %v1336
    %1338 = vmatmul.bf16.gmra.mxu0 %v1289
    %v1339 = vpop.f32.mrf.mxu0
    %v1340 = vadd.f32 %v1256, %v1339
    %v1341 = vpop.f32.mrf.mxu0
    %v1342 = vadd.f32 %v1258, %v1341
    %1343 = vmatmul.bf16.gmra.mxu0 %v1292
    %v1344 = vpop.f32.mrf.mxu0
    %v1345 = vadd.f32 %v1261, %v1344
    %v1346 = vpop.f32.mrf.mxu0
    %v1347 = vadd.f32 %v1263, %v1346
    %1348 = vmatmul.bf16.gmra.mxu0 %v1295
    %v1349 = vpop.f32.mrf.mxu0
    %v1350 = vadd.f32 %v1266, %v1349
    %v1351 = vpop.f32.mrf.mxu0
    %v1352 = vadd.f32 %v1268, %v1351
    %1353 = vdwg.mxu0
    %v1354 = vld [vmem:[#allocation2 + $0x6] sm:$0xff]
    %v1355 = vld [vmem:[#allocation2 + $0xe] sm:$0xff]
    %v1356 = vld [vmem:[#allocation2 + $0x16] sm:$0xff]
    %v1357 = vld [vmem:[#allocation2 + $0x1e] sm:$0xff]
    %v1358 = vld [vmem:[#allocation2 + $0x26] sm:$0xff]
    %v1359 = vld [vmem:[#allocation2 + $0x2e] sm:$0xff]
    %v1360 = vld [vmem:[#allocation2 + $0x36] sm:$0xff]
    %v1361 = vld [vmem:[#allocation2 + $0x3e] sm:$0xff]
    %v1362 = vld [vmem:[#allocation2 + $0x46] sm:$0xff]
    %v1363 = vld [vmem:[#allocation2 + $0x4e] sm:$0xff]
    %v1364 = vld [vmem:[#allocation2 + $0x56] sm:$0xff]
    %v1365 = vld [vmem:[#allocation2 + $0x5e] sm:$0xff]
    %v1366 = vld [vmem:[#allocation2 + $0x66] sm:$0xff]
    %v1367 = vld [vmem:[#allocation2 + $0x6e] sm:$0xff]
    %v1368 = vld [vmem:[#allocation2 + $0x76] sm:$0xff]
    %v1369 = vld [vmem:[#allocation2 + $0x7e] sm:$0xff]
    %v1370 = vld [vmem:[#allocation2 + $0x86] sm:$0xff]
    %v1371 = vld [vmem:[#allocation2 + $0x8e] sm:$0xff]
    %v1372 = vpack.c.bf16 %v1355, %v1354
    %v1373 = vpack.c.bf16 %v1357, %v1356
    %v1374 = vpack.c.bf16 %v1359, %v1358
    %v1375 = vpack.c.bf16 %v1361, %v1360
    %v1376 = vpack.c.bf16 %v1363, %v1362
    %v1377 = vpack.c.bf16 %v1365, %v1364
    %v1378 = vpack.c.bf16 %v1367, %v1366
    %v1379 = vpack.c.bf16 %v1369, %v1368
    %v1380 = vpack.c.bf16 %v1371, %v1370
    %v1381 = vld [vmem:[#allocation3 + $0x8c] sm:$0x3]
    %v1382 = vpack.c.bf16 %v1381, %v1381
    %v1384 = vsel %vm36, %v1372, 0
    %v1387 = vsel %vm36, %v1373, 0
    %v1390 = vsel %vm36, %v1374, 0
    %v1393 = vsel %vm36, %v1375, 0
    %v1396 = vsel %vm36, %v1376, 0
    %v1399 = vsel %vm36, %v1377, 0
    %v1402 = vsel %vm36, %v1378, 0
    %v1405 = vsel %vm36, %v1379, 0
    %v1408 = vsel %vm36, %v1380, 0
    %v1411 = vsel %vm151, %v1382, 0
    %1413 = vmatpush.bf16.msra.mxu0 0
    %1414 = vmatpush.bf16.msra.mxu0 0
    %1415 = vmatpush.bf16.msra.mxu0 0
    %1416 = vmatpush.bf16.msra.mxu0 0
    %1417 = vmatpush.bf16.msra.mxu0 0
    %1418 = vmatpush.bf16.msra.mxu0 0
    %1419 = vmatpush.bf16.msra.mxu0 0
    %1420 = vmatpush.bf16.msra.mxu0 %v1411
    %1421 = vmatmul.bf16.gmra.mxu0 %v1384
    %v1422 = vpop.f32.mrf.mxu0
    %v1423 = vadd.f32 0.0, %v1422
    %v1424 = vpop.f32.mrf.mxu0
    %v1425 = vadd.f32 0.0, %v1424
    %1426 = vmatmul.bf16.gmra.mxu0 %v1387
    %v1427 = vpop.f32.mrf.mxu0
    %v1428 = vadd.f32 0.0, %v1427
    %v1429 = vpop.f32.mrf.mxu0
    %v1430 = vadd.f32 0.0, %v1429
    %1431 = vmatmul.bf16.gmra.mxu0 %v1390
    %v1432 = vpop.f32.mrf.mxu0
    %v1433 = vadd.f32 0.0, %v1432
    %v1434 = vpop.f32.mrf.mxu0
    %v1435 = vadd.f32 0.0, %v1434
    %1436 = vmatmul.bf16.gmra.mxu0 %v1393
    %v1437 = vpop.f32.mrf.mxu0
    %v1438 = vadd.f32 0.0, %v1437
    %v1439 = vpop.f32.mrf.mxu0
    %v1440 = vadd.f32 0.0, %v1439
    %1441 = vmatmul.bf16.gmra.mxu0 %v1396
    %v1442 = vpop.f32.mrf.mxu0
    %v1443 = vadd.f32 0.0, %v1442
    %v1444 = vpop.f32.mrf.mxu0
    %v1445 = vadd.f32 0.0, %v1444
    %1446 = vmatmul.bf16.gmra.mxu0 %v1399
    %v1447 = vpop.f32.mrf.mxu0
    %v1448 = vadd.f32 0.0, %v1447
    %v1449 = vpop.f32.mrf.mxu0
    %v1450 = vadd.f32 0.0, %v1449
    %1451 = vmatmul.bf16.gmra.mxu0 %v1402
    %v1452 = vpop.f32.mrf.mxu0
    %v1453 = vadd.f32 0.0, %v1452
    %v1454 = vpop.f32.mrf.mxu0
    %v1455 = vadd.f32 0.0, %v1454
    %1456 = vmatmul.bf16.gmra.mxu0 %v1405
    %v1457 = vpop.f32.mrf.mxu0
    %v1458 = vadd.f32 0.0, %v1457
    %v1459 = vpop.f32.mrf.mxu0
    %v1460 = vadd.f32 0.0, %v1459
    %1461 = vmatmul.bf16.gmra.mxu0 %v1408
    %v1462 = vpop.f32.mrf.mxu0
    %v1463 = vadd.f32 0.0, %v1462
    %v1464 = vpop.f32.mrf.mxu0
    %v1465 = vadd.f32 0.0, %v1464
    %1466 = vdwg.mxu0
    %v1467 = vadd.f32 %v1310, %v1423
    %v1468 = vadd.f32 %v1312, %v1425
    %v1469 = vadd.f32 %v1315, %v1428
    %v1470 = vadd.f32 %v1317, %v1430
    %v1471 = vadd.f32 %v1320, %v1433
    %v1472 = vadd.f32 %v1322, %v1435
    %v1473 = vadd.f32 %v1325, %v1438
    %v1474 = vadd.f32 %v1327, %v1440
    %v1475 = vadd.f32 %v1330, %v1443
    %v1476 = vadd.f32 %v1332, %v1445
    %v1477 = vadd.f32 %v1335, %v1448
    %v1478 = vadd.f32 %v1337, %v1450
    %v1479 = vadd.f32 %v1340, %v1453
    %v1480 = vadd.f32 %v1342, %v1455
    %v1481 = vadd.f32 %v1345, %v1458
    %v1482 = vadd.f32 %v1347, %v1460
    %v1483 = vadd.f32 %v1350, %v1463
    %v1484 = vadd.f32 %v1352, %v1465
    %v1485 = vld [vmem:[#allocation3 + $0x90] sm:$0x1]
    %v1486 = vperm.slane %v1485, 0
    %v1487 = vadd.f32 %v1467, %v1486
    %v1488 = vadd.f32 %v1468, %v1486
    %v1489 = vadd.f32 %v1469, %v1486
    %v1490 = vadd.f32 %v1470, %v1486
    %v1491 = vadd.f32 %v1471, %v1486
    %v1492 = vadd.f32 %v1472, %v1486
    %v1493 = vadd.f32 %v1473, %v1486
    %v1494 = vadd.f32 %v1474, %v1486
    %v1495 = vadd.f32 %v1475, %v1486
    %v1496 = vadd.f32 %v1476, %v1486
    %v1497 = vadd.f32 %v1477, %v1486
    %v1498 = vadd.f32 %v1478, %v1486
    %v1499 = vadd.f32 %v1479, %v1486
    %v1500 = vadd.f32 %v1480, %v1486
    %v1501 = vadd.f32 %v1481, %v1486
    %v1502 = vadd.f32 %v1482, %v1486
    %v1503 = vadd.f32 %v1483, %v1486
    %v1504 = vadd.f32 %v1484, %v1486
    %v1505 = vmax.f32 %v1487, 0.0
    %v1506 = vmax.f32 %v1488, 0.0
    %v1507 = vmax.f32 %v1489, 0.0
    %v1508 = vmax.f32 %v1490, 0.0
    %v1509 = vmax.f32 %v1491, 0.0
    %v1510 = vmax.f32 %v1492, 0.0
    %v1511 = vmax.f32 %v1493, 0.0
    %v1512 = vmax.f32 %v1494, 0.0
    %v1513 = vmax.f32 %v1495, 0.0
    %v1514 = vmax.f32 %v1496, 0.0
    %v1515 = vmax.f32 %v1497, 0.0
    %v1516 = vmax.f32 %v1498, 0.0
    %v1517 = vmax.f32 %v1499, 0.0
    %v1518 = vmax.f32 %v1500, 0.0
    %v1519 = vmax.f32 %v1501, 0.0
    %v1520 = vmax.f32 %v1502, 0.0
    %v1521 = vmax.f32 %v1503, 0.0
    %v1522 = vmax.f32 %v1504, 0.0
    %v1523 = vld [vmem:[#allocation3 + $0x98] sm:$0x1]
    %v1524 = vperm.slane %v1523, 0
    %v1525 = vmul.f32 %v1505, %v1524
    %v1526 = vmul.f32 %v1506, %v1524
    %v1527 = vmul.f32 %v1507, %v1524
    %v1528 = vmul.f32 %v1508, %v1524
    %v1529 = vmul.f32 %v1509, %v1524
    %v1530 = vmul.f32 %v1510, %v1524
    %v1531 = vmul.f32 %v1511, %v1524
    %v1532 = vmul.f32 %v1512, %v1524
    %v1533 = vmul.f32 %v1513, %v1524
    %v1534 = vmul.f32 %v1514, %v1524
    %v1535 = vmul.f32 %v1515, %v1524
    %v1536 = vmul.f32 %v1516, %v1524
    %v1537 = vmul.f32 %v1517, %v1524
    %v1538 = vmul.f32 %v1518, %v1524
    %v1539 = vmul.f32 %v1519, %v1524
    %v1540 = vmul.f32 %v1520, %v1524
    %v1541 = vmul.f32 %v1521, %v1524
    %v1542 = vmul.f32 %v1522, %v1524
    %v1543 = vld [vmem:[#allocation3 + $0xa0] sm:$0x1]
    %v1544 = vperm.slane %v1543, 0
    %v1545 = vadd.f32 %v1525, %v1544
    %v1546 = vadd.f32 %v1526, %v1544
    %v1547 = vadd.f32 %v1527, %v1544
    %v1548 = vadd.f32 %v1528, %v1544
    %v1549 = vadd.f32 %v1529, %v1544
    %v1550 = vadd.f32 %v1530, %v1544
    %v1551 = vadd.f32 %v1531, %v1544
    %v1552 = vadd.f32 %v1532, %v1544
    %v1553 = vadd.f32 %v1533, %v1544
    %v1554 = vadd.f32 %v1534, %v1544
    %v1555 = vadd.f32 %v1535, %v1544
    %v1556 = vadd.f32 %v1536, %v1544
    %v1557 = vadd.f32 %v1537, %v1544
    %v1558 = vadd.f32 %v1538, %v1544
    %v1559 = vadd.f32 %v1539, %v1544
    %v1560 = vadd.f32 %v1540, %v1544
    %v1561 = vadd.f32 %v1541, %v1544
    %v1562 = vadd.f32 %v1542, %v1544
    %1563 = vst.msk [vmem:[#allocation2] sm:$0xff] %vm502, %v1545
    %1564 = vst.msk [vmem:[#allocation2 + $0x8] sm:$0xff] %vm502, %v1546
    %1565 = vst.msk [vmem:[#allocation2 + $0x10] sm:$0xff] %vm502, %v1547
    %1566 = vst.msk [vmem:[#allocation2 + $0x18] sm:$0xff] %vm502, %v1548
    %1567 = vst.msk [vmem:[#allocation2 + $0x20] sm:$0xff] %vm502, %v1549
    %1568 = vst.msk [vmem:[#allocation2 + $0x28] sm:$0xff] %vm502, %v1550
    %1569 = vst.msk [vmem:[#allocation2 + $0x30] sm:$0xff] %vm502, %v1551
    %1570 = vst.msk [vmem:[#allocation2 + $0x38] sm:$0xff] %vm502, %v1552
    %1571 = vst.msk [vmem:[#allocation2 + $0x40] sm:$0xff] %vm502, %v1553
    %1572 = vst.msk [vmem:[#allocation2 + $0x48] sm:$0xff] %vm502, %v1554
    %1573 = vst.msk [vmem:[#allocation2 + $0x50] sm:$0xff] %vm502, %v1555
    %1574 = vst.msk [vmem:[#allocation2 + $0x58] sm:$0xff] %vm502, %v1556
    %1575 = vst.msk [vmem:[#allocation2 + $0x60] sm:$0xff] %vm502, %v1557
    %1576 = vst.msk [vmem:[#allocation2 + $0x68] sm:$0xff] %vm502, %v1558
    %1577 = vst.msk [vmem:[#allocation2 + $0x70] sm:$0xff] %vm502, %v1559
    %1578 = vst.msk [vmem:[#allocation2 + $0x78] sm:$0xff] %vm502, %v1560
    %1579 = vst.msk [vmem:[#allocation2 + $0x80] sm:$0xff] %vm502, %v1561
    %1580 = vst.msk [vmem:[#allocation2 + $0x88] sm:$0xff] %vm502, %v1562
    %v1581 = vld [vmem:[#allocation2] ss:$2 sm:$0xff]
    %v1582 = vld [vmem:[%s522] ss:$2 sm:$0xff]
    %v1583 = vld [vmem:[%s524] ss:$2 sm:$0xff]
    %v1584 = vld [vmem:[%s526] ss:$2 sm:$0xff]
    %v1585 = vld [vmem:[%s528] ss:$2 sm:$0xff]
    %v1586 = vld [vmem:[%s530] ss:$2 sm:$0xff]
    %v1587 = vld [vmem:[%s532] ss:$2 sm:$0xff]
    %v1588 = vld [vmem:[%s534] ss:$2 sm:$0xff]
    %v1589 = vld [vmem:[%s536] ss:$2 sm:$0xff]
    %v1590 = vld [vmem:[%s538] ss:$2 sm:$0xff]
    %v1591 = vld [vmem:[%s540] ss:$2 sm:$0xff]
    %v1592 = vld [vmem:[%s542] ss:$2 sm:$0xff]
    %v1593 = vld [vmem:[%s544] ss:$2 sm:$0xff]
    %v1594 = vld [vmem:[%s546] ss:$2 sm:$0xff]
    %v1595 = vld [vmem:[%s548] ss:$2 sm:$0xff]
    %v1596 = vld [vmem:[%s550] ss:$2 sm:$0xff]
    %v1597 = vld [vmem:[%s552] ss:$2 sm:$0xff]
    %v1598 = vld [vmem:[%s554] ss:$2 sm:$0xff]
    %v1599 = vmax.f32 %v1581, %v1590
    %v1600 = vmax.f32 %v1582, %v1591
    %v1601 = vmax.f32 %v1583, %v1592
    %v1602 = vmax.f32 %v1584, %v1593
    %v1603 = vmax.f32 %v1585, %v1594
    %v1604 = vmax.f32 %v1586, %v1595
    %v1605 = vmax.f32 %v1587, %v1596
    %v1606 = vmax.f32 %v1588, %v1597
    %v1607 = vmax.f32 %v1589, %v1598
    %1608 = vst.msk [vmem:[#allocation2 + $0x4] sm:$0xff] %vm502, %v1599
    %1609 = vst.msk [vmem:[#allocation2 + $0xc] sm:$0xff] %vm502, %v1600
    %1610 = vst.msk [vmem:[#allocation2 + $0x14] sm:$0xff] %vm502, %v1601
    %1611 = vst.msk [vmem:[#allocation2 + $0x1c] sm:$0xff] %vm502, %v1602
    %1612 = vst.msk [vmem:[#allocation2 + $0x24] sm:$0xff] %vm502, %v1603
    %1613 = vst.msk [vmem:[#allocation2 + $0x2c] sm:$0xff] %vm502, %v1604
    %1614 = vst.msk [vmem:[#allocation2 + $0x34] sm:$0xff] %vm502, %v1605
    %1615 = vst.msk [vmem:[#allocation2 + $0x3c] sm:$0xff] %vm502, %v1606
    %1616 = vst.msk [vmem:[#allocation2 + $0x44] sm:$0xff] %vm502, %v1607
    %1617 = vst.msk [vmem:[#allocation2] sm:$0xf] %vm574, 0.0
    %1618 = vst.msk [vmem:[#allocation2 + $0x24] sm:$0xf] %vm574, 0.0
    %1619 = vst.msk [vmem:[#allocation2 + $0x48] sm:$0xf] %vm574, 0.0
    %v1620 = vld [vmem:[#allocation2] sm:$0xff]
    %v1621 = vld [vmem:[#allocation2 + $0x8] sm:$0xff]
    %v1622 = vld [vmem:[#allocation2 + $0x10] sm:$0xff]
    %v1623 = vld [vmem:[#allocation2 + $0x18] sm:$0xff]
    %v1624 = vld [vmem:[#allocation2 + $0x20] sm:$0xff]
    %v1625 = vld [vmem:[#allocation2 + $0x28] sm:$0xff]
    %v1626 = vld [vmem:[#allocation2 + $0x30] sm:$0xff]
    %v1627 = vld [vmem:[#allocation2 + $0x38] sm:$0xff]
    %v1628 = vld [vmem:[#allocation2 + $0x40] sm:$0xff]
    %v1629 = vpack.c.bf16 %v1621, %v1620
    %v1630 = vpack.c.bf16 %v1623, %v1622
    %v1631 = vpack.c.bf16 %v1625, %v1624
    %v1632 = vpack.c.bf16 %v1627, %v1626
    %v1633 = vpack.c.bf16 %v1628, %v1628
    %v1634 = vld [vmem:[#allocation3 + $0xa8] sm:$0xff]
    %v1635 = vpack.c.bf16 %v1634, %v1634
    %v1636 = vld [vmem:[#allocation2 + $0x4] sm:$0xff]
    %v1637 = vld [vmem:[#allocation2 + $0xc] sm:$0xff]
    %v1638 = vld [vmem:[#allocation2 + $0x14] sm:$0xff]
    %v1639 = vld [vmem:[#allocation2 + $0x1c] sm:$0xff]
    %v1640 = vld [vmem:[#allocation2 + $0x24] sm:$0xff]
    %v1641 = vld [vmem:[#allocation2 + $0x2c] sm:$0xff]
    %v1642 = vld [vmem:[#allocation2 + $0x34] sm:$0xff]
    %v1643 = vld [vmem:[#allocation2 + $0x3c] sm:$0xff]
    %v1644 = vld [vmem:[#allocation2 + $0x44] sm:$0xff]
    %v1645 = vpack.c.bf16 %v1637, %v1636
    %v1646 = vpack.c.bf16 %v1639, %v1638
    %v1647 = vpack.c.bf16 %v1641, %v1640
    %v1648 = vpack.c.bf16 %v1643, %v1642
    %v1649 = vpack.c.bf16 %v1644, %v1644
    %v1650 = vld [vmem:[#allocation3 + $0xb0] sm:$0xff]
    %v1651 = vpack.c.bf16 %v1650, %v1650
    %v1653 = vsel %vm502, %v1645, 0
    %v1656 = vsel %vm502, %v1646, 0
    %v1659 = vsel %vm502, %v1647, 0
    %v1662 = vsel %vm502, %v1648, 0
    %v1665 = vsel %vm502, %v1649, 0
    %v1668 = vsel %vm625, %v1651, 0
    %1670 = vmatpush.bf16.msra.mxu0 0
    %1671 = vmatpush.bf16.msra.mxu0 0
    %1672 = vmatpush.bf16.msra.mxu0 0
    %1673 = vmatpush.bf16.msra.mxu0 0
    %1674 = vmatpush.bf16.msra.mxu0 0
    %1675 = vmatpush.bf16.msra.mxu0 0
    %1676 = vmatpush.bf16.msra.mxu0 0
    %1677 = vmatpush.bf16.msra.mxu0 %v1668
    %1678 = vmatmul.bf16.gmra.mxu0 %v1653
    %v1679 = vpop.f32.mrf.mxu0
    %v1680 = vadd.f32 0.0, %v1679
    %v1681 = vpop.f32.mrf.mxu0
    %v1682 = vadd.f32 0.0, %v1681
    %1683 = vmatmul.bf16.gmra.mxu0 %v1656
    %v1684 = vpop.f32.mrf.mxu0
    %v1685 = vadd.f32 0.0, %v1684
    %v1686 = vpop.f32.mrf.mxu0
    %v1687 = vadd.f32 0.0, %v1686
    %1688 = vmatmul.bf16.gmra.mxu0 %v1659
    %v1689 = vpop.f32.mrf.mxu0
    %v1690 = vadd.f32 0.0, %v1689
    %v1691 = vpop.f32.mrf.mxu0
    %v1692 = vadd.f32 0.0, %v1691
    %1693 = vmatmul.bf16.gmra.mxu0 %v1662
    %v1694 = vpop.f32.mrf.mxu0
    %v1695 = vadd.f32 0.0, %v1694
    %v1696 = vpop.f32.mrf.mxu0
    %v1697 = vadd.f32 0.0, %v1696
    %1698 = vmatmul.bf16.gmra.mxu0 %v1665
    %v1699 = vpop.f32.mrf.mxu0
    %v1700 = vadd.f32 0.0, %v1699
    %v1701 = vpop.f32.mrf.mxu0
    %1702 = vdwg.mxu0
    %v1704 = vsel %vm502, %v1629, 0
    %v1707 = vsel %vm502, %v1630, 0
    %v1710 = vsel %vm502, %v1631, 0
    %v1713 = vsel %vm502, %v1632, 0
    %v1716 = vsel %vm502, %v1633, 0
    %v1719 = vsel %vm625, %v1635, 0
    %1721 = vmatpush.bf16.msra.mxu0 0
    %1722 = vmatpush.bf16.msra.mxu0 0
    %1723 = vmatpush.bf16.msra.mxu0 0
    %1724 = vmatpush.bf16.msra.mxu0 0
    %1725 = vmatpush.bf16.msra.mxu0 0
    %1726 = vmatpush.bf16.msra.mxu0 0
    %1727 = vmatpush.bf16.msra.mxu0 0
    %1728 = vmatpush.bf16.msra.mxu0 %v1719
    %1729 = vmatmul.bf16.gmra.mxu0 %v1704
    %v1730 = vpop.f32.mrf.mxu0
    %v1731 = vadd.f32 %v1680, %v1730
    %v1732 = vpop.f32.mrf.mxu0
    %v1733 = vadd.f32 %v1682, %v1732
    %1734 = vmatmul.bf16.gmra.mxu0 %v1707
    %v1735 = vpop.f32.mrf.mxu0
    %v1736 = vadd.f32 %v1685, %v1735
    %v1737 = vpop.f32.mrf.mxu0
    %v1738 = vadd.f32 %v1687, %v1737
    %1739 = vmatmul.bf16.gmra.mxu0 %v1710
    %v1740 = vpop.f32.mrf.mxu0
    %v1741 = vadd.f32 %v1690, %v1740
    %v1742 = vpop.f32.mrf.mxu0
    %v1743 = vadd.f32 %v1692, %v1742
    %1744 = vmatmul.bf16.gmra.mxu0 %v1713
    %v1745 = vpop.f32.mrf.mxu0
    %v1746 = vadd.f32 %v1695, %v1745
    %v1747 = vpop.f32.mrf.mxu0
    %v1748 = vadd.f32 %v1697, %v1747
    %1749 = vmatmul.bf16.gmra.mxu0 %v1716
    %v1750 = vpop.f32.mrf.mxu0
    %v1751 = vadd.f32 %v1700, %v1750
    %v1752 = vpop.f32.mrf.mxu0
    %1753 = vdwg.mxu0
    %v1754 = vld [vmem:[#allocation2 + $0x8] sm:$0xff]
    %v1755 = vld [vmem:[#allocation2 + $0x10] sm:$0xff]
    %v1756 = vld [vmem:[#allocation2 + $0x18] sm:$0xff]
    %v1757 = vld [vmem:[#allocation2 + $0x20] sm:$0xff]
    %v1758 = vld [vmem:[#allocation2 + $0x28] sm:$0xff]
    %v1759 = vld [vmem:[#allocation2 + $0x30] sm:$0xff]
    %v1760 = vld [vmem:[#allocation2 + $0x38] sm:$0xff]
    %v1761 = vld [vmem:[#allocation2 + $0x40] sm:$0xff]
    %v1762 = vld [vmem:[#allocation2 + $0x48] sm:$0xff]
    %v1763 = vpack.c.bf16 %v1755, %v1754
    %v1764 = vpack.c.bf16 %v1757, %v1756
    %v1765 = vpack.c.bf16 %v1759, %v1758
    %v1766 = vpack.c.bf16 %v1761, %v1760
    %v1767 = vpack.c.bf16 %v1762, %v1762
    %v1768 = vld [vmem:[#allocation3 + $0xb8] sm:$0xff]
    %v1769 = vpack.c.bf16 %v1768, %v1768
    %v1771 = vsel %vm502, %v1763, 0
    %v1774 = vsel %vm502, %v1764, 0
    %v1777 = vsel %vm502, %v1765, 0
    %v1780 = vsel %vm502, %v1766, 0
    %v1783 = vsel %vm502, %v1767, 0
    %v1786 = vsel %vm625, %v1769, 0
    %1788 = vmatpush.bf16.msra.mxu0 0
    %1789 = vmatpush.bf16.msra.mxu0 0
    %1790 = vmatpush.bf16.msra.mxu0 0
    %1791 = vmatpush.bf16.msra.mxu0 0
    %1792 = vmatpush.bf16.msra.mxu0 0
    %1793 = vmatpush.bf16.msra.mxu0 0
    %1794 = vmatpush.bf16.msra.mxu0 0
    %1795 = vmatpush.bf16.msra.mxu0 %v1786
    %1796 = vmatmul.bf16.gmra.mxu0 %v1771
    %v1797 = vpop.f32.mrf.mxu0
    %v1798 = vadd.f32 0.0, %v1797
    %v1799 = vpop.f32.mrf.mxu0
    %v1800 = vadd.f32 0.0, %v1799
    %1801 = vmatmul.bf16.gmra.mxu0 %v1774
    %v1802 = vpop.f32.mrf.mxu0
    %v1803 = vadd.f32 0.0, %v1802
    %v1804 = vpop.f32.mrf.mxu0
    %v1805 = vadd.f32 0.0, %v1804
    %1806 = vmatmul.bf16.gmra.mxu0 %v1777
    %v1807 = vpop.f32.mrf.mxu0
    %v1808 = vadd.f32 0.0, %v1807
    %v1809 = vpop.f32.mrf.mxu0
    %v1810 = vadd.f32 0.0, %v1809
    %1811 = vmatmul.bf16.gmra.mxu0 %v1780
    %v1812 = vpop.f32.mrf.mxu0
    %v1813 = vadd.f32 0.0, %v1812
    %v1814 = vpop.f32.mrf.mxu0
    %v1815 = vadd.f32 0.0, %v1814
    %1816 = vmatmul.bf16.gmra.mxu0 %v1783
    %v1817 = vpop.f32.mrf.mxu0
    %v1818 = vadd.f32 0.0, %v1817
    %v1819 = vpop.f32.mrf.mxu0
    %1820 = vdwg.mxu0
    %v1821 = vadd.f32 %v1731, %v1798
    %v1822 = vadd.f32 %v1733, %v1800
    %v1823 = vadd.f32 %v1736, %v1803
    %v1824 = vadd.f32 %v1738, %v1805
    %v1825 = vadd.f32 %v1741, %v1808
    %v1826 = vadd.f32 %v1743, %v1810
    %v1827 = vadd.f32 %v1746, %v1813
    %v1828 = vadd.f32 %v1748, %v1815
    %v1829 = vadd.f32 %v1751, %v1818
    %v1830 = vld [vmem:[#allocation3 + $0xc0] sm:$0x1]
    %v1831 = vperm.slane %v1830, 0
    %v1832 = vadd.f32 %v1821, %v1831
    %v1833 = vadd.f32 %v1822, %v1831
    %v1834 = vadd.f32 %v1823, %v1831
    %v1835 = vadd.f32 %v1824, %v1831
    %v1836 = vadd.f32 %v1825, %v1831
    %v1837 = vadd.f32 %v1826, %v1831
    %v1838 = vadd.f32 %v1827, %v1831
    %v1839 = vadd.f32 %v1828, %v1831
    %v1840 = vadd.f32 %v1829, %v1831
    %v1841 = vmax.f32 %v1832, 0.0
    %v1842 = vmax.f32 %v1833, 0.0
    %v1843 = vmax.f32 %v1834, 0.0
    %v1844 = vmax.f32 %v1835, 0.0
    %v1845 = vmax.f32 %v1836, 0.0
    %v1846 = vmax.f32 %v1837, 0.0
    %v1847 = vmax.f32 %v1838, 0.0
    %v1848 = vmax.f32 %v1839, 0.0
    %v1849 = vmax.f32 %v1840, 0.0
    %1850 = vst.msk [vmem:[#allocation2 + $0x4] sm:$0xff] %vm809, %v1841
    %1851 = vst.msk [vmem:[#allocation2 + $0xc] sm:$0xff] %vm809, %v1842
    %1852 = vst.msk [vmem:[#allocation2 + $0x14] sm:$0xff] %vm809, %v1843
    %1853 = vst.msk [vmem:[#allocation2 + $0x1c] sm:$0xff] %vm809, %v1844
    %1854 = vst.msk [vmem:[#allocation2 + $0x24] sm:$0xff] %vm809, %v1845
    %1855 = vst.msk [vmem:[#allocation2 + $0x2c] sm:$0xff] %vm809, %v1846
    %1856 = vst.msk [vmem:[#allocation2 + $0x34] sm:$0xff] %vm809, %v1847
    %1857 = vst.msk [vmem:[#allocation2 + $0x3c] sm:$0xff] %vm809, %v1848
    %1858 = vst.msk [vmem:[#allocation2 + $0x44] sm:$0xff] %vm809, %v1849
    %1859 = vst.msk [vmem:[#allocation2] sm:$0xf] %vm819, 0.0
    %1860 = vst.msk [vmem:[#allocation2 + $0x24] sm:$0xf] %vm819, 0.0
    %1861 = vst.msk [vmem:[#allocation2 + $0x48] sm:$0xf] %vm819, 0.0
    %v1862 = vld [vmem:[#allocation2] sm:$0xff]
    %v1863 = vld [vmem:[#allocation2 + $0x8] sm:$0xff]
    %v1864 = vld [vmem:[#allocation2 + $0x10] sm:$0xff]
    %v1865 = vld [vmem:[#allocation2 + $0x18] sm:$0xff]
    %v1866 = vld [vmem:[#allocation2 + $0x20] sm:$0xff]
    %v1867 = vld [vmem:[#allocation2 + $0x28] sm:$0xff]
    %v1868 = vld [vmem:[#allocation2 + $0x30] sm:$0xff]
    %v1869 = vld [vmem:[#allocation2 + $0x38] sm:$0xff]
    %v1870 = vld [vmem:[#allocation2 + $0x40] sm:$0xff]
    %v1871 = vpack.c.bf16 %v1863, %v1862
    %v1872 = vpack.c.bf16 %v1865, %v1864
    %v1873 = vpack.c.bf16 %v1867, %v1866
    %v1874 = vpack.c.bf16 %v1869, %v1868
    %v1875 = vpack.c.bf16 %v1870, %v1870
    %v1876 = vld [vmem:[#allocation3 + $0xc8] sm:$0xff]
    %v1877 = vld [vmem:[#allocation3 + $0xd0] sm:$0xff]
    %v1878 = vpack.c.bf16 %v1877, %v1876
    %v1879 = vld [vmem:[#allocation2 + $0x4] sm:$0xff]
    %v1880 = vld [vmem:[#allocation2 + $0xc] sm:$0xff]
    %v1881 = vld [vmem:[#allocation2 + $0x14] sm:$0xff]
    %v1882 = vld [vmem:[#allocation2 + $0x1c] sm:$0xff]
    %v1883 = vld [vmem:[#allocation2 + $0x24] sm:$0xff]
    %v1884 = vld [vmem:[#allocation2 + $0x2c] sm:$0xff]
    %v1885 = vld [vmem:[#allocation2 + $0x34] sm:$0xff]
    %v1886 = vld [vmem:[#allocation2 + $0x3c] sm:$0xff]
    %v1887 = vld [vmem:[#allocation2 + $0x44] sm:$0xff]
    %v1888 = vpack.c.bf16 %v1880, %v1879
    %v1889 = vpack.c.bf16 %v1882, %v1881
    %v1890 = vpack.c.bf16 %v1884, %v1883
    %v1891 = vpack.c.bf16 %v1886, %v1885
    %v1892 = vpack.c.bf16 %v1887, %v1887
    %v1893 = vld [vmem:[#allocation3 + $0xd8] sm:$0xff]
    %v1894 = vld [vmem:[#allocation3 + $0xe0] sm:$0xff]
    %v1895 = vpack.c.bf16 %v1894, %v1893
    %v1897 = vsel %vm809, %v1888, 0
    %v1900 = vsel %vm809, %v1889, 0
    %v1903 = vsel %vm809, %v1890, 0
    %v1906 = vsel %vm809, %v1891, 0
    %v1909 = vsel %vm809, %v1892, 0
    %1911 = vmatpush.bf16.msra.mxu0 0
    %1912 = vmatpush.bf16.msra.mxu0 0
    %1913 = vmatpush.bf16.msra.mxu0 0
    %1914 = vmatpush.bf16.msra.mxu0 0
    %1915 = vmatpush.bf16.msra.mxu0 0
    %1916 = vmatpush.bf16.msra.mxu0 0
    %1917 = vmatpush.bf16.msra.mxu0 0
    %1918 = vmatpush.bf16.msra.mxu0 %v1895
    %1919 = vmatmul.bf16.gmra.mxu0 %v1897
    %v1920 = vpop.f32.mrf.mxu0
    %v1921 = vadd.f32 0.0, %v1920
    %v1922 = vpop.f32.mrf.mxu0
    %v1923 = vadd.f32 0.0, %v1922
    %1924 = vmatmul.bf16.gmra.mxu0 %v1900
    %v1925 = vpop.f32.mrf.mxu0
    %v1926 = vadd.f32 0.0, %v1925
    %v1927 = vpop.f32.mrf.mxu0
    %v1928 = vadd.f32 0.0, %v1927
    %1929 = vmatmul.bf16.gmra.mxu0 %v1903
    %v1930 = vpop.f32.mrf.mxu0
    %v1931 = vadd.f32 0.0, %v1930
    %v1932 = vpop.f32.mrf.mxu0
    %v1933 = vadd.f32 0.0, %v1932
    %1934 = vmatmul.bf16.gmra.mxu0 %v1906
    %v1935 = vpop.f32.mrf.mxu0
    %v1936 = vadd.f32 0.0, %v1935
    %v1937 = vpop.f32.mrf.mxu0
    %v1938 = vadd.f32 0.0, %v1937
    %1939 = vmatmul.bf16.gmra.mxu0 %v1909
    %v1940 = vpop.f32.mrf.mxu0
    %v1941 = vadd.f32 0.0, %v1940
    %v1942 = vpop.f32.mrf.mxu0
    %1943 = vdwg.mxu0
    %v1945 = vsel %vm809, %v1871, 0
    %v1948 = vsel %vm809, %v1872, 0
    %v1951 = vsel %vm809, %v1873, 0
    %v1954 = vsel %vm809, %v1874, 0
    %v1957 = vsel %vm809, %v1875, 0
    %1959 = vmatpush.bf16.msra.mxu0 0
    %1960 = vmatpush.bf16.msra.mxu0 0
    %1961 = vmatpush.bf16.msra.mxu0 0
    %1962 = vmatpush.bf16.msra.mxu0 0
    %1963 = vmatpush.bf16.msra.mxu0 0
    %1964 = vmatpush.bf16.msra.mxu0 0
    %1965 = vmatpush.bf16.msra.mxu0 0
    %1966 = vmatpush.bf16.msra.mxu0 %v1878
    %1967 = vmatmul.bf16.gmra.mxu0 %v1945
    %v1968 = vpop.f32.mrf.mxu0
    %v1969 = vadd.f32 %v1921, %v1968
    %v1970 = vpop.f32.mrf.mxu0
    %v1971 = vadd.f32 %v1923, %v1970
    %1972 = vmatmul.bf16.gmra.mxu0 %v1948
    %v1973 = vpop.f32.mrf.mxu0
    %v1974 = vadd.f32 %v1926, %v1973
    %v1975 = vpop.f32.mrf.mxu0
    %v1976 = vadd.f32 %v1928, %v1975
    %1977 = vmatmul.bf16.gmra.mxu0 %v1951
    %v1978 = vpop.f32.mrf.mxu0
    %v1979 = vadd.f32 %v1931, %v1978
    %v1980 = vpop.f32.mrf.mxu0
    %v1981 = vadd.f32 %v1933, %v1980
    %1982 = vmatmul.bf16.gmra.mxu0 %v1954
    %v1983 = vpop.f32.mrf.mxu0
    %v1984 = vadd.f32 %v1936, %v1983
    %v1985 = vpop.f32.mrf.mxu0
    %v1986 = vadd.f32 %v1938, %v1985
    %1987 = vmatmul.bf16.gmra.mxu0 %v1957
    %v1988 = vpop.f32.mrf.mxu0
    %v1989 = vadd.f32 %v1941, %v1988
    %v1990 = vpop.f32.mrf.mxu0
    %1991 = vdwg.mxu0
    %v1992 = vld [vmem:[#allocation2 + $0x8] sm:$0xff]
    %v1993 = vld [vmem:[#allocation2 + $0x10] sm:$0xff]
    %v1994 = vld [vmem:[#allocation2 + $0x18] sm:$0xff]
    %v1995 = vld [vmem:[#allocation2 + $0x20] sm:$0xff]
    %v1996 = vld [vmem:[#allocation2 + $0x28] sm:$0xff]
    %v1997 = vld [vmem:[#allocation2 + $0x30] sm:$0xff]
    %v1998 = vld [vmem:[#allocation2 + $0x38] sm:$0xff]
    %v1999 = vld [vmem:[#allocation2 + $0x40] sm:$0xff]
    %v2000 = vld [vmem:[#allocation2 + $0x48] sm:$0xff]
    %v2001 = vpack.c.bf16 %v1993, %v1992
    %v2002 = vpack.c.bf16 %v1995, %v1994
    %v2003 = vpack.c.bf16 %v1997, %v1996
    %v2004 = vpack.c.bf16 %v1999, %v1998
    %v2005 = vpack.c.bf16 %v2000, %v2000
    %v2006 = vld [vmem:[#allocation3 + $0xe8] sm:$0xff]
    %v2007 = vld [vmem:[#allocation3 + $0xf0] sm:$0xff]
    %v2008 = vpack.c.bf16 %v2007, %v2006
    %v2010 = vsel %vm809, %v2001, 0
    %v2013 = vsel %vm809, %v2002, 0
    %v2016 = vsel %vm809, %v2003, 0
    %v2019 = vsel %vm809, %v2004, 0
    %v2022 = vsel %vm809, %v2005, 0
    %2024 = vmatpush.bf16.msra.mxu0 0
    %2025 = vmatpush.bf16.msra.mxu0 0
    %2026 = vmatpush.bf16.msra.mxu0 0
    %2027 = vmatpush.bf16.msra.mxu0 0
    %2028 = vmatpush.bf16.msra.mxu0 0
    %2029 = vmatpush.bf16.msra.mxu0 0
    %2030 = vmatpush.bf16.msra.mxu0 0
    %2031 = vmatpush.bf16.msra.mxu0 %v2008
    %2032 = vmatmul.bf16.gmra.mxu0 %v2010
    %v2033 = vpop.f32.mrf.mxu0
    %v2034 = vadd.f32 0.0, %v2033
    %v2035 = vpop.f32.mrf.mxu0
    %v2036 = vadd.f32 0.0, %v2035
    %2037 = vmatmul.bf16.gmra.mxu0 %v2013
    %v2038 = vpop.f32.mrf.mxu0
    %v2039 = vadd.f32 0.0, %v2038
    %v2040 = vpop.f32.mrf.mxu0
    %v2041 = vadd.f32 0.0, %v2040
    %2042 = vmatmul.bf16.gmra.mxu0 %v2016
    %v2043 = vpop.f32.mrf.mxu0
    %v2044 = vadd.f32 0.0, %v2043
    %v2045 = vpop.f32.mrf.mxu0
    %v2046 = vadd.f32 0.0, %v2045
    %2047 = vmatmul.bf16.gmra.mxu0 %v2019
    %v2048 = vpop.f32.mrf.mxu0
    %v2049 = vadd.f32 0.0, %v2048
    %v2050 = vpop.f32.mrf.mxu0
    %v2051 = vadd.f32 0.0, %v2050
    %2052 = vmatmul.bf16.gmra.mxu0 %v2022
    %v2053 = vpop.f32.mrf.mxu0
    %v2054 = vadd.f32 0.0, %v2053
    %v2055 = vpop.f32.mrf.mxu0
    %2056 = vdwg.mxu0
    %v2057 = vadd.f32 %v1969, %v2034
    %v2058 = vadd.f32 %v1971, %v2036
    %v2059 = vadd.f32 %v1974, %v2039
    %v2060 = vadd.f32 %v1976, %v2041
    %v2061 = vadd.f32 %v1979, %v2044
    %v2062 = vadd.f32 %v1981, %v2046
    %v2063 = vadd.f32 %v1984, %v2049
    %v2064 = vadd.f32 %v1986, %v2051
    %v2065 = vadd.f32 %v1989, %v2054
    %v2066 = vld [vmem:[#allocation3 + $0xf8] sm:$0x1]
    %v2067 = vperm.slane %v2066, 0
    %v2068 = vadd.f32 %v2057, %v2067
    %v2069 = vadd.f32 %v2058, %v2067
    %v2070 = vadd.f32 %v2059, %v2067
    %v2071 = vadd.f32 %v2060, %v2067
    %v2072 = vadd.f32 %v2061, %v2067
    %v2073 = vadd.f32 %v2062, %v2067
    %v2074 = vadd.f32 %v2063, %v2067
    %v2075 = vadd.f32 %v2064, %v2067
    %v2076 = vadd.f32 %v2065, %v2067
    %v2077 = vmax.f32 %v2068, 0.0
    %v2078 = vmax.f32 %v2069, 0.0
    %v2079 = vmax.f32 %v2070, 0.0
    %v2080 = vmax.f32 %v2071, 0.0
    %v2081 = vmax.f32 %v2072, 0.0
    %v2082 = vmax.f32 %v2073, 0.0
    %v2083 = vmax.f32 %v2074, 0.0
    %v2084 = vmax.f32 %v2075, 0.0
    %v2085 = vmax.f32 %v2076, 0.0
    %v2086 = vld [vmem:[#allocation3 + $0x100] sm:$0x1]
    %v2087 = vperm.slane %v2086, 0
    %v2088 = vmul.f32 %v2077, %v2087
    %v2089 = vmul.f32 %v2078, %v2087
    %v2090 = vmul.f32 %v2079, %v2087
    %v2091 = vmul.f32 %v2080, %v2087
    %v2092 = vmul.f32 %v2081, %v2087
    %v2093 = vmul.f32 %v2082, %v2087
    %v2094 = vmul.f32 %v2083, %v2087
    %v2095 = vmul.f32 %v2084, %v2087
    %v2096 = vmul.f32 %v2085, %v2087
    %v2097 = vld [vmem:[#allocation3 + $0x108] sm:$0x1]
    %v2098 = vperm.slane %v2097, 0
    %v2099 = vadd.f32 %v2088, %v2098
    %v2100 = vadd.f32 %v2089, %v2098
    %v2101 = vadd.f32 %v2090, %v2098
    %v2102 = vadd.f32 %v2091, %v2098
    %v2103 = vadd.f32 %v2092, %v2098
    %v2104 = vadd.f32 %v2093, %v2098
    %v2105 = vadd.f32 %v2094, %v2098
    %v2106 = vadd.f32 %v2095, %v2098
    %v2107 = vadd.f32 %v2096, %v2098
    %2108 = vst.msk [vmem:[#allocation2] sm:$0xff] %vm809, %v2099
    %2109 = vst.msk [vmem:[#allocation2 + $0x8] sm:$0xff] %vm809, %v2100
    %2110 = vst.msk [vmem:[#allocation2 + $0x10] sm:$0xff] %vm809, %v2101
    %2111 = vst.msk [vmem:[#allocation2 + $0x18] sm:$0xff] %vm809, %v2102
    %2112 = vst.msk [vmem:[#allocation2 + $0x20] sm:$0xff] %vm809, %v2103
    %2113 = vst.msk [vmem:[#allocation2 + $0x28] sm:$0xff] %vm809, %v2104
    %2114 = vst.msk [vmem:[#allocation2 + $0x30] sm:$0xff] %vm809, %v2105
    %2115 = vst.msk [vmem:[#allocation2 + $0x38] sm:$0xff] %vm809, %v2106
    %2116 = vst.msk [vmem:[#allocation2 + $0x40] sm:$0xff] %vm809, %v2107
    %v2117 = vld [vmem:[#allocation2] ss:$2 sm:$0xff]
    %v2118 = vld [vmem:[%s522] ss:$2 sm:$0xff]
    %v2119 = vld [vmem:[%s524] ss:$2 sm:$0xff]
    %v2120 = vld [vmem:[%s526] ss:$2 sm:$0xff]
    %v2121 = vld [vmem:[%s528] ss:$2 sm:$0xf]
    %v2122 = vld [vmem:[%s538] ss:$2 sm:$0xff]
    %v2123 = vld [vmem:[%s540] ss:$2 sm:$0xff]
    %v2124 = vld [vmem:[%s542] ss:$2 sm:$0xff]
    %v2125 = vld [vmem:[%s544] ss:$2 sm:$0xff]
    %v2126 = vld [vmem:[%s546] ss:$2 sm:$0xf]
    %v2127 = vmax.f32 %v2117, %v2122
    %v2128 = vmax.f32 %v2118, %v2123
    %v2129 = vmax.f32 %v2119, %v2124
    %v2130 = vmax.f32 %v2120, %v2125
    %v2131 = vmax.f32 %v2121, %v2126
    %v2132 = vld [vmem:[#allocation3 + $0x180] sm:$0xff]
    %v2133 = vld [vmem:[#allocation3 + $0x188] sm:$0xff]
    %v2134 = vpack.c.bf16 %v2133, %v2132
    %v2135 = vld [vmem:[#allocation3 + $0x190] sm:$0x1]
    %v2136 = vld [vmem:[#allocation3 + $0x198] sm:$0xff]
    %v2137 = vpack.c.bf16 %v2136, %v2136
    %v2138 = vld [vmem:[#allocation3 + $0x1a0] sm:$0x1]
    %v2139 = vld [vmem:[#allocation3 + $0x130] sm:$0x1]
    %v2140 = vsel %vm809, %v1088, 0.0
    %v2141 = vsel %vm809, %v1089, 0.0
    %v2142 = vadd.f32 %v2140, %v2141
    %v2143 = vrot.slane %v2142, 4
    %v2144 = vadd.f32 %v2142, %v2143
    %v2145 = vrot.slane %v2144, 2
    %v2146 = vadd.f32 %v2144, %v2145
    %v2147 = vrot.slane %v2146, 1
    %v2148 = vadd.f32 %v2146, %v2147
    %v2149 = vrcp.pop 16.0
    %v2150 = vmul.f32 16.0, %v2149
    %v2151 = vsub.f32 1.0, %v2150
    %v2152 = vmul.f32 %v2149, %v2151
    %v2153 = vadd.f32 %v2149, %v2152
    %vm2154 = vweird.f32 %v2149
    %v2155 = vsel %vm2154, %v2149, %v2153
    %v2156 = vmul.f32 %v2148, %v2155
    %v2157 = vpack.c.bf16 %v2156, %v2156
    %v2158 = vld [vmem:[#allocation3 + $0x110] sm:$0xff]
    %v2159 = vld [vmem:[#allocation3 + $0x118] sm:$0xff]
    %v2160 = vpack.c.bf16 %v2159, %v2158
    %v2162 = vsel %vm809, %v2157, 0
    %2164 = vmatpush.bf16.msra.mxu0 0
    %2165 = vmatpush.bf16.msra.mxu0 0
    %2166 = vmatpush.bf16.msra.mxu0 0
    %2167 = vmatpush.bf16.msra.mxu0 0
    %2168 = vmatpush.bf16.msra.mxu0 0
    %2169 = vmatpush.bf16.msra.mxu0 0
    %2170 = vmatpush.bf16.msra.mxu0 0
    %2171 = vmatpush.bf16.msra.mxu0 %v2160
    %2172 = vmatmul.bf16.gmra.mxu0 %v2162
    %v2173 = vpop.f32.mrf.mxu0
    %v2174 = vadd.f32 0.0, %v2173
    %v2175 = vpop.f32.mrf.mxu0
    %2176 = vdwg.mxu0
    %v2177 = vadd.f32 %v2139, %v2174
    %v2178 = vsel %vm809, %v2127, 0.0
    %v2179 = vsel %vm809, %v2128, 0.0
    %v2180 = vadd.f32 %v2178, %v2179
    %v2181 = vrot.slane %v2180, 4
    %v2182 = vadd.f32 %v2180, %v2181
    %v2183 = vrot.slane %v2182, 2
    %v2184 = vadd.f32 %v2182, %v2183
    %v2185 = vrot.slane %v2184, 1
    %v2186 = vadd.f32 %v2184, %v2185
    %v2187 = vmul.f32 %v2186, %v2155
    %v2188 = vpack.c.bf16 %v2187, %v2187
    %v2189 = vld [vmem:[#allocation3 + $0x120] sm:$0xff]
    %v2190 = vld [vmem:[#allocation3 + $0x128] sm:$0xff]
    %v2191 = vpack.c.bf16 %v2190, %v2189
    %v2193 = vsel %vm809, %v2188, 0
    %2195 = vmatpush.bf16.msra.mxu0 0
    %2196 = vmatpush.bf16.msra.mxu0 0
    %2197 = vmatpush.bf16.msra.mxu0 0
    %2198 = vmatpush.bf16.msra.mxu0 0
    %2199 = vmatpush.bf16.msra.mxu0 0
    %2200 = vmatpush.bf16.msra.mxu0 0
    %2201 = vmatpush.bf16.msra.mxu0 0
    %2202 = vmatpush.bf16.msra.mxu0 %v2191
    %2203 = vmatmul.bf16.gmra.mxu0 %v2193
    %v2204 = vpop.f32.mrf.mxu0
    %v2205 = vadd.f32 0.0, %v2204
    %v2206 = vpop.f32.mrf.mxu0
    %2207 = vdwg.mxu0
    %v2208 = vadd.f32 %v2177, %v2205
    %v2209 = vmax.f32 %v2208, 0.0
    %v2210 = vld [vmem:[#allocation3 + $0x178] sm:$0x1]
    %v2211 = vpack.c.bf16 %v2209, %v2209
    %v2212 = vld [vmem:[#allocation3 + $0x138] sm:$0xff]
    %v2213 = vpack.c.bf16 %v2212, %v2212
    %v2214 = vld [vmem:[#allocation3 + $0x148] sm:$0x1]
    %v2216 = vsel %vm502, %v2211, 0
    %v2219 = vsel %vm625, %v2213, 0
    %2221 = vmatpush.bf16.msra.mxu0 0
    %2222 = vmatpush.bf16.msra.mxu0 0
    %2223 = vmatpush.bf16.msra.mxu0 0
    %2224 = vmatpush.bf16.msra.mxu0 0
    %2225 = vmatpush.bf16.msra.mxu0 0
    %2226 = vmatpush.bf16.msra.mxu0 0
    %2227 = vmatpush.bf16.msra.mxu0 0
    %2228 = vmatpush.bf16.msra.mxu0 %v2219
    %2229 = vmatmul.bf16.gmra.mxu0 %v2216
    %v2230 = vpop.f32.mrf.mxu0
    %v2231 = vadd.f32 %v2214, %v2230
    %v2232 = vpop.f32.mrf.mxu0
    %2233 = vdwg.mxu0
    %v2234 = vxor.u32 %v2231, 2147483648
    %v2235 = vmul.f32 %v2234, 1.442695
    %v2236 = vpow.pop %v2235
    %v2237 = vadd.f32 %v2236, 1.0
    %v2238 = vrcp.pop %v2237
    %v2239 = vmul.f32 %v2237, %v2238
    %v2240 = vsub.f32 1.0, %v2239
    %v2241 = vmul.f32 %v2238, %v2240
    %v2242 = vadd.f32 %v2238, %v2241
    %vm2243 = vweird.f32 %v2237
    %vm2244 = vweird.f32 %v2238
    %vm2245 = vmor %vm2243, %vm2244
    %v2246 = vsel %vm2245, %v2238, %v2242
    %v2247 = vand.u32 2147483647, %v2237
    %vm2248 = vcmp.eq.f32.partialorder %v2247, 8.507059e+37
    %v2249 = vand.u32 %v2237, 2147483648
    %v2250 = vor.u32 1.1754944e-38, %v2249
    %v2251 = vsel %vm2248, %v2250, %v2246
    %v2252 = vmul.f32 1.0, %v2251
    %v2253 = vperm.slane %v2252, 0
    %v2254 = vmul.f32 %v1088, %v2253
    %v2255 = vmul.f32 %v1089, %v2253
    %v2256 = vpack.c.bf16 %v2255, %v2254
    %v2257 = vld [vmem:[#allocation3 + $0x158] sm:$0xff]
    %v2258 = vld [vmem:[#allocation3 + $0x160] sm:$0xff]
    %v2259 = vpack.c.bf16 %v2258, %v2257
    %v2261 = vsel %vm809, %v2256, 0
    %2263 = vmatpush.bf16.msra.mxu0 0
    %2264 = vmatpush.bf16.msra.mxu0 0
    %2265 = vmatpush.bf16.msra.mxu0 0
    %2266 = vmatpush.bf16.msra.mxu0 0
    %2267 = vmatpush.bf16.msra.mxu0 0
    %2268 = vmatpush.bf16.msra.mxu0 0
    %2269 = vmatpush.bf16.msra.mxu0 0
    %2270 = vmatpush.bf16.msra.mxu0 %v2259
    %2271 = vmatmul.bf16.gmra.mxu0 %v2261
    %v2272 = vpop.f32.mrf.mxu0
    %v2273 = vadd.f32 0.0, %v2272
    %v2274 = vpop.f32.mrf.mxu0
    %v2275 = vadd.f32 0.0, %v2274
    %2276 = vdwg.mxu0
    %v2277 = vperm.slane %v2210, 0
    %v2278 = vadd.f32 %v2277, %v2273
    %v2279 = vadd.f32 %v2277, %v2275
    %v2280 = vld [vmem:[#allocation3 + $0x140] sm:$0xff]
    %v2281 = vpack.c.bf16 %v2280, %v2280
    %v2282 = vld [vmem:[#allocation3 + $0x150] sm:$0x1]
    %v2284 = vsel %vm625, %v2281, 0
    %2286 = vmatpush.bf16.msra.mxu0 0
    %2287 = vmatpush.bf16.msra.mxu0 0
    %2288 = vmatpush.bf16.msra.mxu0 0
    %2289 = vmatpush.bf16.msra.mxu0 0
    %2290 = vmatpush.bf16.msra.mxu0 0
    %2291 = vmatpush.bf16.msra.mxu0 0
    %2292 = vmatpush.bf16.msra.mxu0 0
    %2293 = vmatpush.bf16.msra.mxu0 %v2284
    %2294 = vmatmul.bf16.gmra.mxu0 %v2216
    %v2295 = vpop.f32.mrf.mxu0
    %v2296 = vadd.f32 %v2282, %v2295
    %v2297 = vpop.f32.mrf.mxu0
    %2298 = vdwg.mxu0
    %v2299 = vxor.u32 %v2296, 2147483648
    %v2300 = vmul.f32 %v2299, 1.442695
    %v2301 = vpow.pop %v2300
    %v2302 = vadd.f32 %v2301, 1.0
    %v2303 = vrcp.pop %v2302
    %v2304 = vmul.f32 %v2302, %v2303
    %v2305 = vsub.f32 1.0, %v2304
    %v2306 = vmul.f32 %v2303, %v2305
    %v2307 = vadd.f32 %v2303, %v2306
    %vm2308 = vweird.f32 %v2302
    %vm2309 = vweird.f32 %v2303
    %vm2310 = vmor %vm2308, %vm2309
    %v2311 = vsel %vm2310, %v2303, %v2307
    %v2312 = vand.u32 2147483647, %v2302
    %vm2313 = vcmp.eq.f32.partialorder %v2312, 8.507059e+37
    %v2314 = vand.u32 %v2302, 2147483648
    %v2315 = vor.u32 1.1754944e-38, %v2314
    %v2316 = vsel %vm2313, %v2315, %v2311
    %v2317 = vmul.f32 1.0, %v2316
    %v2318 = vperm.slane %v2317, 0
    %v2319 = vmul.f32 %v2127, %v2318
    %v2320 = vmul.f32 %v2128, %v2318
    %v2321 = vpack.c.bf16 %v2320, %v2319
    %v2322 = vld [vmem:[#allocation3 + $0x168] sm:$0xff]
    %v2323 = vld [vmem:[#allocation3 + $0x170] sm:$0xff]
    %v2324 = vpack.c.bf16 %v2323, %v2322
    %v2326 = vsel %vm809, %v2321, 0
    %2328 = vmatpush.bf16.msra.mxu0 0
    %2329 = vmatpush.bf16.msra.mxu0 0
    %2330 = vmatpush.bf16.msra.mxu0 0
    %2331 = vmatpush.bf16.msra.mxu0 0
    %2332 = vmatpush.bf16.msra.mxu0 0
    %2333 = vmatpush.bf16.msra.mxu0 0
    %2334 = vmatpush.bf16.msra.mxu0 0
    %2335 = vmatpush.bf16.msra.mxu0 %v2324
    %2336 = vmatmul.bf16.gmra.mxu0 %v2326
    %v2337 = vpop.f32.mrf.mxu0
    %v2338 = vadd.f32 0.0, %v2337
    %v2339 = vpop.f32.mrf.mxu0
    %v2340 = vadd.f32 0.0, %v2339
    %2341 = vdwg.mxu0
    %v2342 = vadd.f32 %v2278, %v2338
    %v2343 = vadd.f32 %v2279, %v2340
    %v2344 = vmin.f32 %v2342, 20.0
    %v2345 = vmin.f32 %v2343, 20.0
    %v2346 = vmul.f32 %v2344, 1.442695
    %v2347 = vpow.pop %v2346
    %v2348 = vmul.f32 %v2345, 1.442695
    %v2349 = vpow.pop %v2348
    %v2350 = vadd.f32 %v2347, 2.0
    %v2351 = vadd.f32 %v2349, 2.0
    %v2352 = vmul.f32 %v2347, %v2350
    %v2353 = vmul.f32 %v2349, %v2351
    %v2354 = vmul.f32 %v2342, %v2352
    %v2355 = vmul.f32 %v2343, %v2353
    %v2356 = vadd.f32 %v2352, 2.0
    %v2357 = vadd.f32 %v2353, 2.0
    %v2358 = vrcp.pop %v2356
    %v2359 = vrcp.pop %v2357
    %v2360 = vmul.f32 %v2354, %v2358
    %v2361 = vmul.f32 %v2355, %v2359
    %vm2362 = vcmp.gt.f32.partialorder %v2342, 20.0
    %vm2363 = vcmp.gt.f32.partialorder %v2343, 20.0
    %v2364 = vsel %vm2362, %v2342, %v2360
    %v2365 = vsel %vm2363, %v2343, %v2361
    %v2366 = vpack.c.bf16 %v2365, %v2364
    %v2367 = vperm.slane %v2135, 0
    %v2369 = vsel %vm809, %v2366, 0
    %2371 = vmatpush.bf16.msra.mxu0 0
    %2372 = vmatpush.bf16.msra.mxu0 0
    %2373 = vmatpush.bf16.msra.mxu0 0
    %2374 = vmatpush.bf16.msra.mxu0 0
    %2375 = vmatpush.bf16.msra.mxu0 0
    %2376 = vmatpush.bf16.msra.mxu0 0
    %2377 = vmatpush.bf16.msra.mxu0 0
    %2378 = vmatpush.bf16.msra.mxu0 %v2134
    %2379 = vmatmul.bf16.gmra.mxu0 %v2369
    %v2380 = vpop.f32.mrf.mxu0
    %v2381 = vadd.f32 %v2367, %v2380
    %v2382 = vpop.f32.mrf.mxu0
    %v2383 = vadd.f32 %v2367, %v2382
    %2384 = vdwg.mxu0
    %v2385 = vmin.f32 %v2381, 20.0
    %v2386 = vmin.f32 %v2383, 20.0
    %v2387 = vmul.f32 %v2385, 1.442695
    %v2388 = vpow.pop %v2387
    %v2389 = vmul.f32 %v2386, 1.442695
    %v2390 = vpow.pop %v2389
    %v2391 = vadd.f32 %v2388, 2.0
    %v2392 = vadd.f32 %v2390, 2.0
    %v2393 = vmul.f32 %v2388, %v2391
    %v2394 = vmul.f32 %v2390, %v2392
    %v2395 = vmul.f32 %v2381, %v2393
    %v2396 = vmul.f32 %v2383, %v2394
    %v2397 = vadd.f32 %v2393, 2.0
    %v2398 = vadd.f32 %v2394, 2.0
    %v2399 = vrcp.pop %v2397
    %v2400 = vrcp.pop %v2398
    %v2401 = vmul.f32 %v2395, %v2399
    %v2402 = vmul.f32 %v2396, %v2400
    %vm2403 = vcmp.gt.f32.partialorder %v2381, 20.0
    %vm2404 = vcmp.gt.f32.partialorder %v2383, 20.0
    %v2405 = vsel %vm2403, %v2381, %v2401
    %v2406 = vsel %vm2404, %v2383, %v2402
    %v2407 = vpack.c.bf16 %v2406, %v2405
    %v2408 = vperm.slane %v2138, 0
    %v2410 = vsel %vm502, %v2407, 0
    %v2413 = vsel %vm625, %v2137, 0
    %2415 = vmatpush.bf16.msra.mxu0 0
    %2416 = vmatpush.bf16.msra.mxu0 0
    %2417 = vmatpush.bf16.msra.mxu0 0
    %2418 = vmatpush.bf16.msra.mxu0 0
    %2419 = vmatpush.bf16.msra.mxu0 0
    %2420 = vmatpush.bf16.msra.mxu0 0
    %2421 = vmatpush.bf16.msra.mxu0 0
    %2422 = vmatpush.bf16.msra.mxu0 %v2413
    %2423 = vmatmul.bf16.gmra.mxu0 %v2410
    %v2424 = vpop.f32.mrf.mxu0
    %v2425 = vadd.f32 %v2408, %v2424
    %v2426 = vpop.f32.mrf.mxu0
    %v2427 = vadd.f32 %v2408, %v2426
    %2428 = vdwg.mxu0
    %2429 = vst.msk [vmem:[%s2] sm:$0xff] %vm36, %v2425
    %2430 = vst.msk [vmem:[%s2 + $0x8] sm:$0xff] %vm36, %v2427
    %v2431 = vld [vmem:[#allocation3 + $0x130] sm:$0x1]
    %vm2435 = vcmask 1045504
    %v2436 = vrot.slane %v1090, 2
    %v2437 = vrot.slane %v1091, 2
    %v2438 = vsel %vm2435, %v2436, %v2437
    %v2439 = vrot.slane %v1092, 2
    %v2440 = vsel %vm2435, %v2437, %v2439
    %v2443 = vsel %vm809, %v2438, 0.0
    %v2444 = vsel %vm809, %v2440, 0.0
    %v2445 = vadd.f32 %v2443, %v2444
    %v2446 = vrot.slane %v2445, 4
    %v2447 = vadd.f32 %v2445, %v2446
    %v2448 = vrot.slane %v2447, 2
    %v2449 = vadd.f32 %v2447, %v2448
    %v2450 = vrot.slane %v2449, 1
    %v2451 = vadd.f32 %v2449, %v2450
    %v2452 = vmul.f32 %v2451, %v2155
    %v2453 = vpack.c.bf16 %v2452, %v2452
    %v2454 = vld [vmem:[#allocation3 + $0x110] sm:$0xff]
    %v2455 = vld [vmem:[#allocation3 + $0x118] sm:$0xff]
    %v2456 = vpack.c.bf16 %v2455, %v2454
    %v2458 = vsel %vm809, %v2453, 0
    %2460 = vmatpush.bf16.msra.mxu0 0
    %2461 = vmatpush.bf16.msra.mxu0 0
    %2462 = vmatpush.bf16.msra.mxu0 0
    %2463 = vmatpush.bf16.msra.mxu0 0
    %2464 = vmatpush.bf16.msra.mxu0 0
    %2465 = vmatpush.bf16.msra.mxu0 0
    %2466 = vmatpush.bf16.msra.mxu0 0
    %2467 = vmatpush.bf16.msra.mxu0 %v2456
    %2468 = vmatmul.bf16.gmra.mxu0 %v2458
    %v2469 = vpop.f32.mrf.mxu0
    %v2470 = vadd.f32 0.0, %v2469
    %v2471 = vpop.f32.mrf.mxu0
    %2472 = vdwg.mxu0
    %v2473 = vadd.f32 %v2431, %v2470
    %v2477 = vrot.slane %v2129, 2
    %v2478 = vrot.slane %v2130, 2
    %v2479 = vsel %vm2435, %v2477, %v2478
    %v2480 = vrot.slane %v2131, 2
    %v2481 = vsel %vm2435, %v2478, %v2480
    %v2484 = vsel %vm809, %v2479, 0.0
    %v2485 = vsel %vm809, %v2481, 0.0
    %v2486 = vadd.f32 %v2484, %v2485
    %v2487 = vrot.slane %v2486, 4
    %v2488 = vadd.f32 %v2486, %v2487
    %v2489 = vrot.slane %v2488, 2
    %v2490 = vadd.f32 %v2488, %v2489
    %v2491 = vrot.slane %v2490, 1
    %v2492 = vadd.f32 %v2490, %v2491
    %v2493 = vmul.f32 %v2492, %v2155
    %v2494 = vpack.c.bf16 %v2493, %v2493
    %v2495 = vld [vmem:[#allocation3 + $0x120] sm:$0xff]
    %v2496 = vld [vmem:[#allocation3 + $0x128] sm:$0xff]
    %v2497 = vpack.c.bf16 %v2496, %v2495
    %v2499 = vsel %vm809, %v2494, 0
    %2501 = vmatpush.bf16.msra.mxu0 0
    %2502 = vmatpush.bf16.msra.mxu0 0
    %2503 = vmatpush.bf16.msra.mxu0 0
    %2504 = vmatpush.bf16.msra.mxu0 0
    %2505 = vmatpush.bf16.msra.mxu0 0
    %2506 = vmatpush.bf16.msra.mxu0 0
    %2507 = vmatpush.bf16.msra.mxu0 0
    %2508 = vmatpush.bf16.msra.mxu0 %v2497
    %2509 = vmatmul.bf16.gmra.mxu0 %v2499
    %v2510 = vpop.f32.mrf.mxu0
    %v2511 = vadd.f32 0.0, %v2510
    %v2512 = vpop.f32.mrf.mxu0
    %2513 = vdwg.mxu0
    %v2514 = vadd.f32 %v2473, %v2511
    %v2515 = vmax.f32 %v2514, 0.0
    %v2516 = vld [vmem:[#allocation3 + $0x178] sm:$0x1]
    %v2517 = vpack.c.bf16 %v2515, %v2515
    %v2518 = vld [vmem:[#allocation3 + $0x138] sm:$0xff]
    %v2519 = vpack.c.bf16 %v2518, %v2518
    %v2520 = vld [vmem:[#allocation3 + $0x148] sm:$0x1]
    %v2522 = vsel %vm502, %v2517, 0
    %v2525 = vsel %vm625, %v2519, 0
    %2527 = vmatpush.bf16.msra.mxu0 0
    %2528 = vmatpush.bf16.msra.mxu0 0
    %2529 = vmatpush.bf16.msra.mxu0 0
    %2530 = vmatpush.bf16.msra.mxu0 0
    %2531 = vmatpush.bf16.msra.mxu0 0
    %2532 = vmatpush.bf16.msra.mxu0 0
    %2533 = vmatpush.bf16.msra.mxu0 0
    %2534 = vmatpush.bf16.msra.mxu0 %v2525
    %2535 = vmatmul.bf16.gmra.mxu0 %v2522
    %v2536 = vpop.f32.mrf.mxu0
    %v2537 = vadd.f32 %v2520, %v2536
    %v2538 = vpop.f32.mrf.mxu0
    %2539 = vdwg.mxu0
    %v2540 = vxor.u32 %v2537, 2147483648
    %v2541 = vmul.f32 %v2540, 1.442695
    %v2542 = vpow.pop %v2541
    %v2543 = vadd.f32 %v2542, 1.0
    %v2544 = vrcp.pop %v2543
    %v2545 = vmul.f32 %v2543, %v2544
    %v2546 = vsub.f32 1.0, %v2545
    %v2547 = vmul.f32 %v2544, %v2546
    %v2548 = vadd.f32 %v2544, %v2547
    %vm2549 = vweird.f32 %v2543
    %vm2550 = vweird.f32 %v2544
    %vm2551 = vmor %vm2549, %vm2550
    %v2552 = vsel %vm2551, %v2544, %v2548
    %v2553 = vand.u32 2147483647, %v2543
    %vm2554 = vcmp.eq.f32.partialorder %v2553, 8.507059e+37
    %v2555 = vand.u32 %v2543, 2147483648
    %v2556 = vor.u32 1.1754944e-38, %v2555
    %v2557 = vsel %vm2554, %v2556, %v2552
    %v2558 = vmul.f32 1.0, %v2557
    %v2559 = vperm.slane %v2558, 0
    %v2560 = vmul.f32 %v1090, %v2559
    %v2561 = vmul.f32 %v1091, %v2559
    %v2562 = vmul.f32 %v1092, %v2559
    %v2563 = vpack.c.bf16 %v2561, %v2560
    %v2564 = vpack.c.bf16 %v2562, %v2562
    %v2565 = vld [vmem:[#allocation3 + $0x158] sm:$0xff]
    %v2566 = vld [vmem:[#allocation3 + $0x160] sm:$0xff]
    %v2567 = vpack.c.bf16 %v2566, %v2565
    %vm2570 = vcmask 1046528
    %v2571 = vrot.slane %v2563, 1
    %v2572 = vrot.slane %v2564, 1
    %v2573 = vsel %vm2570, %v2571, %v2572
    %v2575 = vsel %vm809, %v2573, 0
    %2577 = vmatpush.bf16.msra.mxu0 0
    %2578 = vmatpush.bf16.msra.mxu0 0
    %2579 = vmatpush.bf16.msra.mxu0 0
    %2580 = vmatpush.bf16.msra.mxu0 0
    %2581 = vmatpush.bf16.msra.mxu0 0
    %2582 = vmatpush.bf16.msra.mxu0 0
    %2583 = vmatpush.bf16.msra.mxu0 0
    %2584 = vmatpush.bf16.msra.mxu0 %v2567
    %2585 = vmatmul.bf16.gmra.mxu0 %v2575
    %v2586 = vpop.f32.mrf.mxu0
    %v2587 = vadd.f32 0.0, %v2586
    %v2588 = vpop.f32.mrf.mxu0
    %v2589 = vadd.f32 0.0, %v2588
    %2590 = vdwg.mxu0
    %v2591 = vperm.slane %v2516, 0
    %v2592 = vadd.f32 %v2591, %v2587
    %v2593 = vadd.f32 %v2591, %v2589
    %v2594 = vld [vmem:[#allocation3 + $0x140] sm:$0xff]
    %v2595 = vpack.c.bf16 %v2594, %v2594
    %v2596 = vld [vmem:[#allocation3 + $0x150] sm:$0x1]
    %v2598 = vsel %vm625, %v2595, 0
    %2600 = vmatpush.bf16.msra.mxu0 0
    %2601 = vmatpush.bf16.msra.mxu0 0
    %2602 = vmatpush.bf16.msra.mxu0 0
    %2603 = vmatpush.bf16.msra.mxu0 0
    %2604 = vmatpush.bf16.msra.mxu0 0
    %2605 = vmatpush.bf16.msra.mxu0 0
    %2606 = vmatpush.bf16.msra.mxu0 0
    %2607 = vmatpush.bf16.msra.mxu0 %v2598
    %2608 = vmatmul.bf16.gmra.mxu0 %v2522
    %v2609 = vpop.f32.mrf.mxu0
    %v2610 = vadd.f32 %v2596, %v2609
    %v2611 = vpop.f32.mrf.mxu0
    %2612 = vdwg.mxu0
    %v2613 = vxor.u32 %v2610, 2147483648
    %v2614 = vmul.f32 %v2613, 1.442695
    %v2615 = vpow.pop %v2614
    %v2616 = vadd.f32 %v2615, 1.0
    %v2617 = vrcp.pop %v2616
    %v2618 = vmul.f32 %v2616, %v2617
    %v2619 = vsub.f32 1.0, %v2618
    %v2620 = vmul.f32 %v2617, %v2619
    %v2621 = vadd.f32 %v2617, %v2620
    %vm2622 = vweird.f32 %v2616
    %vm2623 = vweird.f32 %v2617
    %vm2624 = vmor %vm2622, %vm2623
    %v2625 = vsel %vm2624, %v2617, %v2621
    %v2626 = vand.u32 2147483647, %v2616
    %vm2627 = vcmp.eq.f32.partialorder %v2626, 8.507059e+37
    %v2628 = vand.u32 %v2616, 2147483648
    %v2629 = vor.u32 1.1754944e-38, %v2628
    %v2630 = vsel %vm2627, %v2629, %v2625
    %v2631 = vmul.f32 1.0, %v2630
    %v2632 = vperm.slane %v2631, 0
    %v2633 = vmul.f32 %v2129, %v2632
    %v2634 = vmul.f32 %v2130, %v2632
    %v2635 = vmul.f32 %v2131, %v2632
    %v2636 = vpack.c.bf16 %v2634, %v2633
    %v2637 = vpack.c.bf16 %v2635, %v2635
    %v2638 = vld [vmem:[#allocation3 + $0x168] sm:$0xff]
    %v2639 = vld [vmem:[#allocation3 + $0x170] sm:$0xff]
    %v2640 = vpack.c.bf16 %v2639, %v2638
    %v2643 = vrot.slane %v2636, 1
    %v2644 = vrot.slane %v2637, 1
    %v2645 = vsel %vm2570, %v2643, %v2644
    %v2647 = vsel %vm809, %v2645, 0
    %2649 = vmatpush.bf16.msra.mxu0 0
    %2650 = vmatpush.bf16.msra.mxu0 0
    %2651 = vmatpush.bf16.msra.mxu0 0
    %2652 = vmatpush.bf16.msra.mxu0 0
    %2653 = vmatpush.bf16.msra.mxu0 0
    %2654 = vmatpush.bf16.msra.mxu0 0
    %2655 = vmatpush.bf16.msra.mxu0 0
    %2656 = vmatpush.bf16.msra.mxu0 %v2640
    %2657 = vmatmul.bf16.gmra.mxu0 %v2647
    %v2658 = vpop.f32.mrf.mxu0
    %v2659 = vadd.f32 0.0, %v2658
    %v2660 = vpop.f32.mrf.mxu0
    %v2661 = vadd.f32 0.0, %v2660
    %2662 = vdwg.mxu0
    %v2663 = vadd.f32 %v2592, %v2659
    %v2664 = vadd.f32 %v2593, %v2661
    %v2665 = vmin.f32 %v2663, 20.0
    %v2666 = vmin.f32 %v2664, 20.0
    %v2667 = vmul.f32 %v2665, 1.442695
    %v2668 = vpow.pop %v2667
    %v2669 = vmul.f32 %v2666, 1.442695
    %v2670 = vpow.pop %v2669
    %v2671 = vadd.f32 %v2668, 2.0
    %v2672 = vadd.f32 %v2670, 2.0
    %v2673 = vmul.f32 %v2668, %v2671
    %v2674 = vmul.f32 %v2670, %v2672
    %v2675 = vmul.f32 %v2663, %v2673
    %v2676 = vmul.f32 %v2664, %v2674
    %v2677 = vadd.f32 %v2673, 2.0
    %v2678 = vadd.f32 %v2674, 2.0
    %v2679 = vrcp.pop %v2677
    %v2680 = vrcp.pop %v2678
    %v2681 = vmul.f32 %v2675, %v2679
    %v2682 = vmul.f32 %v2676, %v2680
    %vm2683 = vcmp.gt.f32.partialorder %v2663, 20.0
    %vm2684 = vcmp.gt.f32.partialorder %v2664, 20.0
    %v2685 = vsel %vm2683, %v2663, %v2681
    %v2686 = vsel %vm2684, %v2664, %v2682
    %v2687 = vpack.c.bf16 %v2686, %v2685
    %v2689 = vsel %vm809, %v2687, 0
    %2691 = vmatpush.bf16.msra.mxu0 0
    %2692 = vmatpush.bf16.msra.mxu0 0
    %2693 = vmatpush.bf16.msra.mxu0 0
    %2694 = vmatpush.bf16.msra.mxu0 0
    %2695 = vmatpush.bf16.msra.mxu0 0
    %2696 = vmatpush.bf16.msra.mxu0 0
    %2697 = vmatpush.bf16.msra.mxu0 0
    %2698 = vmatpush.bf16.msra.mxu0 %v2134
    %2699 = vmatmul.bf16.gmra.mxu0 %v2689
    %v2700 = vpop.f32.mrf.mxu0
    %v2701 = vadd.f32 %v2367, %v2700
    %v2702 = vpop.f32.mrf.mxu0
    %v2703 = vadd.f32 %v2367, %v2702
    %2704 = vdwg.mxu0
    %v2705 = vmin.f32 %v2701, 20.0
    %v2706 = vmin.f32 %v2703, 20.0
    %v2707 = vmul.f32 %v2705, 1.442695
    %v2708 = vpow.pop %v2707
    %v2709 = vmul.f32 %v2706, 1.442695
    %v2710 = vpow.pop %v2709
    %v2711 = vadd.f32 %v2708, 2.0
    %v2712 = vadd.f32 %v2710, 2.0
    %v2713 = vmul.f32 %v2708, %v2711
    %v2714 = vmul.f32 %v2710, %v2712
    %v2715 = vmul.f32 %v2701, %v2713
    %v2716 = vmul.f32 %v2703, %v2714
    %v2717 = vadd.f32 %v2713, 2.0
    %v2718 = vadd.f32 %v2714, 2.0
    %v2719 = vrcp.pop %v2717
    %v2720 = vrcp.pop %v2718
    %v2721 = vmul.f32 %v2715, %v2719
    %v2722 = vmul.f32 %v2716, %v2720
    %vm2723 = vcmp.gt.f32.partialorder %v2701, 20.0
    %vm2724 = vcmp.gt.f32.partialorder %v2703, 20.0
    %v2725 = vsel %vm2723, %v2701, %v2721
    %v2726 = vsel %vm2724, %v2703, %v2722
    %v2727 = vpack.c.bf16 %v2726, %v2725
    %v2729 = vsel %vm502, %v2727, 0
    %2731 = vmatpush.bf16.msra.mxu0 0
    %2732 = vmatpush.bf16.msra.mxu0 0
    %2733 = vmatpush.bf16.msra.mxu0 0
    %2734 = vmatpush.bf16.msra.mxu0 0
    %2735 = vmatpush.bf16.msra.mxu0 0
    %2736 = vmatpush.bf16.msra.mxu0 0
    %2737 = vmatpush.bf16.msra.mxu0 0
    %2738 = vmatpush.bf16.msra.mxu0 %v2413
    %2739 = vmatmul.bf16.gmra.mxu0 %v2729
    %v2740 = vpop.f32.mrf.mxu0
    %v2741 = vadd.f32 %v2408, %v2740
    %v2742 = vpop.f32.mrf.mxu0
    %v2743 = vadd.f32 %v2408, %v2742
    %2744 = vdwg.mxu0
    %s2745 = scalar_lea.vmem %s2, 16
    %2746 = vst.msk [vmem:[%s2745] sm:$0xff] %vm36, %v2741
    %2747 = vst.msk [vmem:[%s2745 + $0x8] sm:$0xff] %vm36, %v2743
    // Predicated region
    $region14: #{_lambda_.1} parent=1 // pred_check
      _
    $region15: #{_lambda_.1} parent=1 // pred_check_branch
      %2749 = sbr.rel (0) target = $region17
    $region16: #{_lambda_.1} parent=1 // pred_region
      _
    $region17: #{_lambda_.1} parent=1 // pred_fallthru
      _
    // Predicated region
    $region18: #{_lambda_.1} parent=1 // pred_check
      _
    $region19: #{_lambda_.1} parent=1 // pred_check_branch
      %2751 = sbr.rel (0) target = $region21
    $region20: #{_lambda_.1} parent=1 // pred_region
      _
    $region21: #{_lambda_.1} parent=1 // pred_fallthru
      _
    %2752 = vsyncpa [#allocation4], 1

</llo_original>
